<compile_context>
chip_gen: v5e
topology: v5e:2x2
jax: 0.10.0
libtpu: 0.0.40
codegen_flags: <defaults>
</compile_context>

<pallas_src>
import functools

import jax
import jax.numpy as jnp
import numpy as np
from jax.experimental import pallas as pl
from jax.experimental.pallas import tpu as pltpu

HIDDEN_SIZE = 64      # H (module spec)
HP = 128              # per-gate lane width after padding (one full vreg of lanes)
INPUT_SIZE = 28
IN_PAD = 32           # padded input-feature dim (sublane friendly)
NUM_LAYERS = 2
B_SUB = 8             # pad batch up to a multiple of the sublane count


def _lstm_cell(gates, c):
    """One LSTM cell update from padded gate pre-activations.

    gates: (B, 4*HP) f32, gate order [i, f, o, g] (reordered in prepare_params).
    The three sigmoids use a single EUP tanh over the contiguous (B, 3*HP) slab:
    sigmoid(x) = 0.5*tanh(0.5*x) + 0.5.
    """
    sig = 0.5 * jnp.tanh(0.5 * gates[:, :3 * HP]) + 0.5
    i = sig[:, 0 * HP:1 * HP]
    f = sig[:, 1 * HP:2 * HP]
    o = sig[:, 2 * HP:3 * HP]
    g = jnp.tanh(gates[:, 3 * HP:4 * HP])
    c_new = f * c + i * g
    h_new = o * jnp.tanh(c_new)
    return h_new, c_new


def fused_lstm_kernel(x_ref, w_ih0_ref, w_hh0_ref, b0_ref, w1_ref, b1_ref,
                      out_ref, pre_ref, *, seq_len, batch_pad):
    """Two stacked LSTM layers, zero initial state, wavefront-interleaved.

    x_ref:     (seq*B, IN_PAD) bf16  time-major, batch-padded input
    w_ih0_ref: (IN_PAD, 4*HP)  bf16  layer-0 input weights (pre-transposed/padded)
    w_hh0_ref: (HP, 4*HP)      bf16  layer-0 recurrent weights
    b0_ref:    (1, 4*HP)       f32   layer-0 b_ih + b_hh (gate blocks padded)
    w1_ref:    (2*HP, 4*HP)    bf16  layer-1 stacked [W_ih1; W_hh1]
    b1_ref:    (1, 4*HP)       f32   layer-1 b_ih + b_hh
    out_ref:   (seq, B, HP)    f32   layer-1 hidden states (padded lanes = 0)
    pre_ref:   (seq*B, 4*HP)   f32   scratch: hoisted layer-0 input gates
    """
    B = batch_pad
    S = seq_len

    # ---- layer-0 input projection hoisted out of the recurrence:
    # one big MXU matmul over all (t, batch) rows.
    pre_ref[...] = jnp.dot(x_ref[...], w_ih0_ref[...],
                           preferred_element_type=jnp.float32) + b0_ref[...]

    zeros = jnp.zeros((B, HP), jnp.float32)

    # Wavefront 0: layer-0 step 0 only (h0 = c0 = 0 -> gates == pre-gates).
    h0, c0 = _lstm_cell(pre_ref[pl.ds(0, B), :], zeros)
    h1, c1 = zeros, zeros

    # Wavefronts 1..S-1: layer-0 step w and layer-1 step w-1.  Both matmuls use
    # the *old* h0/h1 (captured before reassignment), so the two chains are
    # independent within a wavefront and co-issue on MXU/EUP/VPU.
    for w in range(1, S):
        h0_b = h0.astype(jnp.bfloat16)
        lhs1 = jnp.concatenate([h0_b, h1.astype(jnp.bfloat16)], axis=1)
        # layer-0 step w: pre-computed input gates + recurrent matmul (K = 128).
        gates0 = pre_ref[pl.ds(w * B, B), :] + jnp.dot(
            h0_b, w_hh0_ref[...], preferred_element_type=jnp.float32)
        # layer-1 step w-1: fused input + recurrent matmul (K = 2*HP = 256).
        gates1 = jnp.dot(lhs1, w1_ref[...],
                         preferred_element_type=jnp.float32) + b1_ref[...]
        h0, c0 = _lstm_cell(gates0, c0)
        h1, c1 = _lstm_cell(gates1, c1)
        out_ref[w - 1] = h1          # contiguous full-tile (b_pad, HP) store

    # Final wavefront: layer-1 step S-1 only.
    lhs1 = jnp.concatenate([h0.astype(jnp.bfloat16),
                            h1.astype(jnp.bfloat16)], axis=1)
    gates1 = jnp.dot(lhs1, w1_ref[...],
                     preferred_element_type=jnp.float32) + b1_ref[...]
    h1, c1 = _lstm_cell(gates1, c1)
    out_ref[S - 1] = h1


def prepare_params(params):
    """One-time weight prep: transpose to (in, 4H), reorder gates from PyTorch
    [i, f, g, o] to kernel [i, f, o, g], pad each gate block to HP lanes and the
    contraction rows to a sublane-friendly size, combine b_ih + b_hh, cast MXU
    operands to bf16, and stack layer-1's input/recurrent weights for the fused
    per-step matmul."""
    H = HIDDEN_SIZE
    PERM = [0, 1, 3, 2]   # [i, f, g, o] -> [i, f, o, g]

    def weight(w, in_dim, row_pad_to):
        w_t = jnp.asarray(w, jnp.float32).T.reshape(in_dim, 4, H)   # (in, 4, H)
        w_t = w_t[:, PERM, :]
        w_t = jnp.pad(w_t, ((0, row_pad_to - in_dim), (0, 0), (0, HP - H)))
        return w_t.reshape(row_pad_to, 4 * HP).astype(jnp.bfloat16)

    def bias(b_ih, b_hh):
        b = (jnp.asarray(b_ih, jnp.float32)
             + jnp.asarray(b_hh, jnp.float32)).reshape(4, H)[PERM, :]
        return jnp.pad(b, ((0, 0), (0, HP - H))).reshape(1, 4 * HP)

    (w_ih0, w_hh0, b_ih0, b_hh0), (w_ih1, w_hh1, b_ih1, b_hh1) = params

    wi0 = weight(w_ih0, INPUT_SIZE, IN_PAD)
    wh0 = weight(w_hh0, H, HP)
    b0 = bias(b_ih0, b_hh0)
    # layer 1: stack [W_ih1; W_hh1] -> one fused (2*HP, 4*HP) matmul per step.
    w1 = jnp.concatenate([weight(w_ih1, H, HP), weight(w_hh1, H, HP)], axis=0)
    b1 = bias(b_ih1, b_hh1)
    return (wi0, wh0, b0, w1, b1)


@jax.jit
def rnn_basic_block_forward(x, prepped):
    """Equivalent of RNN_BasicBlock.forward.

    x: (batch, channels=1, seq, input_size) -> (batch, seq, hidden_size)
    prepped: output of prepare_params (done once, outside the hot path).
    """
    b, ch, s, f = x.shape
    assert ch == 1
    # (b, 1, s, f) -> time-major (s, b, f); zero-pad batch to a sublane multiple
    # and the feature dim to IN_PAD.  XLA fuses transpose+pad+cast into the one
    # fusion the pad/cast already require.
    x_tbf = jnp.transpose(x.reshape(b, s, f), (1, 0, 2))
    b_pad = ((b + B_SUB - 1) // B_SUB) * B_SUB
    x_tbf = jnp.pad(x_tbf, ((0, 0), (0, b_pad - b), (0, IN_PAD - f)))
    x2d = x_tbf.reshape(s * b_pad, IN_PAD).astype(jnp.bfloat16)

    wi0, wh0, b0, w1, b1 = prepped

    out = pl.pallas_call(
        functools.partial(fused_lstm_kernel, seq_len=s, batch_pad=b_pad),
        out_shape=jax.ShapeDtypeStruct((s, b_pad, HP), jnp.float32),
        in_specs=[pl.BlockSpec(memory_space=pltpu.MemorySpace.VMEM)] * 6,
        out_specs=pl.BlockSpec(memory_space=pltpu.MemorySpace.VMEM),
        scratch_shapes=[
            pltpu.VMEM((s * b_pad, 4 * HP), jnp.float32),   # hoisted pre-gates
        ],
    )(x2d, wi0, wh0, b0, w1, b1)

    # drop batch / lane padding, back to batch-first: (b, s, H)
    return jnp.transpose(out[:, :b, :HIDDEN_SIZE], (1, 0, 2))


# ----- pure-JAX reference (for correctness checking only) -------------------
def lstm_ref(x, params):
    b, c, s, f = x.shape
    h_in = x.reshape(b, s, f)
    for layer in range(NUM_LAYERS):
        w_ih, w_hh, b_ih, b_hh = params[layer]
        H = HIDDEN_SIZE
        h = jnp.zeros((b, H), jnp.float32)
        cc = jnp.zeros((b, H), jnp.float32)
        outs = []
        for t in range(s):
            gates = h_in[:, t, :] @ w_ih.T + h @ w_hh.T + b_ih + b_hh
            i = jax.nn.sigmoid(gates[:, 0:H])
            f_ = jax.nn.sigmoid(gates[:, H:2 * H])
            g = jnp.tanh(gates[:, 2 * H:3 * H])
            o = jax.nn.sigmoid(gates[:, 3 * H:4 * H])
            cc = f_ * cc + i * g
            h = o * jnp.tanh(cc)
            outs.append(h)
        h_in = jnp.stack(outs, axis=1)
    return h_in


def init_params(key):
    """Deterministic init matching nn.LSTM parameter shapes (uniform +-1/sqrt(H))."""
    params = []
    bound = 1.0 / np.sqrt(HIDDEN_SIZE)
    for layer in range(NUM_LAYERS):
        in_dim = INPUT_SIZE if layer == 0 else HIDDEN_SIZE
        key, k1, k2, k3, k4 = jax.random.split(key, 5)
        w_ih = jax.random.uniform(k1, (4 * HIDDEN_SIZE, in_dim),
                                  jnp.float32, -bound, bound)
        w_hh = jax.random.uniform(k2, (4 * HIDDEN_SIZE, HIDDEN_SIZE),
                                  jnp.float32, -bound, bound)
        b_ih = jax.random.uniform(k3, (4 * HIDDEN_SIZE,),
                                  jnp.float32, -bound, bound)
        b_hh = jax.random.uniform(k4, (4 * HIDDEN_SIZE,),
                                  jnp.float32, -bound, bound)
        params.append((w_ih, w_hh, b_ih, b_hh))
    return params


if __name__ == "__main__":
    key = jax.random.PRNGKey(0)
    kx, kp = jax.random.split(key)

    batch, channels, seq = 2, 1, 8   # small shapes consistent with the module
    x = jax.random.normal(kx, (batch, channels, seq, INPUT_SIZE), jnp.float32)
    params = init_params(kp)
    prepped = prepare_params(params)   # one-time param prep (off the hot path)

    out = rnn_basic_block_forward(x, prepped)
    out = jax.block_until_ready(out)
    assert out.shape == (batch, seq, HIDDEN_SIZE)

    ref = lstm_ref(x, params)
    np.testing.assert_allclose(np.asarray(out), np.asarray(ref),
                               rtol=2e-2, atol=2e-2)
    print("KERNEL_OK")
</pallas_src>

<mosaic_0001>
module attributes {stable_mosaic.version = 11 : i64} {
  func.func @fused_lstm_kernel(%arg0: memref<64x32xbf16, #tpu.memory_space<vmem>>, %arg1: memref<32x512xbf16, #tpu.memory_space<vmem>>, %arg2: memref<128x512xbf16, #tpu.memory_space<vmem>>, %arg3: memref<1x512xf32, #tpu.memory_space<vmem>>, %arg4: memref<256x512xbf16, #tpu.memory_space<vmem>>, %arg5: memref<1x512xf32, #tpu.memory_space<vmem>>, %arg6: memref<8x8x128xf32, #tpu.memory_space<vmem>>, %arg7: memref<64x512xf32, #tpu.memory_space<vmem>>) attributes {dimension_semantics = [], scalar_prefetch = 0 : i64, scratch_operands = 1 : i64, tpu.core_type = #tpu.core_type<tc>} {
    %c0 = arith.constant 0 : index
    %c0_0 = arith.constant 0 : index
    %0 = vector.load %arg0[%c0, %c0_0] : memref<64x32xbf16, #tpu.memory_space<vmem>>, vector<64x32xbf16>
    %c0_1 = arith.constant 0 : index
    %c0_2 = arith.constant 0 : index
    %1 = vector.load %arg1[%c0_1, %c0_2] : memref<32x512xbf16, #tpu.memory_space<vmem>>, vector<32x512xbf16>
    %cst = arith.constant dense<0.000000e+00> : vector<64x512xf32>
    %2 = tpu.matmul %0, %1, %cst {dimension_numbers = #tpu.dot_dimension_numbers<[1], [0], [0], [1], [0, 0, 1, 1], [], []>} : vector<64x32xbf16>, vector<32x512xbf16>, vector<64x512xf32> -> vector<64x512xf32>
    %c0_3 = arith.constant 0 : index
    %c0_4 = arith.constant 0 : index
    %3 = vector.load %arg3[%c0_3, %c0_4] : memref<1x512xf32, #tpu.memory_space<vmem>>, vector<1x512xf32>
    %4 = vector.broadcast %3 : vector<1x512xf32> to vector<64x512xf32>
    %5 = arith.addf %2, %4 : vector<64x512xf32>
    %c0_5 = arith.constant 0 : index
    %c0_6 = arith.constant 0 : index
    %6 = vector.load %arg7[%c0_5, %c0_6] : memref<64x512xf32, #tpu.memory_space<vmem>>, vector<64x512xf32>
    tpu.vector_store %arg7[%c0_5, %c0_6], %5 {strides = array<i32>} : memref<64x512xf32, #tpu.memory_space<vmem>>, vector<64x512xf32>,
    %cst_7 = arith.constant 0.000000e+00 : f32
    %7 = vector.broadcast %cst_7 : f32 to vector<8x128xf32>
    %c0_8 = arith.constant 0 : index
    %c0_9 = arith.constant 0 : index
    %8 = vector.load %arg7[%c0_8, %c0_9] : memref<64x512xf32, #tpu.memory_space<vmem>>, vector<8x512xf32>
    %9 = vector.extract_strided_slice %8 {offsets = [0, 0], sizes = [8, 384], strides = [1, 1]} : vector<8x512xf32> to vector<8x384xf32>
    %cst_10 = arith.constant 5.000000e-01 : f32
    %10 = vector.broadcast %cst_10 : f32 to vector<8x384xf32>
    %11 = arith.mulf %10, %9 : vector<8x384xf32>
    %12 = math.tanh %11 : vector<8x384xf32>
    %cst_11 = arith.constant 5.000000e-01 : f32
    %13 = vector.broadcast %cst_11 : f32 to vector<8x384xf32>
    %14 = arith.mulf %13, %12 : vector<8x384xf32>
    %cst_12 = arith.constant 5.000000e-01 : f32
    %15 = vector.broadcast %cst_12 : f32 to vector<8x384xf32>
    %16 = arith.addf %14, %15 : vector<8x384xf32>
    %17 = vector.extract_strided_slice %16 {offsets = [0, 0], sizes = [8, 128], strides = [1, 1]} : vector<8x384xf32> to vector<8x128xf32>
    %18 = vector.extract_strided_slice %16 {offsets = [0, 128], sizes = [8, 128], strides = [1, 1]} : vector<8x384xf32> to vector<8x128xf32>
    %19 = vector.extract_strided_slice %16 {offsets = [0, 256], sizes = [8, 128], strides = [1, 1]} : vector<8x384xf32> to vector<8x128xf32>
    %20 = vector.extract_strided_slice %8 {offsets = [0, 384], sizes = [8, 128], strides = [1, 1]} : vector<8x512xf32> to vector<8x128xf32>
    %21 = math.tanh %20 : vector<8x128xf32>
    %22 = arith.mulf %18, %7 : vector<8x128xf32>
    %23 = arith.mulf %17, %21 : vector<8x128xf32>
    %24 = arith.addf %22, %23 : vector<8x128xf32>
    %25 = math.tanh %24 : vector<8x128xf32>
    %26 = arith.mulf %19, %25 : vector<8x128xf32>
    %27 = arith.truncf %26 : vector<8x128xf32> to vector<8x128xbf16>
    %28 = arith.truncf %7 : vector<8x128xf32> to vector<8x128xbf16>
    %29 = tpu.concatenate %27, %28 in 1 : vector<8x128xbf16>, vector<8x128xbf16> -> vector<8x256xbf16>
    %c8 = arith.constant 8 : index
    %c0_13 = arith.constant 0 : index
    %30 = vector.load %arg7[%c8, %c0_13] : memref<64x512xf32, #tpu.memory_space<vmem>>, vector<8x512xf32>
    %c0_14 = arith.constant 0 : index
    %c0_15 = arith.constant 0 : index
    %31 = vector.load %arg2[%c0_14, %c0_15] : memref<128x512xbf16, #tpu.memory_space<vmem>>, vector<128x512xbf16>
    %cst_16 = arith.constant dense<0.000000e+00> : vector<8x512xf32>
    %32 = tpu.matmul %27, %31, %cst_16 {dimension_numbers = #tpu.dot_dimension_numbers<[1], [0], [0], [1], [0, 0, 1, 1], [], []>} : vector<8x128xbf16>, vector<128x512xbf16>, vector<8x512xf32> -> vector<8x512xf32>
    %33 = arith.addf %30, %32 : vector<8x512xf32>
    %c0_17 = arith.constant 0 : index
    %c0_18 = arith.constant 0 : index
    %34 = vector.load %arg4[%c0_17, %c0_18] : memref<256x512xbf16, #tpu.memory_space<vmem>>, vector<256x512xbf16>
    %cst_19 = arith.constant dense<0.000000e+00> : vector<8x512xf32>
    %35 = tpu.matmul %29, %34, %cst_19 {dimension_numbers = #tpu.dot_dimension_numbers<[1], [0], [0], [1], [0, 0, 1, 1], [], []>} : vector<8x256xbf16>, vector<256x512xbf16>, vector<8x512xf32> -> vector<8x512xf32>
    %c0_20 = arith.constant 0 : index
    %c0_21 = arith.constant 0 : index
    %36 = vector.load %arg5[%c0_20, %c0_21] : memref<1x512xf32, #tpu.memory_space<vmem>>, vector<1x512xf32>
    %37 = vector.broadcast %36 : vector<1x512xf32> to vector<8x512xf32>
    %38 = arith.addf %35, %37 : vector<8x512xf32>
    %39 = vector.extract_strided_slice %33 {offsets = [0, 0], sizes = [8, 384], strides = [1, 1]} : vector<8x512xf32> to vector<8x384xf32>
    %cst_22 = arith.constant 5.000000e-01 : f32
    %40 = vector.broadcast %cst_22 : f32 to vector<8x384xf32>
    %41 = arith.mulf %40, %39 : vector<8x384xf32>
    %42 = math.tanh %41 : vector<8x384xf32>
    %cst_23 = arith.constant 5.000000e-01 : f32
    %43 = vector.broadcast %cst_23 : f32 to vector<8x384xf32>
    %44 = arith.mulf %43, %42 : vector<8x384xf32>
    %cst_24 = arith.constant 5.000000e-01 : f32
    %45 = vector.broadcast %cst_24 : f32 to vector<8x384xf32>
    %46 = arith.addf %44, %45 : vector<8x384xf32>
    %47 = vector.extract_strided_slice %46 {offsets = [0, 0], sizes = [8, 128], strides = [1, 1]} : vector<8x384xf32> to vector<8x128xf32>
    %48 = vector.extract_strided_slice %46 {offsets = [0, 128], sizes = [8, 128], strides = [1, 1]} : vector<8x384xf32> to vector<8x128xf32>
    %49 = vector.extract_strided_slice %46 {offsets = [0, 256], sizes = [8, 128], strides = [1, 1]} : vector<8x384xf32> to vector<8x128xf32>
    %50 = vector.extract_strided_slice %33 {offsets = [0, 384], sizes = [8, 128], strides = [1, 1]} : vector<8x512xf32> to vector<8x128xf32>
    %51 = math.tanh %50 : vector<8x128xf32>
    %52 = arith.mulf %48, %24 : vector<8x128xf32>
    %53 = arith.mulf %47, %51 : vector<8x128xf32>
    %54 = arith.addf %52, %53 : vector<8x128xf32>
    %55 = math.tanh %54 : vector<8x128xf32>
    %56 = arith.mulf %49, %55 : vector<8x128xf32>
    %57 = vector.extract_strided_slice %38 {offsets = [0, 0], sizes = [8, 384], strides = [1, 1]} : vector<8x512xf32> to vector<8x384xf32>
    %cst_25 = arith.constant 5.000000e-01 : f32
    %58 = vector.broadcast %cst_25 : f32 to vector<8x384xf32>
    %59 = arith.mulf %58, %57 : vector<8x384xf32>
    %60 = math.tanh %59 : vector<8x384xf32>
    %cst_26 = arith.constant 5.000000e-01 : f32
    %61 = vector.broadcast %cst_26 : f32 to vector<8x384xf32>
    %62 = arith.mulf %61, %60 : vector<8x384xf32>
    %cst_27 = arith.constant 5.000000e-01 : f32
    %63 = vector.broadcast %cst_27 : f32 to vector<8x384xf32>
    %64 = arith.addf %62, %63 : vector<8x384xf32>
    %65 = vector.extract_strided_slice %64 {offsets = [0, 0], sizes = [8, 128], strides = [1, 1]} : vector<8x384xf32> to vector<8x128xf32>
    %66 = vector.extract_strided_slice %64 {offsets = [0, 128], sizes = [8, 128], strides = [1, 1]} : vector<8x384xf32> to vector<8x128xf32>
    %67 = vector.extract_strided_slice %64 {offsets = [0, 256], sizes = [8, 128], strides = [1, 1]} : vector<8x384xf32> to vector<8x128xf32>
    %68 = vector.extract_strided_slice %38 {offsets = [0, 384], sizes = [8, 128], strides = [1, 1]} : vector<8x512xf32> to vector<8x128xf32>
    %69 = math.tanh %68 : vector<8x128xf32>
    %70 = arith.mulf %66, %7 : vector<8x128xf32>
    %71 = arith.mulf %65, %69 : vector<8x128xf32>
    %72 = arith.addf %70, %71 : vector<8x128xf32>
    %73 = math.tanh %72 : vector<8x128xf32>
    %74 = arith.mulf %67, %73 : vector<8x128xf32>
    %c0_28 = arith.constant 0 : index
    %c0_29 = arith.constant 0 : index
    %c0_30 = arith.constant 0 : index
    %75 = vector.load %arg6[%c0_28, %c0_29, %c0_30] : memref<8x8x128xf32, #tpu.memory_space<vmem>>, vector<1x8x128xf32>
    %76 = vector.shape_cast %75 : vector<1x8x128xf32> to vector<8x128xf32>
    %77 = vector.shape_cast %74 : vector<8x128xf32> to vector<1x8x128xf32>
    tpu.vector_store %arg6[%c0_28, %c0_29, %c0_30], %77 {strides = array<i32>} : memref<8x8x128xf32, #tpu.memory_space<vmem>>, vector<1x8x128xf32>,
    %78 = arith.truncf %56 : vector<8x128xf32> to vector<8x128xbf16>
    %79 = arith.truncf %74 : vector<8x128xf32> to vector<8x128xbf16>
    %80 = tpu.concatenate %78, %79 in 1 : vector<8x128xbf16>, vector<8x128xbf16> -> vector<8x256xbf16>
    %c16 = arith.constant 16 : index
    %c0_31 = arith.constant 0 : index
    %81 = vector.load %arg7[%c16, %c0_31] : memref<64x512xf32, #tpu.memory_space<vmem>>, vector<8x512xf32>
    %c0_32 = arith.constant 0 : index
    %c0_33 = arith.constant 0 : index
    %82 = vector.load %arg2[%c0_32, %c0_33] : memref<128x512xbf16, #tpu.memory_space<vmem>>, vector<128x512xbf16>
    %cst_34 = arith.constant dense<0.000000e+00> : vector<8x512xf32>
    %83 = tpu.matmul %78, %82, %cst_34 {dimension_numbers = #tpu.dot_dimension_numbers<[1], [0], [0], [1], [0, 0, 1, 1], [], []>} : vector<8x128xbf16>, vector<128x512xbf16>, vector<8x512xf32> -> vector<8x512xf32>
    %84 = arith.addf %81, %83 : vector<8x512xf32>
    %c0_35 = arith.constant 0 : index
    %c0_36 = arith.constant 0 : index
    %85 = vector.load %arg4[%c0_35, %c0_36] : memref<256x512xbf16, #tpu.memory_space<vmem>>, vector<256x512xbf16>
    %cst_37 = arith.constant dense<0.000000e+00> : vector<8x512xf32>
    %86 = tpu.matmul %80, %85, %cst_37 {dimension_numbers = #tpu.dot_dimension_numbers<[1], [0], [0], [1], [0, 0, 1, 1], [], []>} : vector<8x256xbf16>, vector<256x512xbf16>, vector<8x512xf32> -> vector<8x512xf32>
    %c0_38 = arith.constant 0 : index
    %c0_39 = arith.constant 0 : index
    %87 = vector.load %arg5[%c0_38, %c0_39] : memref<1x512xf32, #tpu.memory_space<vmem>>, vector<1x512xf32>
    %88 = vector.broadcast %87 : vector<1x512xf32> to vector<8x512xf32>
    %89 = arith.addf %86, %88 : vector<8x512xf32>
    %90 = vector.extract_strided_slice %84 {offsets = [0, 0], sizes = [8, 384], strides = [1, 1]} : vector<8x512xf32> to vector<8x384xf32>
    %cst_40 = arith.constant 5.000000e-01 : f32
    %91 = vector.broadcast %cst_40 : f32 to vector<8x384xf32>
    %92 = arith.mulf %91, %90 : vector<8x384xf32>
    %93 = math.tanh %92 : vector<8x384xf32>
    %cst_41 = arith.constant 5.000000e-01 : f32
    %94 = vector.broadcast %cst_41 : f32 to vector<8x384xf32>
    %95 = arith.mulf %94, %93 : vector<8x384xf32>
    %cst_42 = arith.constant 5.000000e-01 : f32
    %96 = vector.broadcast %cst_42 : f32 to vector<8x384xf32>
    %97 = arith.addf %95, %96 : vector<8x384xf32>
    %98 = vector.extract_strided_slice %97 {offsets = [0, 0], sizes = [8, 128], strides = [1, 1]} : vector<8x384xf32> to vector<8x128xf32>
    %99 = vector.extract_strided_slice %97 {offsets = [0, 128], sizes = [8, 128], strides = [1, 1]} : vector<8x384xf32> to vector<8x128xf32>
    %100 = vector.extract_strided_slice %97 {offsets = [0, 256], sizes = [8, 128], strides = [1, 1]} : vector<8x384xf32> to vector<8x128xf32>
    %101 = vector.extract_strided_slice %84 {offsets = [0, 384], sizes = [8, 128], strides = [1, 1]} : vector<8x512xf32> to vector<8x128xf32>
    %102 = math.tanh %101 : vector<8x128xf32>
    %103 = arith.mulf %99, %54 : vector<8x128xf32>
    %104 = arith.mulf %98, %102 : vector<8x128xf32>
    %105 = arith.addf %103, %104 : vector<8x128xf32>
    %106 = math.tanh %105 : vector<8x128xf32>
    %107 = arith.mulf %100, %106 : vector<8x128xf32>
    %108 = vector.extract_strided_slice %89 {offsets = [0, 0], sizes = [8, 384], strides = [1, 1]} : vector<8x512xf32> to vector<8x384xf32>
    %cst_43 = arith.constant 5.000000e-01 : f32
    %109 = vector.broadcast %cst_43 : f32 to vector<8x384xf32>
    %110 = arith.mulf %109, %108 : vector<8x384xf32>
    %111 = math.tanh %110 : vector<8x384xf32>
    %cst_44 = arith.constant 5.000000e-01 : f32
    %112 = vector.broadcast %cst_44 : f32 to vector<8x384xf32>
    %113 = arith.mulf %112, %111 : vector<8x384xf32>
    %cst_45 = arith.constant 5.000000e-01 : f32
    %114 = vector.broadcast %cst_45 : f32 to vector<8x384xf32>
    %115 = arith.addf %113, %114 : vector<8x384xf32>
    %116 = vector.extract_strided_slice %115 {offsets = [0, 0], sizes = [8, 128], strides = [1, 1]} : vector<8x384xf32> to vector<8x128xf32>
    %117 = vector.extract_strided_slice %115 {offsets = [0, 128], sizes = [8, 128], strides = [1, 1]} : vector<8x384xf32> to vector<8x128xf32>
    %118 = vector.extract_strided_slice %115 {offsets = [0, 256], sizes = [8, 128], strides = [1, 1]} : vector<8x384xf32> to vector<8x128xf32>
    %119 = vector.extract_strided_slice %89 {offsets = [0, 384], sizes = [8, 128], strides = [1, 1]} : vector<8x512xf32> to vector<8x128xf32>
    %120 = math.tanh %119 : vector<8x128xf32>
    %121 = arith.mulf %117, %72 : vector<8x128xf32>
    %122 = arith.mulf %116, %120 : vector<8x128xf32>
    %123 = arith.addf %121, %122 : vector<8x128xf32>
    %124 = math.tanh %123 : vector<8x128xf32>
    %125 = arith.mulf %118, %124 : vector<8x128xf32>
    %c1 = arith.constant 1 : index
    %c0_46 = arith.constant 0 : index
    %c0_47 = arith.constant 0 : index
    %126 = vector.load %arg6[%c1, %c0_46, %c0_47] : memref<8x8x128xf32, #tpu.memory_space<vmem>>, vector<1x8x128xf32>
    %127 = vector.shape_cast %126 : vector<1x8x128xf32> to vector<8x128xf32>
    %128 = vector.shape_cast %125 : vector<8x128xf32> to vector<1x8x128xf32>
    tpu.vector_store %arg6[%c1, %c0_46, %c0_47], %128 {strides = array<i32>} : memref<8x8x128xf32, #tpu.memory_space<vmem>>, vector<1x8x128xf32>,
    %129 = arith.truncf %107 : vector<8x128xf32> to vector<8x128xbf16>
    %130 = arith.truncf %125 : vector<8x128xf32> to vector<8x128xbf16>
    %131 = tpu.concatenate %129, %130 in 1 : vector<8x128xbf16>, vector<8x128xbf16> -> vector<8x256xbf16>
    %c24 = arith.constant 24 : index
    %c0_48 = arith.constant 0 : index
    %132 = vector.load %arg7[%c24, %c0_48] : memref<64x512xf32, #tpu.memory_space<vmem>>, vector<8x512xf32>
    %c0_49 = arith.constant 0 : index
    %c0_50 = arith.constant 0 : index
    %133 = vector.load %arg2[%c0_49, %c0_50] : memref<128x512xbf16, #tpu.memory_space<vmem>>, vector<128x512xbf16>
    %cst_51 = arith.constant dense<0.000000e+00> : vector<8x512xf32>
    %134 = tpu.matmul %129, %133, %cst_51 {dimension_numbers = #tpu.dot_dimension_numbers<[1], [0], [0], [1], [0, 0, 1, 1], [], []>} : vector<8x128xbf16>, vector<128x512xbf16>, vector<8x512xf32> -> vector<8x512xf32>
    %135 = arith.addf %132, %134 : vector<8x512xf32>
    %c0_52 = arith.constant 0 : index
    %c0_53 = arith.constant 0 : index
    %136 = vector.load %arg4[%c0_52, %c0_53] : memref<256x512xbf16, #tpu.memory_space<vmem>>, vector<256x512xbf16>
    %cst_54 = arith.constant dense<0.000000e+00> : vector<8x512xf32>
    %137 = tpu.matmul %131, %136, %cst_54 {dimension_numbers = #tpu.dot_dimension_numbers<[1], [0], [0], [1], [0, 0, 1, 1], [], []>} : vector<8x256xbf16>, vector<256x512xbf16>, vector<8x512xf32> -> vector<8x512xf32>
    %c0_55 = arith.constant 0 : index
    %c0_56 = arith.constant 0 : index
    %138 = vector.load %arg5[%c0_55, %c0_56] : memref<1x512xf32, #tpu.memory_space<vmem>>, vector<1x512xf32>
    %139 = vector.broadcast %138 : vector<1x512xf32> to vector<8x512xf32>
    %140 = arith.addf %137, %139 : vector<8x512xf32>
    %141 = vector.extract_strided_slice %135 {offsets = [0, 0], sizes = [8, 384], strides = [1, 1]} : vector<8x512xf32> to vector<8x384xf32>
    %cst_57 = arith.constant 5.000000e-01 : f32
    %142 = vector.broadcast %cst_57 : f32 to vector<8x384xf32>
    %143 = arith.mulf %142, %141 : vector<8x384xf32>
    %144 = math.tanh %143 : vector<8x384xf32>
    %cst_58 = arith.constant 5.000000e-01 : f32
    %145 = vector.broadcast %cst_58 : f32 to vector<8x384xf32>
    %146 = arith.mulf %145, %144 : vector<8x384xf32>
    %cst_59 = arith.constant 5.000000e-01 : f32
    %147 = vector.broadcast %cst_59 : f32 to vector<8x384xf32>
    %148 = arith.addf %146, %147 : vector<8x384xf32>
    %149 = vector.extract_strided_slice %148 {offsets = [0, 0], sizes = [8, 128], strides = [1, 1]} : vector<8x384xf32> to vector<8x128xf32>
    %150 = vector.extract_strided_slice %148 {offsets = [0, 128], sizes = [8, 128], strides = [1, 1]} : vector<8x384xf32> to vector<8x128xf32>
    %151 = vector.extract_strided_slice %148 {offsets = [0, 256], sizes = [8, 128], strides = [1, 1]} : vector<8x384xf32> to vector<8x128xf32>
    %152 = vector.extract_strided_slice %135 {offsets = [0, 384], sizes = [8, 128], strides = [1, 1]} : vector<8x512xf32> to vector<8x128xf32>
    %153 = math.tanh %152 : vector<8x128xf32>
    %154 = arith.mulf %150, %105 : vector<8x128xf32>
    %155 = arith.mulf %149, %153 : vector<8x128xf32>
    %156 = arith.addf %154, %155 : vector<8x128xf32>
    %157 = math.tanh %156 : vector<8x128xf32>
    %158 = arith.mulf %151, %157 : vector<8x128xf32>
    %159 = vector.extract_strided_slice %140 {offsets = [0, 0], sizes = [8, 384], strides = [1, 1]} : vector<8x512xf32> to vector<8x384xf32>
    %cst_60 = arith.constant 5.000000e-01 : f32
    %160 = vector.broadcast %cst_60 : f32 to vector<8x384xf32>
    %161 = arith.mulf %160, %159 : vector<8x384xf32>
    %162 = math.tanh %161 : vector<8x384xf32>
    %cst_61 = arith.constant 5.000000e-01 : f32
    %163 = vector.broadcast %cst_61 : f32 to vector<8x384xf32>
    %164 = arith.mulf %163, %162 : vector<8x384xf32>
    %cst_62 = arith.constant 5.000000e-01 : f32
    %165 = vector.broadcast %cst_62 : f32 to vector<8x384xf32>
    %166 = arith.addf %164, %165 : vector<8x384xf32>
    %167 = vector.extract_strided_slice %166 {offsets = [0, 0], sizes = [8, 128], strides = [1, 1]} : vector<8x384xf32> to vector<8x128xf32>
    %168 = vector.extract_strided_slice %166 {offsets = [0, 128], sizes = [8, 128], strides = [1, 1]} : vector<8x384xf32> to vector<8x128xf32>
    %169 = vector.extract_strided_slice %166 {offsets = [0, 256], sizes = [8, 128], strides = [1, 1]} : vector<8x384xf32> to vector<8x128xf32>
    %170 = vector.extract_strided_slice %140 {offsets = [0, 384], sizes = [8, 128], strides = [1, 1]} : vector<8x512xf32> to vector<8x128xf32>
    %171 = math.tanh %170 : vector<8x128xf32>
    %172 = arith.mulf %168, %123 : vector<8x128xf32>
    %173 = arith.mulf %167, %171 : vector<8x128xf32>
    %174 = arith.addf %172, %173 : vector<8x128xf32>
    %175 = math.tanh %174 : vector<8x128xf32>
    %176 = arith.mulf %169, %175 : vector<8x128xf32>
    %c2 = arith.constant 2 : index
    %c0_63 = arith.constant 0 : index
    %c0_64 = arith.constant 0 : index
    %177 = vector.load %arg6[%c2, %c0_63, %c0_64] : memref<8x8x128xf32, #tpu.memory_space<vmem>>, vector<1x8x128xf32>
    %178 = vector.shape_cast %177 : vector<1x8x128xf32> to vector<8x128xf32>
    %179 = vector.shape_cast %176 : vector<8x128xf32> to vector<1x8x128xf32>
    tpu.vector_store %arg6[%c2, %c0_63, %c0_64], %179 {strides = array<i32>} : memref<8x8x128xf32, #tpu.memory_space<vmem>>, vector<1x8x128xf32>,
    %180 = arith.truncf %158 : vector<8x128xf32> to vector<8x128xbf16>
    %181 = arith.truncf %176 : vector<8x128xf32> to vector<8x128xbf16>
    %182 = tpu.concatenate %180, %181 in 1 : vector<8x128xbf16>, vector<8x128xbf16> -> vector<8x256xbf16>
    %c32 = arith.constant 32 : index
    %c0_65 = arith.constant 0 : index
    %183 = vector.load %arg7[%c32, %c0_65] : memref<64x512xf32, #tpu.memory_space<vmem>>, vector<8x512xf32>
    %c0_66 = arith.constant 0 : index
    %c0_67 = arith.constant 0 : index
    %184 = vector.load %arg2[%c0_66, %c0_67] : memref<128x512xbf16, #tpu.memory_space<vmem>>, vector<128x512xbf16>
    %cst_68 = arith.constant dense<0.000000e+00> : vector<8x512xf32>
    %185 = tpu.matmul %180, %184, %cst_68 {dimension_numbers = #tpu.dot_dimension_numbers<[1], [0], [0], [1], [0, 0, 1, 1], [], []>} : vector<8x128xbf16>, vector<128x512xbf16>, vector<8x512xf32> -> vector<8x512xf32>
    %186 = arith.addf %183, %185 : vector<8x512xf32>
    %c0_69 = arith.constant 0 : index
    %c0_70 = arith.constant 0 : index
    %187 = vector.load %arg4[%c0_69, %c0_70] : memref<256x512xbf16, #tpu.memory_space<vmem>>, vector<256x512xbf16>
    %cst_71 = arith.constant dense<0.000000e+00> : vector<8x512xf32>
    %188 = tpu.matmul %182, %187, %cst_71 {dimension_numbers = #tpu.dot_dimension_numbers<[1], [0], [0], [1], [0, 0, 1, 1], [], []>} : vector<8x256xbf16>, vector<256x512xbf16>, vector<8x512xf32> -> vector<8x512xf32>
    %c0_72 = arith.constant 0 : index
    %c0_73 = arith.constant 0 : index
    %189 = vector.load %arg5[%c0_72, %c0_73] : memref<1x512xf32, #tpu.memory_space<vmem>>, vector<1x512xf32>
    %190 = vector.broadcast %189 : vector<1x512xf32> to vector<8x512xf32>
    %191 = arith.addf %188, %190 : vector<8x512xf32>
    %192 = vector.extract_strided_slice %186 {offsets = [0, 0], sizes = [8, 384], strides = [1, 1]} : vector<8x512xf32> to vector<8x384xf32>
    %cst_74 = arith.constant 5.000000e-01 : f32
    %193 = vector.broadcast %cst_74 : f32 to vector<8x384xf32>
    %194 = arith.mulf %193, %192 : vector<8x384xf32>
    %195 = math.tanh %194 : vector<8x384xf32>
    %cst_75 = arith.constant 5.000000e-01 : f32
    %196 = vector.broadcast %cst_75 : f32 to vector<8x384xf32>
    %197 = arith.mulf %196, %195 : vector<8x384xf32>
    %cst_76 = arith.constant 5.000000e-01 : f32
    %198 = vector.broadcast %cst_76 : f32 to vector<8x384xf32>
    %199 = arith.addf %197, %198 : vector<8x384xf32>
    %200 = vector.extract_strided_slice %199 {offsets = [0, 0], sizes = [8, 128], strides = [1, 1]} : vector<8x384xf32> to vector<8x128xf32>
    %201 = vector.extract_strided_slice %199 {offsets = [0, 128], sizes = [8, 128], strides = [1, 1]} : vector<8x384xf32> to vector<8x128xf32>
    %202 = vector.extract_strided_slice %199 {offsets = [0, 256], sizes = [8, 128], strides = [1, 1]} : vector<8x384xf32> to vector<8x128xf32>
    %203 = vector.extract_strided_slice %186 {offsets = [0, 384], sizes = [8, 128], strides = [1, 1]} : vector<8x512xf32> to vector<8x128xf32>
    %204 = math.tanh %203 : vector<8x128xf32>
    %205 = arith.mulf %201, %156 : vector<8x128xf32>
    %206 = arith.mulf %200, %204 : vector<8x128xf32>
    %207 = arith.addf %205, %206 : vector<8x128xf32>
    %208 = math.tanh %207 : vector<8x128xf32>
    %209 = arith.mulf %202, %208 : vector<8x128xf32>
    %210 = vector.extract_strided_slice %191 {offsets = [0, 0], sizes = [8, 384], strides = [1, 1]} : vector<8x512xf32> to vector<8x384xf32>
    %cst_77 = arith.constant 5.000000e-01 : f32
    %211 = vector.broadcast %cst_77 : f32 to vector<8x384xf32>
    %212 = arith.mulf %211, %210 : vector<8x384xf32>
    %213 = math.tanh %212 : vector<8x384xf32>
    %cst_78 = arith.constant 5.000000e-01 : f32
    %214 = vector.broadcast %cst_78 : f32 to vector<8x384xf32>
    %215 = arith.mulf %214, %213 : vector<8x384xf32>
    %cst_79 = arith.constant 5.000000e-01 : f32
    %216 = vector.broadcast %cst_79 : f32 to vector<8x384xf32>
    %217 = arith.addf %215, %216 : vector<8x384xf32>
    %218 = vector.extract_strided_slice %217 {offsets = [0, 0], sizes = [8, 128], strides = [1, 1]} : vector<8x384xf32> to vector<8x128xf32>
    %219 = vector.extract_strided_slice %217 {offsets = [0, 128], sizes = [8, 128], strides = [1, 1]} : vector<8x384xf32> to vector<8x128xf32>
    %220 = vector.extract_strided_slice %217 {offsets = [0, 256], sizes = [8, 128], strides = [1, 1]} : vector<8x384xf32> to vector<8x128xf32>
    %221 = vector.extract_strided_slice %191 {offsets = [0, 384], sizes = [8, 128], strides = [1, 1]} : vector<8x512xf32> to vector<8x128xf32>
    %222 = math.tanh %221 : vector<8x128xf32>
    %223 = arith.mulf %219, %174 : vector<8x128xf32>
    %224 = arith.mulf %218, %222 : vector<8x128xf32>
    %225 = arith.addf %223, %224 : vector<8x128xf32>
    %226 = math.tanh %225 : vector<8x128xf32>
    %227 = arith.mulf %220, %226 : vector<8x128xf32>
    %c3 = arith.constant 3 : index
    %c0_80 = arith.constant 0 : index
    %c0_81 = arith.constant 0 : index
    %228 = vector.load %arg6[%c3, %c0_80, %c0_81] : memref<8x8x128xf32, #tpu.memory_space<vmem>>, vector<1x8x128xf32>
    %229 = vector.shape_cast %228 : vector<1x8x128xf32> to vector<8x128xf32>
    %230 = vector.shape_cast %227 : vector<8x128xf32> to vector<1x8x128xf32>
    tpu.vector_store %arg6[%c3, %c0_80, %c0_81], %230 {strides = array<i32>} : memref<8x8x128xf32, #tpu.memory_space<vmem>>, vector<1x8x128xf32>,
    %231 = arith.truncf %209 : vector<8x128xf32> to vector<8x128xbf16>
    %232 = arith.truncf %227 : vector<8x128xf32> to vector<8x128xbf16>
    %233 = tpu.concatenate %231, %232 in 1 : vector<8x128xbf16>, vector<8x128xbf16> -> vector<8x256xbf16>
    %c40 = arith.constant 40 : index
    %c0_82 = arith.constant 0 : index
    %234 = vector.load %arg7[%c40, %c0_82] : memref<64x512xf32, #tpu.memory_space<vmem>>, vector<8x512xf32>
    %c0_83 = arith.constant 0 : index
    %c0_84 = arith.constant 0 : index
    %235 = vector.load %arg2[%c0_83, %c0_84] : memref<128x512xbf16, #tpu.memory_space<vmem>>, vector<128x512xbf16>
    %cst_85 = arith.constant dense<0.000000e+00> : vector<8x512xf32>
    %236 = tpu.matmul %231, %235, %cst_85 {dimension_numbers = #tpu.dot_dimension_numbers<[1], [0], [0], [1], [0, 0, 1, 1], [], []>} : vector<8x128xbf16>, vector<128x512xbf16>, vector<8x512xf32> -> vector<8x512xf32>
    %237 = arith.addf %234, %236 : vector<8x512xf32>
    %c0_86 = arith.constant 0 : index
    %c0_87 = arith.constant 0 : index
    %238 = vector.load %arg4[%c0_86, %c0_87] : memref<256x512xbf16, #tpu.memory_space<vmem>>, vector<256x512xbf16>
    %cst_88 = arith.constant dense<0.000000e+00> : vector<8x512xf32>
    %239 = tpu.matmul %233, %238, %cst_88 {dimension_numbers = #tpu.dot_dimension_numbers<[1], [0], [0], [1], [0, 0, 1, 1], [], []>} : vector<8x256xbf16>, vector<256x512xbf16>, vector<8x512xf32> -> vector<8x512xf32>
    %c0_89 = arith.constant 0 : index
    %c0_90 = arith.constant 0 : index
    %240 = vector.load %arg5[%c0_89, %c0_90] : memref<1x512xf32, #tpu.memory_space<vmem>>, vector<1x512xf32>
    %241 = vector.broadcast %240 : vector<1x512xf32> to vector<8x512xf32>
    %242 = arith.addf %239, %241 : vector<8x512xf32>
    %243 = vector.extract_strided_slice %237 {offsets = [0, 0], sizes = [8, 384], strides = [1, 1]} : vector<8x512xf32> to vector<8x384xf32>
    %cst_91 = arith.constant 5.000000e-01 : f32
    %244 = vector.broadcast %cst_91 : f32 to vector<8x384xf32>
    %245 = arith.mulf %244, %243 : vector<8x384xf32>
    %246 = math.tanh %245 : vector<8x384xf32>
    %cst_92 = arith.constant 5.000000e-01 : f32
    %247 = vector.broadcast %cst_92 : f32 to vector<8x384xf32>
    %248 = arith.mulf %247, %246 : vector<8x384xf32>
    %cst_93 = arith.constant 5.000000e-01 : f32
    %249 = vector.broadcast %cst_93 : f32 to vector<8x384xf32>
    %250 = arith.addf %248, %249 : vector<8x384xf32>
    %251 = vector.extract_strided_slice %250 {offsets = [0, 0], sizes = [8, 128], strides = [1, 1]} : vector<8x384xf32> to vector<8x128xf32>
    %252 = vector.extract_strided_slice %250 {offsets = [0, 128], sizes = [8, 128], strides = [1, 1]} : vector<8x384xf32> to vector<8x128xf32>
    %253 = vector.extract_strided_slice %250 {offsets = [0, 256], sizes = [8, 128], strides = [1, 1]} : vector<8x384xf32> to vector<8x128xf32>
    %254 = vector.extract_strided_slice %237 {offsets = [0, 384], sizes = [8, 128], strides = [1, 1]} : vector<8x512xf32> to vector<8x128xf32>
    %255 = math.tanh %254 : vector<8x128xf32>
    %256 = arith.mulf %252, %207 : vector<8x128xf32>
    %257 = arith.mulf %251, %255 : vector<8x128xf32>
    %258 = arith.addf %256, %257 : vector<8x128xf32>
    %259 = math.tanh %258 : vector<8x128xf32>
    %260 = arith.mulf %253, %259 : vector<8x128xf32>
    %261 = vector.extract_strided_slice %242 {offsets = [0, 0], sizes = [8, 384], strides = [1, 1]} : vector<8x512xf32> to vector<8x384xf32>
    %cst_94 = arith.constant 5.000000e-01 : f32
    %262 = vector.broadcast %cst_94 : f32 to vector<8x384xf32>
    %263 = arith.mulf %262, %261 : vector<8x384xf32>
    %264 = math.tanh %263 : vector<8x384xf32>
    %cst_95 = arith.constant 5.000000e-01 : f32
    %265 = vector.broadcast %cst_95 : f32 to vector<8x384xf32>
    %266 = arith.mulf %265, %264 : vector<8x384xf32>
    %cst_96 = arith.constant 5.000000e-01 : f32
    %267 = vector.broadcast %cst_96 : f32 to vector<8x384xf32>
    %268 = arith.addf %266, %267 : vector<8x384xf32>
    %269 = vector.extract_strided_slice %268 {offsets = [0, 0], sizes = [8, 128], strides = [1, 1]} : vector<8x384xf32> to vector<8x128xf32>
    %270 = vector.extract_strided_slice %268 {offsets = [0, 128], sizes = [8, 128], strides = [1, 1]} : vector<8x384xf32> to vector<8x128xf32>
    %271 = vector.extract_strided_slice %268 {offsets = [0, 256], sizes = [8, 128], strides = [1, 1]} : vector<8x384xf32> to vector<8x128xf32>
    %272 = vector.extract_strided_slice %242 {offsets = [0, 384], sizes = [8, 128], strides = [1, 1]} : vector<8x512xf32> to vector<8x128xf32>
    %273 = math.tanh %272 : vector<8x128xf32>
    %274 = arith.mulf %270, %225 : vector<8x128xf32>
    %275 = arith.mulf %269, %273 : vector<8x128xf32>
    %276 = arith.addf %274, %275 : vector<8x128xf32>
    %277 = math.tanh %276 : vector<8x128xf32>
    %278 = arith.mulf %271, %277 : vector<8x128xf32>
    %c4 = arith.constant 4 : index
    %c0_97 = arith.constant 0 : index
    %c0_98 = arith.constant 0 : index
    %279 = vector.load %arg6[%c4, %c0_97, %c0_98] : memref<8x8x128xf32, #tpu.memory_space<vmem>>, vector<1x8x128xf32>
    %280 = vector.shape_cast %279 : vector<1x8x128xf32> to vector<8x128xf32>
    %281 = vector.shape_cast %278 : vector<8x128xf32> to vector<1x8x128xf32>
    tpu.vector_store %arg6[%c4, %c0_97, %c0_98], %281 {strides = array<i32>} : memref<8x8x128xf32, #tpu.memory_space<vmem>>, vector<1x8x128xf32>,
    %282 = arith.truncf %260 : vector<8x128xf32> to vector<8x128xbf16>
    %283 = arith.truncf %278 : vector<8x128xf32> to vector<8x128xbf16>
    %284 = tpu.concatenate %282, %283 in 1 : vector<8x128xbf16>, vector<8x128xbf16> -> vector<8x256xbf16>
    %c48 = arith.constant 48 : index
    %c0_99 = arith.constant 0 : index
    %285 = vector.load %arg7[%c48, %c0_99] : memref<64x512xf32, #tpu.memory_space<vmem>>, vector<8x512xf32>
    %c0_100 = arith.constant 0 : index
    %c0_101 = arith.constant 0 : index
    %286 = vector.load %arg2[%c0_100, %c0_101] : memref<128x512xbf16, #tpu.memory_space<vmem>>, vector<128x512xbf16>
    %cst_102 = arith.constant dense<0.000000e+00> : vector<8x512xf32>
    %287 = tpu.matmul %282, %286, %cst_102 {dimension_numbers = #tpu.dot_dimension_numbers<[1], [0], [0], [1], [0, 0, 1, 1], [], []>} : vector<8x128xbf16>, vector<128x512xbf16>, vector<8x512xf32> -> vector<8x512xf32>
    %288 = arith.addf %285, %287 : vector<8x512xf32>
    %c0_103 = arith.constant 0 : index
    %c0_104 = arith.constant 0 : index
    %289 = vector.load %arg4[%c0_103, %c0_104] : memref<256x512xbf16, #tpu.memory_space<vmem>>, vector<256x512xbf16>
    %cst_105 = arith.constant dense<0.000000e+00> : vector<8x512xf32>
    %290 = tpu.matmul %284, %289, %cst_105 {dimension_numbers = #tpu.dot_dimension_numbers<[1], [0], [0], [1], [0, 0, 1, 1], [], []>} : vector<8x256xbf16>, vector<256x512xbf16>, vector<8x512xf32> -> vector<8x512xf32>
    %c0_106 = arith.constant 0 : index
    %c0_107 = arith.constant 0 : index
    %291 = vector.load %arg5[%c0_106, %c0_107] : memref<1x512xf32, #tpu.memory_space<vmem>>, vector<1x512xf32>
    %292 = vector.broadcast %291 : vector<1x512xf32> to vector<8x512xf32>
    %293 = arith.addf %290, %292 : vector<8x512xf32>
    %294 = vector.extract_strided_slice %288 {offsets = [0, 0], sizes = [8, 384], strides = [1, 1]} : vector<8x512xf32> to vector<8x384xf32>
    %cst_108 = arith.constant 5.000000e-01 : f32
    %295 = vector.broadcast %cst_108 : f32 to vector<8x384xf32>
    %296 = arith.mulf %295, %294 : vector<8x384xf32>
    %297 = math.tanh %296 : vector<8x384xf32>
    %cst_109 = arith.constant 5.000000e-01 : f32
    %298 = vector.broadcast %cst_109 : f32 to vector<8x384xf32>
    %299 = arith.mulf %298, %297 : vector<8x384xf32>
    %cst_110 = arith.constant 5.000000e-01 : f32
    %300 = vector.broadcast %cst_110 : f32 to vector<8x384xf32>
    %301 = arith.addf %299, %300 : vector<8x384xf32>
    %302 = vector.extract_strided_slice %301 {offsets = [0, 0], sizes = [8, 128], strides = [1, 1]} : vector<8x384xf32> to vector<8x128xf32>
    %303 = vector.extract_strided_slice %301 {offsets = [0, 128], sizes = [8, 128], strides = [1, 1]} : vector<8x384xf32> to vector<8x128xf32>
    %304 = vector.extract_strided_slice %301 {offsets = [0, 256], sizes = [8, 128], strides = [1, 1]} : vector<8x384xf32> to vector<8x128xf32>
    %305 = vector.extract_strided_slice %288 {offsets = [0, 384], sizes = [8, 128], strides = [1, 1]} : vector<8x512xf32> to vector<8x128xf32>
    %306 = math.tanh %305 : vector<8x128xf32>
    %307 = arith.mulf %303, %258 : vector<8x128xf32>
    %308 = arith.mulf %302, %306 : vector<8x128xf32>
    %309 = arith.addf %307, %308 : vector<8x128xf32>
    %310 = math.tanh %309 : vector<8x128xf32>
    %311 = arith.mulf %304, %310 : vector<8x128xf32>
    %312 = vector.extract_strided_slice %293 {offsets = [0, 0], sizes = [8, 384], strides = [1, 1]} : vector<8x512xf32> to vector<8x384xf32>
    %cst_111 = arith.constant 5.000000e-01 : f32
    %313 = vector.broadcast %cst_111 : f32 to vector<8x384xf32>
    %314 = arith.mulf %313, %312 : vector<8x384xf32>
    %315 = math.tanh %314 : vector<8x384xf32>
    %cst_112 = arith.constant 5.000000e-01 : f32
    %316 = vector.broadcast %cst_112 : f32 to vector<8x384xf32>
    %317 = arith.mulf %316, %315 : vector<8x384xf32>
    %cst_113 = arith.constant 5.000000e-01 : f32
    %318 = vector.broadcast %cst_113 : f32 to vector<8x384xf32>
    %319 = arith.addf %317, %318 : vector<8x384xf32>
    %320 = vector.extract_strided_slice %319 {offsets = [0, 0], sizes = [8, 128], strides = [1, 1]} : vector<8x384xf32> to vector<8x128xf32>
    %321 = vector.extract_strided_slice %319 {offsets = [0, 128], sizes = [8, 128], strides = [1, 1]} : vector<8x384xf32> to vector<8x128xf32>
    %322 = vector.extract_strided_slice %319 {offsets = [0, 256], sizes = [8, 128], strides = [1, 1]} : vector<8x384xf32> to vector<8x128xf32>
    %323 = vector.extract_strided_slice %293 {offsets = [0, 384], sizes = [8, 128], strides = [1, 1]} : vector<8x512xf32> to vector<8x128xf32>
    %324 = math.tanh %323 : vector<8x128xf32>
    %325 = arith.mulf %321, %276 : vector<8x128xf32>
    %326 = arith.mulf %320, %324 : vector<8x128xf32>
    %327 = arith.addf %325, %326 : vector<8x128xf32>
    %328 = math.tanh %327 : vector<8x128xf32>
    %329 = arith.mulf %322, %328 : vector<8x128xf32>
    %c5 = arith.constant 5 : index
    %c0_114 = arith.constant 0 : index
    %c0_115 = arith.constant 0 : index
    %330 = vector.load %arg6[%c5, %c0_114, %c0_115] : memref<8x8x128xf32, #tpu.memory_space<vmem>>, vector<1x8x128xf32>
    %331 = vector.shape_cast %330 : vector<1x8x128xf32> to vector<8x128xf32>
    %332 = vector.shape_cast %329 : vector<8x128xf32> to vector<1x8x128xf32>
    tpu.vector_store %arg6[%c5, %c0_114, %c0_115], %332 {strides = array<i32>} : memref<8x8x128xf32, #tpu.memory_space<vmem>>, vector<1x8x128xf32>,
    %333 = arith.truncf %311 : vector<8x128xf32> to vector<8x128xbf16>
    %334 = arith.truncf %329 : vector<8x128xf32> to vector<8x128xbf16>
    %335 = tpu.concatenate %333, %334 in 1 : vector<8x128xbf16>, vector<8x128xbf16> -> vector<8x256xbf16>
    %c56 = arith.constant 56 : index
    %c0_116 = arith.constant 0 : index
    %336 = vector.load %arg7[%c56, %c0_116] : memref<64x512xf32, #tpu.memory_space<vmem>>, vector<8x512xf32>
    %c0_117 = arith.constant 0 : index
    %c0_118 = arith.constant 0 : index
    %337 = vector.load %arg2[%c0_117, %c0_118] : memref<128x512xbf16, #tpu.memory_space<vmem>>, vector<128x512xbf16>
    %cst_119 = arith.constant dense<0.000000e+00> : vector<8x512xf32>
    %338 = tpu.matmul %333, %337, %cst_119 {dimension_numbers = #tpu.dot_dimension_numbers<[1], [0], [0], [1], [0, 0, 1, 1], [], []>} : vector<8x128xbf16>, vector<128x512xbf16>, vector<8x512xf32> -> vector<8x512xf32>
    %339 = arith.addf %336, %338 : vector<8x512xf32>
    %c0_120 = arith.constant 0 : index
    %c0_121 = arith.constant 0 : index
    %340 = vector.load %arg4[%c0_120, %c0_121] : memref<256x512xbf16, #tpu.memory_space<vmem>>, vector<256x512xbf16>
    %cst_122 = arith.constant dense<0.000000e+00> : vector<8x512xf32>
    %341 = tpu.matmul %335, %340, %cst_122 {dimension_numbers = #tpu.dot_dimension_numbers<[1], [0], [0], [1], [0, 0, 1, 1], [], []>} : vector<8x256xbf16>, vector<256x512xbf16>, vector<8x512xf32> -> vector<8x512xf32>
    %c0_123 = arith.constant 0 : index
    %c0_124 = arith.constant 0 : index
    %342 = vector.load %arg5[%c0_123, %c0_124] : memref<1x512xf32, #tpu.memory_space<vmem>>, vector<1x512xf32>
    %343 = vector.broadcast %342 : vector<1x512xf32> to vector<8x512xf32>
    %344 = arith.addf %341, %343 : vector<8x512xf32>
    %345 = vector.extract_strided_slice %339 {offsets = [0, 0], sizes = [8, 384], strides = [1, 1]} : vector<8x512xf32> to vector<8x384xf32>
    %cst_125 = arith.constant 5.000000e-01 : f32
    %346 = vector.broadcast %cst_125 : f32 to vector<8x384xf32>
    %347 = arith.mulf %346, %345 : vector<8x384xf32>
    %348 = math.tanh %347 : vector<8x384xf32>
    %cst_126 = arith.constant 5.000000e-01 : f32
    %349 = vector.broadcast %cst_126 : f32 to vector<8x384xf32>
    %350 = arith.mulf %349, %348 : vector<8x384xf32>
    %cst_127 = arith.constant 5.000000e-01 : f32
    %351 = vector.broadcast %cst_127 : f32 to vector<8x384xf32>
    %352 = arith.addf %350, %351 : vector<8x384xf32>
    %353 = vector.extract_strided_slice %352 {offsets = [0, 0], sizes = [8, 128], strides = [1, 1]} : vector<8x384xf32> to vector<8x128xf32>
    %354 = vector.extract_strided_slice %352 {offsets = [0, 128], sizes = [8, 128], strides = [1, 1]} : vector<8x384xf32> to vector<8x128xf32>
    %355 = vector.extract_strided_slice %352 {offsets = [0, 256], sizes = [8, 128], strides = [1, 1]} : vector<8x384xf32> to vector<8x128xf32>
    %356 = vector.extract_strided_slice %339 {offsets = [0, 384], sizes = [8, 128], strides = [1, 1]} : vector<8x512xf32> to vector<8x128xf32>
    %357 = math.tanh %356 : vector<8x128xf32>
    %358 = arith.mulf %354, %309 : vector<8x128xf32>
    %359 = arith.mulf %353, %357 : vector<8x128xf32>
    %360 = arith.addf %358, %359 : vector<8x128xf32>
    %361 = math.tanh %360 : vector<8x128xf32>
    %362 = arith.mulf %355, %361 : vector<8x128xf32>
    %363 = vector.extract_strided_slice %344 {offsets = [0, 0], sizes = [8, 384], strides = [1, 1]} : vector<8x512xf32> to vector<8x384xf32>
    %cst_128 = arith.constant 5.000000e-01 : f32
    %364 = vector.broadcast %cst_128 : f32 to vector<8x384xf32>
    %365 = arith.mulf %364, %363 : vector<8x384xf32>
    %366 = math.tanh %365 : vector<8x384xf32>
    %cst_129 = arith.constant 5.000000e-01 : f32
    %367 = vector.broadcast %cst_129 : f32 to vector<8x384xf32>
    %368 = arith.mulf %367, %366 : vector<8x384xf32>
    %cst_130 = arith.constant 5.000000e-01 : f32
    %369 = vector.broadcast %cst_130 : f32 to vector<8x384xf32>
    %370 = arith.addf %368, %369 : vector<8x384xf32>
    %371 = vector.extract_strided_slice %370 {offsets = [0, 0], sizes = [8, 128], strides = [1, 1]} : vector<8x384xf32> to vector<8x128xf32>
    %372 = vector.extract_strided_slice %370 {offsets = [0, 128], sizes = [8, 128], strides = [1, 1]} : vector<8x384xf32> to vector<8x128xf32>
    %373 = vector.extract_strided_slice %370 {offsets = [0, 256], sizes = [8, 128], strides = [1, 1]} : vector<8x384xf32> to vector<8x128xf32>
    %374 = vector.extract_strided_slice %344 {offsets = [0, 384], sizes = [8, 128], strides = [1, 1]} : vector<8x512xf32> to vector<8x128xf32>
    %375 = math.tanh %374 : vector<8x128xf32>
    %376 = arith.mulf %372, %327 : vector<8x128xf32>
    %377 = arith.mulf %371, %375 : vector<8x128xf32>
    %378 = arith.addf %376, %377 : vector<8x128xf32>
    %379 = math.tanh %378 : vector<8x128xf32>
    %380 = arith.mulf %373, %379 : vector<8x128xf32>
    %c6 = arith.constant 6 : index
    %c0_131 = arith.constant 0 : index
    %c0_132 = arith.constant 0 : index
    %381 = vector.load %arg6[%c6, %c0_131, %c0_132] : memref<8x8x128xf32, #tpu.memory_space<vmem>>, vector<1x8x128xf32>
    %382 = vector.shape_cast %381 : vector<1x8x128xf32> to vector<8x128xf32>
    %383 = vector.shape_cast %380 : vector<8x128xf32> to vector<1x8x128xf32>
    tpu.vector_store %arg6[%c6, %c0_131, %c0_132], %383 {strides = array<i32>} : memref<8x8x128xf32, #tpu.memory_space<vmem>>, vector<1x8x128xf32>,
    %384 = arith.truncf %362 : vector<8x128xf32> to vector<8x128xbf16>
    %385 = arith.truncf %380 : vector<8x128xf32> to vector<8x128xbf16>
    %386 = tpu.concatenate %384, %385 in 1 : vector<8x128xbf16>, vector<8x128xbf16> -> vector<8x256xbf16>
    %c0_133 = arith.constant 0 : index
    %c0_134 = arith.constant 0 : index
    %387 = vector.load %arg4[%c0_133, %c0_134] : memref<256x512xbf16, #tpu.memory_space<vmem>>, vector<256x512xbf16>
    %cst_135 = arith.constant dense<0.000000e+00> : vector<8x512xf32>
    %388 = tpu.matmul %386, %387, %cst_135 {dimension_numbers = #tpu.dot_dimension_numbers<[1], [0], [0], [1], [0, 0, 1, 1], [], []>} : vector<8x256xbf16>, vector<256x512xbf16>, vector<8x512xf32> -> vector<8x512xf32>
    %c0_136 = arith.constant 0 : index
    %c0_137 = arith.constant 0 : index
    %389 = vector.load %arg5[%c0_136, %c0_137] : memref<1x512xf32, #tpu.memory_space<vmem>>, vector<1x512xf32>
    %390 = vector.broadcast %389 : vector<1x512xf32> to vector<8x512xf32>
    %391 = arith.addf %388, %390 : vector<8x512xf32>
    %392 = vector.extract_strided_slice %391 {offsets = [0, 0], sizes = [8, 384], strides = [1, 1]} : vector<8x512xf32> to vector<8x384xf32>
    %cst_138 = arith.constant 5.000000e-01 : f32
    %393 = vector.broadcast %cst_138 : f32 to vector<8x384xf32>
    %394 = arith.mulf %393, %392 : vector<8x384xf32>
    %395 = math.tanh %394 : vector<8x384xf32>
    %cst_139 = arith.constant 5.000000e-01 : f32
    %396 = vector.broadcast %cst_139 : f32 to vector<8x384xf32>
    %397 = arith.mulf %396, %395 : vector<8x384xf32>
    %cst_140 = arith.constant 5.000000e-01 : f32
    %398 = vector.broadcast %cst_140 : f32 to vector<8x384xf32>
    %399 = arith.addf %397, %398 : vector<8x384xf32>
    %400 = vector.extract_strided_slice %399 {offsets = [0, 0], sizes = [8, 128], strides = [1, 1]} : vector<8x384xf32> to vector<8x128xf32>
    %401 = vector.extract_strided_slice %399 {offsets = [0, 128], sizes = [8, 128], strides = [1, 1]} : vector<8x384xf32> to vector<8x128xf32>
    %402 = vector.extract_strided_slice %399 {offsets = [0, 256], sizes = [8, 128], strides = [1, 1]} : vector<8x384xf32> to vector<8x128xf32>
    %403 = vector.extract_strided_slice %391 {offsets = [0, 384], sizes = [8, 128], strides = [1, 1]} : vector<8x512xf32> to vector<8x128xf32>
    %404 = math.tanh %403 : vector<8x128xf32>
    %405 = arith.mulf %401, %378 : vector<8x128xf32>
    %406 = arith.mulf %400, %404 : vector<8x128xf32>
    %407 = arith.addf %405, %406 : vector<8x128xf32>
    %408 = math.tanh %407 : vector<8x128xf32>
    %409 = arith.mulf %402, %408 : vector<8x128xf32>
    %c7 = arith.constant 7 : index
    %c0_141 = arith.constant 0 : index
    %c0_142 = arith.constant 0 : index
    %410 = vector.load %arg6[%c7, %c0_141, %c0_142] : memref<8x8x128xf32, #tpu.memory_space<vmem>>, vector<1x8x128xf32>
    %411 = vector.shape_cast %410 : vector<1x8x128xf32> to vector<8x128xf32>
    %412 = vector.shape_cast %409 : vector<8x128xf32> to vector<1x8x128xf32>
    tpu.vector_store %arg6[%c7, %c0_141, %c0_142], %412 {strides = array<i32>} : memref<8x8x128xf32, #tpu.memory_space<vmem>>, vector<1x8x128xf32>,
    return
  }
}

</mosaic_0001>

<llo_original>
// kernel: rnn_basic_block_forward.1
$region0: #{rnn_basic_block_forward.1}
  #allocation0 [shape = 'u32[]', space=smem, size = 0x4, offset = 0x4, fixed_abs, tag = 'smem constant byte address 0x4 - core index']
  #allocation1 [shape = 'u32[72,128]{1,0:T(1,128)}', space=vmem, size = 0x9000, scoped, tag = 'internal scratch']
  #allocation2 [shape = 'f32[64,512]{1,0:T(8,128)}', space=vmem, size = 0x20000, scoped, tag = 'scratch operand']
  %s0 = inlined_call_operand.vmem [shape: bf16[64,32], index: 0, kind: input, shape index: {}]
  %s1 = inlined_call_operand.vmem [shape: bf16[32,512], index: 1, kind: input, shape index: {}]
  %s2 = inlined_call_operand.hbm [shape: bf16[128,512], index: 2, kind: input, shape index: {}]
  %s3 = inlined_call_operand.vmem [shape: f32[1,512], index: 3, kind: input, shape index: {}]
  %s4 = inlined_call_operand.hbm [shape: bf16[256,512], index: 4, kind: input, shape index: {}]
  %s5 = inlined_call_operand.vmem [shape: f32[1,512], index: 5, kind: input, shape index: {}]
  %s6 = inlined_call_operand.vmem [shape: f32[8,8,128], index: 6, kind: output, shape index: {}]
  %s7 = sld [smem:[#allocation0]]
  $region42: #{rnn_basic_block_forward.1} parent=0
    _
  %s9 = ssub.s32 1, %s7
  %s10 = scalar_select 0, %s9, %s7
  $region1: #{rnn_basic_block_forward.1} parent=0
    #allocation3 [shape = 'u8[131072]{0}', space=vmem, size = 0x20000, scoped, tag = 'input window, operand 2, single buffered']
    #allocation4 [shape = 's32[1]{0}', space=sflag, size = 0x4, scoped, tag = 'scoped memory for rnn_basic_block_forward.1']
    #allocation5 [shape = 'u8[262144]{0}', space=vmem, size = 0x40000, scoped, tag = 'input window, operand 4, single buffered']
    #allocation6 [shape = 's32[1]{0}', space=sflag, size = 0x4, scoped, tag = 'scoped memory for rnn_basic_block_forward.1']
    %11 = vsyncpa [#allocation4], 0
    %12 = vsyncpa [#allocation6], 0
    // Predicated region
    $region2: #{rnn_basic_block_forward.1} parent=1 // pred_check
      _
    $region3: #{rnn_basic_block_forward.1} parent=1 // pred_check_branch
      %14 = sbr.rel (0) target = $region5
    $region4: #{rnn_basic_block_forward.1} parent=1 // pred_region
      _
    $region5: #{rnn_basic_block_forward.1} parent=1 // pred_fallthru
      _
    // Predicated region
    $region6: #{rnn_basic_block_forward.1} parent=1 // pred_check
      _
    $region7: #{rnn_basic_block_forward.1} parent=1 // pred_check_branch
      %16 = sbr.rel (0) target = $region9
    $region8: #{rnn_basic_block_forward.1} parent=1 // pred_region
      _
    $region9: #{rnn_basic_block_forward.1} parent=1 // pred_fallthru
      _
    // Predicated region
    $region10: #{rnn_basic_block_forward.1} parent=1 // pred_check
      _
    $region11: #{rnn_basic_block_forward.1} parent=1 // pred_check_branch
      %18 = sbr.rel (0) target = $region13
    $region12: #{rnn_basic_block_forward.1} parent=1 // pred_region
      %20 = vsyncadd [#allocation4], 0
      %s21 = sshll.u32 %s2, 4
      %s22 = int_to_ptr.hbm [resolvable:$true] %s21
      %s23 = sshll.u32 [#allocation3], 4
      %s24 = int_to_ptr.vmem [resolvable:$true] %s23
      %29 = dma.hbm_to_vmem [thread:$0]  %s22, 4096, %s24, [#allocation4], 256, 256, 16
    $region13: #{rnn_basic_block_forward.1} parent=1 // pred_fallthru
      _
    // Predicated region
    $region14: #{rnn_basic_block_forward.1} parent=1 // pred_check
      _
    $region15: #{rnn_basic_block_forward.1} parent=1 // pred_check_branch
      %31 = sbr.rel (0) target = $region17
    $region16: #{rnn_basic_block_forward.1} parent=1 // pred_region
      _
    $region17: #{rnn_basic_block_forward.1} parent=1 // pred_fallthru
      _
    // Predicated region
    $region18: #{rnn_basic_block_forward.1} parent=1 // pred_check
      _
    $region19: #{rnn_basic_block_forward.1} parent=1 // pred_check_branch
      %33 = sbr.rel (0) target = $region21
    $region20: #{rnn_basic_block_forward.1} parent=1 // pred_region
      %35 = vsyncadd [#allocation6], 0
      %s36 = sshll.u32 %s4, 4
      %s37 = int_to_ptr.hbm [resolvable:$true] %s36
      %s38 = sshll.u32 [#allocation5], 4
      %s39 = int_to_ptr.vmem [resolvable:$true] %s38
      %44 = dma.hbm_to_vmem [thread:$0]  %s37, 8192, %s39, [#allocation6], 256, 256, 16
    $region21: #{rnn_basic_block_forward.1} parent=1 // pred_fallthru
      _
    // Predicated region
    $region22: #{rnn_basic_block_forward.1} parent=1 // pred_check
      _
    $region23: #{rnn_basic_block_forward.1} parent=1 // pred_check_branch
      %46 = sbr.rel (0) target = $region25
    $region24: #{rnn_basic_block_forward.1} parent=1 // pred_region
      _
    $region25: #{rnn_basic_block_forward.1} parent=1 // pred_fallthru
      _
    // Predicated region
    $region26: #{rnn_basic_block_forward.1} parent=1 // pred_check
      _
    $region27: #{rnn_basic_block_forward.1} parent=1 // pred_check_branch
      %48 = sbr.rel (0) target = $region29
    $region28: #{rnn_basic_block_forward.1} parent=1 // pred_region
      %50 = dma.done [#allocation4], 4096
    $region29: #{rnn_basic_block_forward.1} parent=1 // pred_fallthru
      _
    // Predicated region
    $region30: #{rnn_basic_block_forward.1} parent=1 // pred_check
      _
    $region31: #{rnn_basic_block_forward.1} parent=1 // pred_check_branch
      %52 = sbr.rel (0) target = $region33
    $region32: #{rnn_basic_block_forward.1} parent=1 // pred_region
      %54 = dma.done [#allocation6], 8192
    $region33: #{rnn_basic_block_forward.1} parent=1 // pred_fallthru
      _
    %v56 = vld [vmem:[%s0] sm:$0xf]
    %v57 = vld [vmem:[%s0 + $0x4] sm:$0xf]
    %v58 = vld [vmem:[%s0 + $0x8] sm:$0xf]
    %v59 = vld [vmem:[%s0 + $0xc] sm:$0xf]
    %v60 = vld [vmem:[%s0 + $0x10] sm:$0xf]
    %v61 = vld [vmem:[%s0 + $0x14] sm:$0xf]
    %v62 = vld [vmem:[%s0 + $0x18] sm:$0xf]
    %v63 = vld [vmem:[%s0 + $0x1c] sm:$0xf]
    %v64 = vld [vmem:[%s1] sm:$0xff]
    %v65 = vld [vmem:[%s1 + $0x8] sm:$0xff]
    %v66 = vld [vmem:[%s1 + $0x10] sm:$0xff]
    %v67 = vld [vmem:[%s1 + $0x18] sm:$0xff]
    %v68 = vld [vmem:[%s1 + $0x20] sm:$0xff]
    %v69 = vld [vmem:[%s1 + $0x28] sm:$0xff]
    %v70 = vld [vmem:[%s1 + $0x30] sm:$0xff]
    %v71 = vld [vmem:[%s1 + $0x38] sm:$0xff]
    %v72 = vld [vmem:[%s3] sm:$0xf]
    %v74 = vperm.slane %v72, 0
    %v75 = vperm.slane %v72, 1
    %v76 = vperm.slane %v72, 2
    %v77 = vperm.slane %v72, 3
    %v90 = vunpack.c.l.b16 %v56
    %v91 = vunpack.c.l.b16 %v57
    %v92 = vunpack.c.l.b16 %v58
    %v93 = vunpack.c.l.b16 %v59
    %v94 = vunpack.c.l.b16 %v60
    %v95 = vunpack.c.l.b16 %v61
    %v96 = vunpack.c.l.b16 %v62
    %v97 = vunpack.c.l.b16 %v63
    %v98 = vpack.c.b16 %v91, %v90
    %v99 = vpack.c.b16 %v93, %v92
    %v100 = vpack.c.b16 %v95, %v94
    %v101 = vpack.c.b16 %v97, %v96
    %v110 = vunpack.c.l.b16 %v64
    %v111 = vunpack.c.h.b16 %v64
    %v112 = vunpack.c.l.b16 %v65
    %v113 = vunpack.c.h.b16 %v65
    %v114 = vunpack.c.l.b16 %v66
    %v115 = vunpack.c.h.b16 %v66
    %v116 = vunpack.c.l.b16 %v67
    %v117 = vunpack.c.h.b16 %v67
    %v118 = vunpack.c.l.b16 %v68
    %v119 = vunpack.c.h.b16 %v68
    %v120 = vunpack.c.l.b16 %v69
    %v121 = vunpack.c.h.b16 %v69
    %v122 = vunpack.c.l.b16 %v70
    %v123 = vunpack.c.h.b16 %v70
    %v124 = vunpack.c.l.b16 %v71
    %v125 = vunpack.c.h.b16 %v71
    %v126 = vpack.c.b16 %v114, %v110
    %v127 = vpack.c.b16 %v115, %v111
    %v128 = vpack.c.b16 %v116, %v112
    %v129 = vpack.c.b16 %v117, %v113
    %v130 = vpack.c.b16 %v122, %v118
    %v131 = vpack.c.b16 %v123, %v119
    %v132 = vpack.c.b16 %v124, %v120
    %v133 = vpack.c.b16 %v125, %v121
    %vm142 = vcmask 261120
    %v144 = vsel %vm142, %v98, 0
    %v147 = vsel %vm142, %v99, 0
    %v150 = vsel %vm142, %v100, 0
    %v153 = vsel %vm142, %v101, 0
    %155 = vmatpush.bf16.msra.mxu0 0
    %156 = vmatpush.bf16.msra.mxu0 0
    %157 = vmatpush.bf16.msra.mxu0 0
    %158 = vmatpush.bf16.msra.mxu0 0
    %159 = vmatpush.bf16.msra.mxu0 0
    %160 = vmatpush.bf16.msra.mxu0 0
    %161 = vmatpush.bf16.msra.mxu0 %v130
    %162 = vmatpush.bf16.msra.mxu0 %v126
    %163 = vmatmul.bf16.gmra.mxu0 %v144
    %v164 = vpop.f32.mrf.mxu0
    %v165 = vadd.f32 %v74, %v164
    %v166 = vpop.f32.mrf.mxu0
    %v167 = vadd.f32 %v74, %v166
    %168 = vmatmul.bf16.gmra.mxu0 %v147
    %v169 = vpop.f32.mrf.mxu0
    %v170 = vadd.f32 %v74, %v169
    %v171 = vpop.f32.mrf.mxu0
    %v172 = vadd.f32 %v74, %v171
    %173 = vmatmul.bf16.gmra.mxu0 %v150
    %v174 = vpop.f32.mrf.mxu0
    %v175 = vadd.f32 %v74, %v174
    %v176 = vpop.f32.mrf.mxu0
    %v177 = vadd.f32 %v74, %v176
    %178 = vmatmul.bf16.gmra.mxu0 %v153
    %v179 = vpop.f32.mrf.mxu0
    %v180 = vadd.f32 %v74, %v179
    %v181 = vpop.f32.mrf.mxu0
    %v182 = vadd.f32 %v74, %v181
    %183 = vdwg.mxu0
    %184 = vmatpush.bf16.msra.mxu0 0
    %185 = vmatpush.bf16.msra.mxu0 0
    %186 = vmatpush.bf16.msra.mxu0 0
    %187 = vmatpush.bf16.msra.mxu0 0
    %188 = vmatpush.bf16.msra.mxu0 0
    %189 = vmatpush.bf16.msra.mxu0 0
    %190 = vmatpush.bf16.msra.mxu0 %v131
    %191 = vmatpush.bf16.msra.mxu0 %v127
    %192 = vmatmul.bf16.gmra.mxu0 %v144
    %v193 = vpop.f32.mrf.mxu0
    %v194 = vadd.f32 %v75, %v193
    %v195 = vpop.f32.mrf.mxu0
    %v196 = vadd.f32 %v75, %v195
    %197 = vmatmul.bf16.gmra.mxu0 %v147
    %v198 = vpop.f32.mrf.mxu0
    %v199 = vadd.f32 %v75, %v198
    %v200 = vpop.f32.mrf.mxu0
    %v201 = vadd.f32 %v75, %v200
    %202 = vmatmul.bf16.gmra.mxu0 %v150
    %v203 = vpop.f32.mrf.mxu0
    %v204 = vadd.f32 %v75, %v203
    %v205 = vpop.f32.mrf.mxu0
    %v206 = vadd.f32 %v75, %v205
    %207 = vmatmul.bf16.gmra.mxu0 %v153
    %v208 = vpop.f32.mrf.mxu0
    %v209 = vadd.f32 %v75, %v208
    %v210 = vpop.f32.mrf.mxu0
    %v211 = vadd.f32 %v75, %v210
    %212 = vdwg.mxu0
    %213 = vmatpush.bf16.msra.mxu0 0
    %214 = vmatpush.bf16.msra.mxu0 0
    %215 = vmatpush.bf16.msra.mxu0 0
    %216 = vmatpush.bf16.msra.mxu0 0
    %217 = vmatpush.bf16.msra.mxu0 0
    %218 = vmatpush.bf16.msra.mxu0 0
    %219 = vmatpush.bf16.msra.mxu0 %v132
    %220 = vmatpush.bf16.msra.mxu0 %v128
    %221 = vmatmul.bf16.gmra.mxu0 %v144
    %v222 = vpop.f32.mrf.mxu0
    %v223 = vadd.f32 %v76, %v222
    %v224 = vpop.f32.mrf.mxu0
    %v225 = vadd.f32 %v76, %v224
    %226 = vmatmul.bf16.gmra.mxu0 %v147
    %v227 = vpop.f32.mrf.mxu0
    %v228 = vadd.f32 %v76, %v227
    %v229 = vpop.f32.mrf.mxu0
    %v230 = vadd.f32 %v76, %v229
    %231 = vmatmul.bf16.gmra.mxu0 %v150
    %v232 = vpop.f32.mrf.mxu0
    %v233 = vadd.f32 %v76, %v232
    %v234 = vpop.f32.mrf.mxu0
    %v235 = vadd.f32 %v76, %v234
    %236 = vmatmul.bf16.gmra.mxu0 %v153
    %v237 = vpop.f32.mrf.mxu0
    %v238 = vadd.f32 %v76, %v237
    %v239 = vpop.f32.mrf.mxu0
    %v240 = vadd.f32 %v76, %v239
    %241 = vdwg.mxu0
    %242 = vmatpush.bf16.msra.mxu0 0
    %243 = vmatpush.bf16.msra.mxu0 0
    %244 = vmatpush.bf16.msra.mxu0 0
    %245 = vmatpush.bf16.msra.mxu0 0
    %246 = vmatpush.bf16.msra.mxu0 0
    %247 = vmatpush.bf16.msra.mxu0 0
    %248 = vmatpush.bf16.msra.mxu0 %v133
    %249 = vmatpush.bf16.msra.mxu0 %v129
    %250 = vmatmul.bf16.gmra.mxu0 %v144
    %v251 = vpop.f32.mrf.mxu0
    %v252 = vadd.f32 %v77, %v251
    %v253 = vpop.f32.mrf.mxu0
    %v254 = vadd.f32 %v77, %v253
    %255 = vmatmul.bf16.gmra.mxu0 %v147
    %v256 = vpop.f32.mrf.mxu0
    %v257 = vadd.f32 %v77, %v256
    %v258 = vpop.f32.mrf.mxu0
    %v259 = vadd.f32 %v77, %v258
    %260 = vmatmul.bf16.gmra.mxu0 %v150
    %v261 = vpop.f32.mrf.mxu0
    %v262 = vadd.f32 %v77, %v261
    %v263 = vpop.f32.mrf.mxu0
    %v264 = vadd.f32 %v77, %v263
    %265 = vmatmul.bf16.gmra.mxu0 %v153
    %v266 = vpop.f32.mrf.mxu0
    %v267 = vadd.f32 %v77, %v266
    %v268 = vpop.f32.mrf.mxu0
    %v269 = vadd.f32 %v77, %v268
    %270 = vdwg.mxu0
    %271 = vst [vmem:[#allocation2] sm:$0xff] %v165
    %272 = vst [vmem:[#allocation2 + $0x8] sm:$0xff] %v194
    %273 = vst [vmem:[#allocation2 + $0x10] sm:$0xff] %v223
    %274 = vst [vmem:[#allocation2 + $0x18] sm:$0xff] %v252
    %275 = vst [vmem:[#allocation2 + $0x20] sm:$0xff] %v167
    %276 = vst [vmem:[#allocation2 + $0x28] sm:$0xff] %v196
    %277 = vst [vmem:[#allocation2 + $0x30] sm:$0xff] %v225
    %278 = vst [vmem:[#allocation2 + $0x38] sm:$0xff] %v254
    %279 = vst [vmem:[#allocation2 + $0x40] sm:$0xff] %v170
    %280 = vst [vmem:[#allocation2 + $0x48] sm:$0xff] %v199
    %281 = vst [vmem:[#allocation2 + $0x50] sm:$0xff] %v228
    %282 = vst [vmem:[#allocation2 + $0x58] sm:$0xff] %v257
    %283 = vst [vmem:[#allocation2 + $0x60] sm:$0xff] %v172
    %284 = vst [vmem:[#allocation2 + $0x68] sm:$0xff] %v201
    %285 = vst [vmem:[#allocation2 + $0x70] sm:$0xff] %v230
    %286 = vst [vmem:[#allocation2 + $0x78] sm:$0xff] %v259
    %287 = vst [vmem:[#allocation2 + $0x80] sm:$0xff] %v175
    %288 = vst [vmem:[#allocation2 + $0x88] sm:$0xff] %v204
    %289 = vst [vmem:[#allocation2 + $0x90] sm:$0xff] %v233
    %290 = vst [vmem:[#allocation2 + $0x98] sm:$0xff] %v262
    %291 = vst [vmem:[#allocation2 + $0xa0] sm:$0xff] %v177
    %292 = vst [vmem:[#allocation2 + $0xa8] sm:$0xff] %v206
    %293 = vst [vmem:[#allocation2 + $0xb0] sm:$0xff] %v235
    %294 = vst [vmem:[#allocation2 + $0xb8] sm:$0xff] %v264
    %295 = vst [vmem:[#allocation2 + $0xc0] sm:$0xff] %v180
    %296 = vst [vmem:[#allocation2 + $0xc8] sm:$0xff] %v209
    %297 = vst [vmem:[#allocation2 + $0xd0] sm:$0xff] %v238
    %298 = vst [vmem:[#allocation2 + $0xd8] sm:$0xff] %v267
    %299 = vst [vmem:[#allocation2 + $0xe0] sm:$0xff] %v182
    %300 = vst [vmem:[#allocation2 + $0xe8] sm:$0xff] %v211
    %301 = vst [vmem:[#allocation2 + $0xf0] sm:$0xff] %v240
    %302 = vst [vmem:[#allocation2 + $0xf8] sm:$0xff] %v269
    %v303 = vld [vmem:[#allocation2] sm:$0xff]
    %v304 = vld [vmem:[#allocation2 + $0x8] sm:$0xff]
    %v305 = vld [vmem:[#allocation2 + $0x10] sm:$0xff]
    %v306 = vld [vmem:[#allocation2 + $0x18] sm:$0xff]
    %v307 = vmul.f32 %v303, 0.5
    %v308 = vmul.f32 %v304, 0.5
    %v309 = vmul.f32 %v305, 0.5
    %v310 = vtanh.pop %v307
    %v311 = vtanh.pop %v308
    %v312 = vtanh.pop %v309
    %v313 = vmul.f32 %v310, 0.5
    %v314 = vmul.f32 %v311, 0.5
    %v315 = vmul.f32 %v312, 0.5
    %v316 = vadd.f32 %v313, 0.5
    %v317 = vadd.f32 %v314, 0.5
    %v318 = vadd.f32 %v315, 0.5
    %v319 = vtanh.pop %v306
    %v320 = vmul.f32 %v317, 0.0
    %v321 = vmul.f32 %v316, %v319
    %v322 = vadd.f32 %v320, %v321
    %v323 = vtanh.pop %v322
    %v324 = vmul.f32 %v318, %v323
    %v325 = vpack.c.bf16 %v324, %v324
    %v326 = vld [vmem:[#allocation2 + $0x20] sm:$0xff]
    %v327 = vld [vmem:[#allocation2 + $0x28] sm:$0xff]
    %v328 = vld [vmem:[#allocation2 + $0x30] sm:$0xff]
    %v329 = vld [vmem:[#allocation2 + $0x38] sm:$0xff]
    %v330 = vld [vmem:[#allocation3] sm:$0xff]
    %v331 = vld [vmem:[#allocation3 + $0x8] sm:$0xff]
    %v332 = vld [vmem:[#allocation3 + $0x10] sm:$0xff]
    %v333 = vld [vmem:[#allocation3 + $0x18] sm:$0xff]
    %v334 = vld [vmem:[#allocation3 + $0x20] sm:$0xff]
    %v335 = vld [vmem:[#allocation3 + $0x28] sm:$0xff]
    %v336 = vld [vmem:[#allocation3 + $0x30] sm:$0xff]
    %v337 = vld [vmem:[#allocation3 + $0x38] sm:$0xff]
    %v338 = vld [vmem:[#allocation3 + $0x40] sm:$0xff]
    %v339 = vld [vmem:[#allocation3 + $0x48] sm:$0xff]
    %v340 = vld [vmem:[#allocation3 + $0x50] sm:$0xff]
    %v341 = vld [vmem:[#allocation3 + $0x58] sm:$0xff]
    %v342 = vld [vmem:[#allocation3 + $0x60] sm:$0xff]
    %v343 = vld [vmem:[#allocation3 + $0x68] sm:$0xff]
    %v344 = vld [vmem:[#allocation3 + $0x70] sm:$0xff]
    %v345 = vld [vmem:[#allocation3 + $0x78] sm:$0xff]
    %v346 = vld [vmem:[#allocation3 + $0x80] sm:$0xff]
    %v347 = vld [vmem:[#allocation3 + $0x88] sm:$0xff]
    %v348 = vld [vmem:[#allocation3 + $0x90] sm:$0xff]
    %v349 = vld [vmem:[#allocation3 + $0x98] sm:$0xff]
    %v350 = vld [vmem:[#allocation3 + $0xa0] sm:$0xff]
    %v351 = vld [vmem:[#allocation3 + $0xa8] sm:$0xff]
    %v352 = vld [vmem:[#allocation3 + $0xb0] sm:$0xff]
    %v353 = vld [vmem:[#allocation3 + $0xb8] sm:$0xff]
    %v354 = vld [vmem:[#allocation3 + $0xc0] sm:$0xff]
    %v355 = vld [vmem:[#allocation3 + $0xc8] sm:$0xff]
    %v356 = vld [vmem:[#allocation3 + $0xd0] sm:$0xff]
    %v357 = vld [vmem:[#allocation3 + $0xd8] sm:$0xff]
    %v358 = vld [vmem:[#allocation3 + $0xe0] sm:$0xff]
    %v359 = vld [vmem:[#allocation3 + $0xe8] sm:$0xff]
    %v360 = vld [vmem:[#allocation3 + $0xf0] sm:$0xff]
    %v361 = vld [vmem:[#allocation3 + $0xf8] sm:$0xff]
    %v394 = vunpack.c.l.b16 %v330
    %v395 = vunpack.c.h.b16 %v330
    %v396 = vunpack.c.l.b16 %v331
    %v397 = vunpack.c.h.b16 %v331
    %v398 = vunpack.c.l.b16 %v332
    %v399 = vunpack.c.h.b16 %v332
    %v400 = vunpack.c.l.b16 %v333
    %v401 = vunpack.c.h.b16 %v333
    %v402 = vunpack.c.l.b16 %v334
    %v403 = vunpack.c.h.b16 %v334
    %v404 = vunpack.c.l.b16 %v335
    %v405 = vunpack.c.h.b16 %v335
    %v406 = vunpack.c.l.b16 %v336
    %v407 = vunpack.c.h.b16 %v336
    %v408 = vunpack.c.l.b16 %v337
    %v409 = vunpack.c.h.b16 %v337
    %v410 = vunpack.c.l.b16 %v338
    %v411 = vunpack.c.h.b16 %v338
    %v412 = vunpack.c.l.b16 %v339
    %v413 = vunpack.c.h.b16 %v339
    %v414 = vunpack.c.l.b16 %v340
    %v415 = vunpack.c.h.b16 %v340
    %v416 = vunpack.c.l.b16 %v341
    %v417 = vunpack.c.h.b16 %v341
    %v418 = vunpack.c.l.b16 %v342
    %v419 = vunpack.c.h.b16 %v342
    %v420 = vunpack.c.l.b16 %v343
    %v421 = vunpack.c.h.b16 %v343
    %v422 = vunpack.c.l.b16 %v344
    %v423 = vunpack.c.h.b16 %v344
    %v424 = vunpack.c.l.b16 %v345
    %v425 = vunpack.c.h.b16 %v345
    %v426 = vunpack.c.l.b16 %v346
    %v427 = vunpack.c.h.b16 %v346
    %v428 = vunpack.c.l.b16 %v347
    %v429 = vunpack.c.h.b16 %v347
    %v430 = vunpack.c.l.b16 %v348
    %v431 = vunpack.c.h.b16 %v348
    %v432 = vunpack.c.l.b16 %v349
    %v433 = vunpack.c.h.b16 %v349
    %v434 = vunpack.c.l.b16 %v350
    %v435 = vunpack.c.h.b16 %v350
    %v436 = vunpack.c.l.b16 %v351
    %v437 = vunpack.c.h.b16 %v351
    %v438 = vunpack.c.l.b16 %v352
    %v439 = vunpack.c.h.b16 %v352
    %v440 = vunpack.c.l.b16 %v353
    %v441 = vunpack.c.h.b16 %v353
    %v442 = vunpack.c.l.b16 %v354
    %v443 = vunpack.c.h.b16 %v354
    %v444 = vunpack.c.l.b16 %v355
    %v445 = vunpack.c.h.b16 %v355
    %v446 = vunpack.c.l.b16 %v356
    %v447 = vunpack.c.h.b16 %v356
    %v448 = vunpack.c.l.b16 %v357
    %v449 = vunpack.c.h.b16 %v357
    %v450 = vunpack.c.l.b16 %v358
    %v451 = vunpack.c.h.b16 %v358
    %v452 = vunpack.c.l.b16 %v359
    %v453 = vunpack.c.h.b16 %v359
    %v454 = vunpack.c.l.b16 %v360
    %v455 = vunpack.c.h.b16 %v360
    %v456 = vunpack.c.l.b16 %v361
    %v457 = vunpack.c.h.b16 %v361
    %v458 = vpack.c.b16 %v398, %v394
    %v459 = vpack.c.b16 %v399, %v395
    %v460 = vpack.c.b16 %v400, %v396
    %v461 = vpack.c.b16 %v401, %v397
    %v462 = vpack.c.b16 %v406, %v402
    %v463 = vpack.c.b16 %v407, %v403
    %v464 = vpack.c.b16 %v408, %v404
    %v465 = vpack.c.b16 %v409, %v405
    %v466 = vpack.c.b16 %v414, %v410
    %v467 = vpack.c.b16 %v415, %v411
    %v468 = vpack.c.b16 %v416, %v412
    %v469 = vpack.c.b16 %v417, %v413
    %v470 = vpack.c.b16 %v422, %v418
    %v471 = vpack.c.b16 %v423, %v419
    %v472 = vpack.c.b16 %v424, %v420
    %v473 = vpack.c.b16 %v425, %v421
    %v474 = vpack.c.b16 %v430, %v426
    %v475 = vpack.c.b16 %v431, %v427
    %v476 = vpack.c.b16 %v432, %v428
    %v477 = vpack.c.b16 %v433, %v429
    %v478 = vpack.c.b16 %v438, %v434
    %v479 = vpack.c.b16 %v439, %v435
    %v480 = vpack.c.b16 %v440, %v436
    %v481 = vpack.c.b16 %v441, %v437
    %v482 = vpack.c.b16 %v446, %v442
    %v483 = vpack.c.b16 %v447, %v443
    %v484 = vpack.c.b16 %v448, %v444
    %v485 = vpack.c.b16 %v449, %v445
    %v486 = vpack.c.b16 %v454, %v450
    %v487 = vpack.c.b16 %v455, %v451
    %v488 = vpack.c.b16 %v456, %v452
    %v489 = vpack.c.b16 %v457, %v453
    %522 = vmatpush.bf16.msra.mxu0 %v486
    %523 = vmatpush.bf16.msra.mxu0 %v482
    %524 = vmatpush.bf16.msra.mxu0 %v478
    %525 = vmatpush.bf16.msra.mxu0 %v474
    %526 = vmatpush.bf16.msra.mxu0 %v470
    %527 = vmatpush.bf16.msra.mxu0 %v466
    %528 = vmatpush.bf16.msra.mxu0 %v462
    %529 = vmatpush.bf16.msra.mxu0 %v458
    %530 = vmatmul.bf16.gmra.mxu0 %v325
    %v531 = vpop.f32.mrf.mxu0
    %v532 = vadd.f32 0.0, %v531
    %v533 = vpop.f32.mrf.mxu0
    %534 = vdwg.mxu0
    %535 = vmatpush.bf16.msra.mxu0 %v487
    %536 = vmatpush.bf16.msra.mxu0 %v483
    %537 = vmatpush.bf16.msra.mxu0 %v479
    %538 = vmatpush.bf16.msra.mxu0 %v475
    %539 = vmatpush.bf16.msra.mxu0 %v471
    %540 = vmatpush.bf16.msra.mxu0 %v467
    %541 = vmatpush.bf16.msra.mxu0 %v463
    %542 = vmatpush.bf16.msra.mxu0 %v459
    %543 = vmatmul.bf16.gmra.mxu0 %v325
    %v544 = vpop.f32.mrf.mxu0
    %v545 = vadd.f32 0.0, %v544
    %v546 = vpop.f32.mrf.mxu0
    %547 = vdwg.mxu0
    %548 = vmatpush.bf16.msra.mxu0 %v488
    %549 = vmatpush.bf16.msra.mxu0 %v484
    %550 = vmatpush.bf16.msra.mxu0 %v480
    %551 = vmatpush.bf16.msra.mxu0 %v476
    %552 = vmatpush.bf16.msra.mxu0 %v472
    %553 = vmatpush.bf16.msra.mxu0 %v468
    %554 = vmatpush.bf16.msra.mxu0 %v464
    %555 = vmatpush.bf16.msra.mxu0 %v460
    %556 = vmatmul.bf16.gmra.mxu0 %v325
    %v557 = vpop.f32.mrf.mxu0
    %v558 = vadd.f32 0.0, %v557
    %v559 = vpop.f32.mrf.mxu0
    %560 = vdwg.mxu0
    %561 = vmatpush.bf16.msra.mxu0 %v489
    %562 = vmatpush.bf16.msra.mxu0 %v485
    %563 = vmatpush.bf16.msra.mxu0 %v481
    %564 = vmatpush.bf16.msra.mxu0 %v477
    %565 = vmatpush.bf16.msra.mxu0 %v473
    %566 = vmatpush.bf16.msra.mxu0 %v469
    %567 = vmatpush.bf16.msra.mxu0 %v465
    %568 = vmatpush.bf16.msra.mxu0 %v461
    %569 = vmatmul.bf16.gmra.mxu0 %v325
    %v570 = vpop.f32.mrf.mxu0
    %v571 = vadd.f32 0.0, %v570
    %v572 = vpop.f32.mrf.mxu0
    %573 = vdwg.mxu0
    %v574 = vadd.f32 %v326, %v532
    %v575 = vadd.f32 %v327, %v545
    %v576 = vadd.f32 %v328, %v558
    %v577 = vadd.f32 %v329, %v571
    %v578 = vld [vmem:[#allocation5] sm:$0xff]
    %v579 = vld [vmem:[#allocation5 + $0x8] sm:$0xff]
    %v580 = vld [vmem:[#allocation5 + $0x10] sm:$0xff]
    %v581 = vld [vmem:[#allocation5 + $0x18] sm:$0xff]
    %v582 = vld [vmem:[#allocation5 + $0x20] sm:$0xff]
    %v583 = vld [vmem:[#allocation5 + $0x28] sm:$0xff]
    %v584 = vld [vmem:[#allocation5 + $0x30] sm:$0xff]
    %v585 = vld [vmem:[#allocation5 + $0x38] sm:$0xff]
    %v586 = vld [vmem:[#allocation5 + $0x40] sm:$0xff]
    %v587 = vld [vmem:[#allocation5 + $0x48] sm:$0xff]
    %v588 = vld [vmem:[#allocation5 + $0x50] sm:$0xff]
    %v589 = vld [vmem:[#allocation5 + $0x58] sm:$0xff]
    %v590 = vld [vmem:[#allocation5 + $0x60] sm:$0xff]
    %v591 = vld [vmem:[#allocation5 + $0x68] sm:$0xff]
    %v592 = vld [vmem:[#allocation5 + $0x70] sm:$0xff]
    %v593 = vld [vmem:[#allocation5 + $0x78] sm:$0xff]
    %v594 = vld [vmem:[#allocation5 + $0x80] sm:$0xff]
    %v595 = vld [vmem:[#allocation5 + $0x88] sm:$0xff]
    %v596 = vld [vmem:[#allocation5 + $0x90] sm:$0xff]
    %v597 = vld [vmem:[#allocation5 + $0x98] sm:$0xff]
    %v598 = vld [vmem:[#allocation5 + $0xa0] sm:$0xff]
    %v599 = vld [vmem:[#allocation5 + $0xa8] sm:$0xff]
    %v600 = vld [vmem:[#allocation5 + $0xb0] sm:$0xff]
    %v601 = vld [vmem:[#allocation5 + $0xb8] sm:$0xff]
    %v602 = vld [vmem:[#allocation5 + $0xc0] sm:$0xff]
    %v603 = vld [vmem:[#allocation5 + $0xc8] sm:$0xff]
    %v604 = vld [vmem:[#allocation5 + $0xd0] sm:$0xff]
    %v605 = vld [vmem:[#allocation5 + $0xd8] sm:$0xff]
    %v606 = vld [vmem:[#allocation5 + $0xe0] sm:$0xff]
    %v607 = vld [vmem:[#allocation5 + $0xe8] sm:$0xff]
    %v608 = vld [vmem:[#allocation5 + $0xf0] sm:$0xff]
    %v609 = vld [vmem:[#allocation5 + $0xf8] sm:$0xff]
    %v610 = vld [vmem:[#allocation5 + $0x100] sm:$0xff]
    %v611 = vld [vmem:[#allocation5 + $0x108] sm:$0xff]
    %v612 = vld [vmem:[#allocation5 + $0x110] sm:$0xff]
    %v613 = vld [vmem:[#allocation5 + $0x118] sm:$0xff]
    %v614 = vld [vmem:[#allocation5 + $0x120] sm:$0xff]
    %v615 = vld [vmem:[#allocation5 + $0x128] sm:$0xff]
    %v616 = vld [vmem:[#allocation5 + $0x130] sm:$0xff]
    %v617 = vld [vmem:[#allocation5 + $0x138] sm:$0xff]
    %v618 = vld [vmem:[#allocation5 + $0x140] sm:$0xff]
    %v619 = vld [vmem:[#allocation5 + $0x148] sm:$0xff]
    %v620 = vld [vmem:[#allocation5 + $0x150] sm:$0xff]
    %v621 = vld [vmem:[#allocation5 + $0x158] sm:$0xff]
    %v622 = vld [vmem:[#allocation5 + $0x160] sm:$0xff]
    %v623 = vld [vmem:[#allocation5 + $0x168] sm:$0xff]
    %v624 = vld [vmem:[#allocation5 + $0x170] sm:$0xff]
    %v625 = vld [vmem:[#allocation5 + $0x178] sm:$0xff]
    %v626 = vld [vmem:[#allocation5 + $0x180] sm:$0xff]
    %v627 = vld [vmem:[#allocation5 + $0x188] sm:$0xff]
    %v628 = vld [vmem:[#allocation5 + $0x190] sm:$0xff]
    %v629 = vld [vmem:[#allocation5 + $0x198] sm:$0xff]
    %v630 = vld [vmem:[#allocation5 + $0x1a0] sm:$0xff]
    %v631 = vld [vmem:[#allocation5 + $0x1a8] sm:$0xff]
    %v632 = vld [vmem:[#allocation5 + $0x1b0] sm:$0xff]
    %v633 = vld [vmem:[#allocation5 + $0x1b8] sm:$0xff]
    %v634 = vld [vmem:[#allocation5 + $0x1c0] sm:$0xff]
    %v635 = vld [vmem:[#allocation5 + $0x1c8] sm:$0xff]
    %v636 = vld [vmem:[#allocation5 + $0x1d0] sm:$0xff]
    %v637 = vld [vmem:[#allocation5 + $0x1d8] sm:$0xff]
    %v638 = vld [vmem:[#allocation5 + $0x1e0] sm:$0xff]
    %v639 = vld [vmem:[#allocation5 + $0x1e8] sm:$0xff]
    %v640 = vld [vmem:[#allocation5 + $0x1f0] sm:$0xff]
    %v641 = vld [vmem:[#allocation5 + $0x1f8] sm:$0xff]
    %v642 = vld [vmem:[%s5] sm:$0xf]
    %v644 = vperm.slane %v642, 0
    %v645 = vperm.slane %v642, 1
    %v646 = vperm.slane %v642, 2
    %v647 = vperm.slane %v642, 3
    %v716 = vunpack.c.l.b16 %v578
    %v717 = vunpack.c.h.b16 %v578
    %v718 = vunpack.c.l.b16 %v579
    %v719 = vunpack.c.h.b16 %v579
    %v720 = vunpack.c.l.b16 %v580
    %v721 = vunpack.c.h.b16 %v580
    %v722 = vunpack.c.l.b16 %v581
    %v723 = vunpack.c.h.b16 %v581
    %v724 = vunpack.c.l.b16 %v582
    %v725 = vunpack.c.h.b16 %v582
    %v726 = vunpack.c.l.b16 %v583
    %v727 = vunpack.c.h.b16 %v583
    %v728 = vunpack.c.l.b16 %v584
    %v729 = vunpack.c.h.b16 %v584
    %v730 = vunpack.c.l.b16 %v585
    %v731 = vunpack.c.h.b16 %v585
    %v732 = vunpack.c.l.b16 %v586
    %v733 = vunpack.c.h.b16 %v586
    %v734 = vunpack.c.l.b16 %v587
    %v735 = vunpack.c.h.b16 %v587
    %v736 = vunpack.c.l.b16 %v588
    %v737 = vunpack.c.h.b16 %v588
    %v738 = vunpack.c.l.b16 %v589
    %v739 = vunpack.c.h.b16 %v589
    %v740 = vunpack.c.l.b16 %v590
    %v741 = vunpack.c.h.b16 %v590
    %v742 = vunpack.c.l.b16 %v591
    %v743 = vunpack.c.h.b16 %v591
    %v744 = vunpack.c.l.b16 %v592
    %v745 = vunpack.c.h.b16 %v592
    %v746 = vunpack.c.l.b16 %v593
    %v747 = vunpack.c.h.b16 %v593
    %v748 = vunpack.c.l.b16 %v594
    %v749 = vunpack.c.h.b16 %v594
    %v750 = vunpack.c.l.b16 %v595
    %v751 = vunpack.c.h.b16 %v595
    %v752 = vunpack.c.l.b16 %v596
    %v753 = vunpack.c.h.b16 %v596
    %v754 = vunpack.c.l.b16 %v597
    %v755 = vunpack.c.h.b16 %v597
    %v756 = vunpack.c.l.b16 %v598
    %v757 = vunpack.c.h.b16 %v598
    %v758 = vunpack.c.l.b16 %v599
    %v759 = vunpack.c.h.b16 %v599
    %v760 = vunpack.c.l.b16 %v600
    %v761 = vunpack.c.h.b16 %v600
    %v762 = vunpack.c.l.b16 %v601
    %v763 = vunpack.c.h.b16 %v601
    %v764 = vunpack.c.l.b16 %v602
    %v765 = vunpack.c.h.b16 %v602
    %v766 = vunpack.c.l.b16 %v603
    %v767 = vunpack.c.h.b16 %v603
    %v768 = vunpack.c.l.b16 %v604
    %v769 = vunpack.c.h.b16 %v604
    %v770 = vunpack.c.l.b16 %v605
    %v771 = vunpack.c.h.b16 %v605
    %v772 = vunpack.c.l.b16 %v606
    %v773 = vunpack.c.h.b16 %v606
    %v774 = vunpack.c.l.b16 %v607
    %v775 = vunpack.c.h.b16 %v607
    %v776 = vunpack.c.l.b16 %v608
    %v777 = vunpack.c.h.b16 %v608
    %v778 = vunpack.c.l.b16 %v609
    %v779 = vunpack.c.h.b16 %v609
    %v780 = vunpack.c.l.b16 %v610
    %v781 = vunpack.c.h.b16 %v610
    %v782 = vunpack.c.l.b16 %v611
    %v783 = vunpack.c.h.b16 %v611
    %v784 = vunpack.c.l.b16 %v612
    %v785 = vunpack.c.h.b16 %v612
    %v786 = vunpack.c.l.b16 %v613
    %v787 = vunpack.c.h.b16 %v613
    %v788 = vunpack.c.l.b16 %v614
    %v789 = vunpack.c.h.b16 %v614
    %v790 = vunpack.c.l.b16 %v615
    %v791 = vunpack.c.h.b16 %v615
    %v792 = vunpack.c.l.b16 %v616
    %v793 = vunpack.c.h.b16 %v616
    %v794 = vunpack.c.l.b16 %v617
    %v795 = vunpack.c.h.b16 %v617
    %v796 = vunpack.c.l.b16 %v618
    %v797 = vunpack.c.h.b16 %v618
    %v798 = vunpack.c.l.b16 %v619
    %v799 = vunpack.c.h.b16 %v619
    %v800 = vunpack.c.l.b16 %v620
    %v801 = vunpack.c.h.b16 %v620
    %v802 = vunpack.c.l.b16 %v621
    %v803 = vunpack.c.h.b16 %v621
    %v804 = vunpack.c.l.b16 %v622
    %v805 = vunpack.c.h.b16 %v622
    %v806 = vunpack.c.l.b16 %v623
    %v807 = vunpack.c.h.b16 %v623
    %v808 = vunpack.c.l.b16 %v624
    %v809 = vunpack.c.h.b16 %v624
    %v810 = vunpack.c.l.b16 %v625
    %v811 = vunpack.c.h.b16 %v625
    %v812 = vunpack.c.l.b16 %v626
    %v813 = vunpack.c.h.b16 %v626
    %v814 = vunpack.c.l.b16 %v627
    %v815 = vunpack.c.h.b16 %v627
    %v816 = vunpack.c.l.b16 %v628
    %v817 = vunpack.c.h.b16 %v628
    %v818 = vunpack.c.l.b16 %v629
    %v819 = vunpack.c.h.b16 %v629
    %v820 = vunpack.c.l.b16 %v630
    %v821 = vunpack.c.h.b16 %v630
    %v822 = vunpack.c.l.b16 %v631
    %v823 = vunpack.c.h.b16 %v631
    %v824 = vunpack.c.l.b16 %v632
    %v825 = vunpack.c.h.b16 %v632
    %v826 = vunpack.c.l.b16 %v633
    %v827 = vunpack.c.h.b16 %v633
    %v828 = vunpack.c.l.b16 %v634
    %v829 = vunpack.c.h.b16 %v634
    %v830 = vunpack.c.l.b16 %v635
    %v831 = vunpack.c.h.b16 %v635
    %v832 = vunpack.c.l.b16 %v636
    %v833 = vunpack.c.h.b16 %v636
    %v834 = vunpack.c.l.b16 %v637
    %v835 = vunpack.c.h.b16 %v637
    %v836 = vunpack.c.l.b16 %v638
    %v837 = vunpack.c.h.b16 %v638
    %v838 = vunpack.c.l.b16 %v639
    %v839 = vunpack.c.h.b16 %v639
    %v840 = vunpack.c.l.b16 %v640
    %v841 = vunpack.c.h.b16 %v640
    %v842 = vunpack.c.l.b16 %v641
    %v843 = vunpack.c.h.b16 %v641
    %v844 = vpack.c.b16 %v720, %v716
    %v845 = vpack.c.b16 %v721, %v717
    %v846 = vpack.c.b16 %v722, %v718
    %v847 = vpack.c.b16 %v723, %v719
    %v848 = vpack.c.b16 %v728, %v724
    %v849 = vpack.c.b16 %v729, %v725
    %v850 = vpack.c.b16 %v730, %v726
    %v851 = vpack.c.b16 %v731, %v727
    %v852 = vpack.c.b16 %v736, %v732
    %v853 = vpack.c.b16 %v737, %v733
    %v854 = vpack.c.b16 %v738, %v734
    %v855 = vpack.c.b16 %v739, %v735
    %v856 = vpack.c.b16 %v744, %v740
    %v857 = vpack.c.b16 %v745, %v741
    %v858 = vpack.c.b16 %v746, %v742
    %v859 = vpack.c.b16 %v747, %v743
    %v860 = vpack.c.b16 %v752, %v748
    %v861 = vpack.c.b16 %v753, %v749
    %v862 = vpack.c.b16 %v754, %v750
    %v863 = vpack.c.b16 %v755, %v751
    %v864 = vpack.c.b16 %v760, %v756
    %v865 = vpack.c.b16 %v761, %v757
    %v866 = vpack.c.b16 %v762, %v758
    %v867 = vpack.c.b16 %v763, %v759
    %v868 = vpack.c.b16 %v768, %v764
    %v869 = vpack.c.b16 %v769, %v765
    %v870 = vpack.c.b16 %v770, %v766
    %v871 = vpack.c.b16 %v771, %v767
    %v872 = vpack.c.b16 %v776, %v772
    %v873 = vpack.c.b16 %v777, %v773
    %v874 = vpack.c.b16 %v778, %v774
    %v875 = vpack.c.b16 %v779, %v775
    %v876 = vpack.c.b16 %v784, %v780
    %v877 = vpack.c.b16 %v785, %v781
    %v878 = vpack.c.b16 %v786, %v782
    %v879 = vpack.c.b16 %v787, %v783
    %v880 = vpack.c.b16 %v792, %v788
    %v881 = vpack.c.b16 %v793, %v789
    %v882 = vpack.c.b16 %v794, %v790
    %v883 = vpack.c.b16 %v795, %v791
    %v884 = vpack.c.b16 %v800, %v796
    %v885 = vpack.c.b16 %v801, %v797
    %v886 = vpack.c.b16 %v802, %v798
    %v887 = vpack.c.b16 %v803, %v799
    %v888 = vpack.c.b16 %v808, %v804
    %v889 = vpack.c.b16 %v809, %v805
    %v890 = vpack.c.b16 %v810, %v806
    %v891 = vpack.c.b16 %v811, %v807
    %v892 = vpack.c.b16 %v816, %v812
    %v893 = vpack.c.b16 %v817, %v813
    %v894 = vpack.c.b16 %v818, %v814
    %v895 = vpack.c.b16 %v819, %v815
    %v896 = vpack.c.b16 %v824, %v820
    %v897 = vpack.c.b16 %v825, %v821
    %v898 = vpack.c.b16 %v826, %v822
    %v899 = vpack.c.b16 %v827, %v823
    %v900 = vpack.c.b16 %v832, %v828
    %v901 = vpack.c.b16 %v833, %v829
    %v902 = vpack.c.b16 %v834, %v830
    %v903 = vpack.c.b16 %v835, %v831
    %v904 = vpack.c.b16 %v840, %v836
    %v905 = vpack.c.b16 %v841, %v837
    %v906 = vpack.c.b16 %v842, %v838
    %v907 = vpack.c.b16 %v843, %v839
    %972 = vmatpush.bf16.msra.mxu0 %v872
    %973 = vmatpush.bf16.msra.mxu0 %v868
    %974 = vmatpush.bf16.msra.mxu0 %v864
    %975 = vmatpush.bf16.msra.mxu0 %v860
    %976 = vmatpush.bf16.msra.mxu0 %v856
    %977 = vmatpush.bf16.msra.mxu0 %v852
    %978 = vmatpush.bf16.msra.mxu0 %v848
    %979 = vmatpush.bf16.msra.mxu0 %v844
    %980 = vmatmul.bf16.gmra.mxu0 %v325
    %v981 = vpop.f32.mrf.mxu0
    %v982 = vadd.f32 %v644, %v981
    %v983 = vpop.f32.mrf.mxu0
    %984 = vdwg.mxu0
    %985 = vmatpush.bf16.msra.mxu0 %v904
    %986 = vmatpush.bf16.msra.mxu0 %v900
    %987 = vmatpush.bf16.msra.mxu0 %v896
    %988 = vmatpush.bf16.msra.mxu0 %v892
    %989 = vmatpush.bf16.msra.mxu0 %v888
    %990 = vmatpush.bf16.msra.mxu0 %v884
    %991 = vmatpush.bf16.msra.mxu0 %v880
    %992 = vmatpush.bf16.msra.mxu0 %v876
    %993 = vmatmul.bf16.gmra.mxu0 0
    %v994 = vpop.f32.mrf.mxu0
    %v995 = vadd.f32 %v982, %v994
    %v996 = vpop.f32.mrf.mxu0
    %997 = vdwg.mxu0
    %998 = vmatpush.bf16.msra.mxu0 %v873
    %999 = vmatpush.bf16.msra.mxu0 %v869
    %1000 = vmatpush.bf16.msra.mxu0 %v865
    %1001 = vmatpush.bf16.msra.mxu0 %v861
    %1002 = vmatpush.bf16.msra.mxu0 %v857
    %1003 = vmatpush.bf16.msra.mxu0 %v853
    %1004 = vmatpush.bf16.msra.mxu0 %v849
    %1005 = vmatpush.bf16.msra.mxu0 %v845
    %1006 = vmatmul.bf16.gmra.mxu0 %v325
    %v1007 = vpop.f32.mrf.mxu0
    %v1008 = vadd.f32 %v645, %v1007
    %v1009 = vpop.f32.mrf.mxu0
    %1010 = vdwg.mxu0
    %1011 = vmatpush.bf16.msra.mxu0 %v905
    %1012 = vmatpush.bf16.msra.mxu0 %v901
    %1013 = vmatpush.bf16.msra.mxu0 %v897
    %1014 = vmatpush.bf16.msra.mxu0 %v893
    %1015 = vmatpush.bf16.msra.mxu0 %v889
    %1016 = vmatpush.bf16.msra.mxu0 %v885
    %1017 = vmatpush.bf16.msra.mxu0 %v881
    %1018 = vmatpush.bf16.msra.mxu0 %v877
    %1019 = vmatmul.bf16.gmra.mxu0 0
    %v1020 = vpop.f32.mrf.mxu0
    %v1021 = vadd.f32 %v1008, %v1020
    %v1022 = vpop.f32.mrf.mxu0
    %1023 = vdwg.mxu0
    %1024 = vmatpush.bf16.msra.mxu0 %v874
    %1025 = vmatpush.bf16.msra.mxu0 %v870
    %1026 = vmatpush.bf16.msra.mxu0 %v866
    %1027 = vmatpush.bf16.msra.mxu0 %v862
    %1028 = vmatpush.bf16.msra.mxu0 %v858
    %1029 = vmatpush.bf16.msra.mxu0 %v854
    %1030 = vmatpush.bf16.msra.mxu0 %v850
    %1031 = vmatpush.bf16.msra.mxu0 %v846
    %1032 = vmatmul.bf16.gmra.mxu0 %v325
    %v1033 = vpop.f32.mrf.mxu0
    %v1034 = vadd.f32 %v646, %v1033
    %v1035 = vpop.f32.mrf.mxu0
    %1036 = vdwg.mxu0
    %1037 = vmatpush.bf16.msra.mxu0 %v906
    %1038 = vmatpush.bf16.msra.mxu0 %v902
    %1039 = vmatpush.bf16.msra.mxu0 %v898
    %1040 = vmatpush.bf16.msra.mxu0 %v894
    %1041 = vmatpush.bf16.msra.mxu0 %v890
    %1042 = vmatpush.bf16.msra.mxu0 %v886
    %1043 = vmatpush.bf16.msra.mxu0 %v882
    %1044 = vmatpush.bf16.msra.mxu0 %v878
    %1045 = vmatmul.bf16.gmra.mxu0 0
    %v1046 = vpop.f32.mrf.mxu0
    %v1047 = vadd.f32 %v1034, %v1046
    %v1048 = vpop.f32.mrf.mxu0
    %1049 = vdwg.mxu0
    %1050 = vmatpush.bf16.msra.mxu0 %v875
    %1051 = vmatpush.bf16.msra.mxu0 %v871
    %1052 = vmatpush.bf16.msra.mxu0 %v867
    %1053 = vmatpush.bf16.msra.mxu0 %v863
    %1054 = vmatpush.bf16.msra.mxu0 %v859
    %1055 = vmatpush.bf16.msra.mxu0 %v855
    %1056 = vmatpush.bf16.msra.mxu0 %v851
    %1057 = vmatpush.bf16.msra.mxu0 %v847
    %1058 = vmatmul.bf16.gmra.mxu0 %v325
    %v1059 = vpop.f32.mrf.mxu0
    %v1060 = vadd.f32 %v647, %v1059
    %v1061 = vpop.f32.mrf.mxu0
    %1062 = vdwg.mxu0
    %1063 = vmatpush.bf16.msra.mxu0 %v907
    %1064 = vmatpush.bf16.msra.mxu0 %v903
    %1065 = vmatpush.bf16.msra.mxu0 %v899
    %1066 = vmatpush.bf16.msra.mxu0 %v895
    %1067 = vmatpush.bf16.msra.mxu0 %v891
    %1068 = vmatpush.bf16.msra.mxu0 %v887
    %1069 = vmatpush.bf16.msra.mxu0 %v883
    %1070 = vmatpush.bf16.msra.mxu0 %v879
    %1071 = vmatmul.bf16.gmra.mxu0 0
    %v1072 = vpop.f32.mrf.mxu0
    %v1073 = vadd.f32 %v1060, %v1072
    %v1074 = vpop.f32.mrf.mxu0
    %1075 = vdwg.mxu0
    %v1076 = vmul.f32 %v574, 0.5
    %v1077 = vmul.f32 %v575, 0.5
    %v1078 = vmul.f32 %v576, 0.5
    %v1079 = vtanh.pop %v1076
    %v1080 = vtanh.pop %v1077
    %v1081 = vtanh.pop %v1078
    %v1082 = vmul.f32 %v1079, 0.5
    %v1083 = vmul.f32 %v1080, 0.5
    %v1084 = vmul.f32 %v1081, 0.5
    %v1085 = vadd.f32 %v1082, 0.5
    %v1086 = vadd.f32 %v1083, 0.5
    %v1087 = vadd.f32 %v1084, 0.5
    %v1088 = vtanh.pop %v577
    %v1089 = vmul.f32 %v1086, %v322
    %v1090 = vmul.f32 %v1085, %v1088
    %v1091 = vadd.f32 %v1089, %v1090
    %v1092 = vtanh.pop %v1091
    %v1093 = vmul.f32 %v1087, %v1092
    %v1094 = vmul.f32 %v995, 0.5
    %v1095 = vmul.f32 %v1021, 0.5
    %v1096 = vmul.f32 %v1047, 0.5
    %v1097 = vtanh.pop %v1094
    %v1098 = vtanh.pop %v1095
    %v1099 = vtanh.pop %v1096
    %v1100 = vmul.f32 %v1097, 0.5
    %v1101 = vmul.f32 %v1098, 0.5
    %v1102 = vmul.f32 %v1099, 0.5
    %v1103 = vadd.f32 %v1100, 0.5
    %v1104 = vadd.f32 %v1101, 0.5
    %v1105 = vadd.f32 %v1102, 0.5
    %v1106 = vtanh.pop %v1073
    %v1107 = vmul.f32 %v1104, 0.0
    %v1108 = vmul.f32 %v1103, %v1106
    %v1109 = vadd.f32 %v1107, %v1108
    %v1110 = vtanh.pop %v1109
    %v1111 = vmul.f32 %v1105, %v1110
    %1112 = vst [vmem:[%s6] sm:$0xff] %v1111
    %v1113 = vpack.c.bf16 %v1093, %v1093
    %v1114 = vpack.c.bf16 %v1111, %v1111
    %v1115 = vld [vmem:[#allocation2 + $0x40] sm:$0xff]
    %v1116 = vld [vmem:[#allocation2 + $0x48] sm:$0xff]
    %v1117 = vld [vmem:[#allocation2 + $0x50] sm:$0xff]
    %v1118 = vld [vmem:[#allocation2 + $0x58] sm:$0xff]
    %v1119 = vld [vmem:[#allocation3] sm:$0xff]
    %v1120 = vld [vmem:[#allocation3 + $0x8] sm:$0xff]
    %v1121 = vld [vmem:[#allocation3 + $0x10] sm:$0xff]
    %v1122 = vld [vmem:[#allocation3 + $0x18] sm:$0xff]
    %v1123 = vld [vmem:[#allocation3 + $0x20] sm:$0xff]
    %v1124 = vld [vmem:[#allocation3 + $0x28] sm:$0xff]
    %v1125 = vld [vmem:[#allocation3 + $0x30] sm:$0xff]
    %v1126 = vld [vmem:[#allocation3 + $0x38] sm:$0xff]
    %v1127 = vld [vmem:[#allocation3 + $0x40] sm:$0xff]
    %v1128 = vld [vmem:[#allocation3 + $0x48] sm:$0xff]
    %v1129 = vld [vmem:[#allocation3 + $0x50] sm:$0xff]
    %v1130 = vld [vmem:[#allocation3 + $0x58] sm:$0xff]
    %v1131 = vld [vmem:[#allocation3 + $0x60] sm:$0xff]
    %v1132 = vld [vmem:[#allocation3 + $0x68] sm:$0xff]
    %v1133 = vld [vmem:[#allocation3 + $0x70] sm:$0xff]
    %v1134 = vld [vmem:[#allocation3 + $0x78] sm:$0xff]
    %v1135 = vld [vmem:[#allocation3 + $0x80] sm:$0xff]
    %v1136 = vld [vmem:[#allocation3 + $0x88] sm:$0xff]
    %v1137 = vld [vmem:[#allocation3 + $0x90] sm:$0xff]
    %v1138 = vld [vmem:[#allocation3 + $0x98] sm:$0xff]
    %v1139 = vld [vmem:[#allocation3 + $0xa0] sm:$0xff]
    %v1140 = vld [vmem:[#allocation3 + $0xa8] sm:$0xff]
    %v1141 = vld [vmem:[#allocation3 + $0xb0] sm:$0xff]
    %v1142 = vld [vmem:[#allocation3 + $0xb8] sm:$0xff]
    %v1143 = vld [vmem:[#allocation3 + $0xc0] sm:$0xff]
    %v1144 = vld [vmem:[#allocation3 + $0xc8] sm:$0xff]
    %v1145 = vld [vmem:[#allocation3 + $0xd0] sm:$0xff]
    %v1146 = vld [vmem:[#allocation3 + $0xd8] sm:$0xff]
    %v1147 = vld [vmem:[#allocation3 + $0xe0] sm:$0xff]
    %v1148 = vld [vmem:[#allocation3 + $0xe8] sm:$0xff]
    %v1149 = vld [vmem:[#allocation3 + $0xf0] sm:$0xff]
    %v1150 = vld [vmem:[#allocation3 + $0xf8] sm:$0xff]
    %v1183 = vunpack.c.l.b16 %v1119
    %v1184 = vunpack.c.h.b16 %v1119
    %v1185 = vunpack.c.l.b16 %v1120
    %v1186 = vunpack.c.h.b16 %v1120
    %v1187 = vunpack.c.l.b16 %v1121
    %v1188 = vunpack.c.h.b16 %v1121
    %v1189 = vunpack.c.l.b16 %v1122
    %v1190 = vunpack.c.h.b16 %v1122
    %v1191 = vunpack.c.l.b16 %v1123
    %v1192 = vunpack.c.h.b16 %v1123
    %v1193 = vunpack.c.l.b16 %v1124
    %v1194 = vunpack.c.h.b16 %v1124
    %v1195 = vunpack.c.l.b16 %v1125
    %v1196 = vunpack.c.h.b16 %v1125
    %v1197 = vunpack.c.l.b16 %v1126
    %v1198 = vunpack.c.h.b16 %v1126
    %v1199 = vunpack.c.l.b16 %v1127
    %v1200 = vunpack.c.h.b16 %v1127
    %v1201 = vunpack.c.l.b16 %v1128
    %v1202 = vunpack.c.h.b16 %v1128
    %v1203 = vunpack.c.l.b16 %v1129
    %v1204 = vunpack.c.h.b16 %v1129
    %v1205 = vunpack.c.l.b16 %v1130
    %v1206 = vunpack.c.h.b16 %v1130
    %v1207 = vunpack.c.l.b16 %v1131
    %v1208 = vunpack.c.h.b16 %v1131
    %v1209 = vunpack.c.l.b16 %v1132
    %v1210 = vunpack.c.h.b16 %v1132
    %v1211 = vunpack.c.l.b16 %v1133
    %v1212 = vunpack.c.h.b16 %v1133
    %v1213 = vunpack.c.l.b16 %v1134
    %v1214 = vunpack.c.h.b16 %v1134
    %v1215 = vunpack.c.l.b16 %v1135
    %v1216 = vunpack.c.h.b16 %v1135
    %v1217 = vunpack.c.l.b16 %v1136
    %v1218 = vunpack.c.h.b16 %v1136
    %v1219 = vunpack.c.l.b16 %v1137
    %v1220 = vunpack.c.h.b16 %v1137
    %v1221 = vunpack.c.l.b16 %v1138
    %v1222 = vunpack.c.h.b16 %v1138
    %v1223 = vunpack.c.l.b16 %v1139
    %v1224 = vunpack.c.h.b16 %v1139
    %v1225 = vunpack.c.l.b16 %v1140
    %v1226 = vunpack.c.h.b16 %v1140
    %v1227 = vunpack.c.l.b16 %v1141
    %v1228 = vunpack.c.h.b16 %v1141
    %v1229 = vunpack.c.l.b16 %v1142
    %v1230 = vunpack.c.h.b16 %v1142
    %v1231 = vunpack.c.l.b16 %v1143
    %v1232 = vunpack.c.h.b16 %v1143
    %v1233 = vunpack.c.l.b16 %v1144
    %v1234 = vunpack.c.h.b16 %v1144
    %v1235 = vunpack.c.l.b16 %v1145
    %v1236 = vunpack.c.h.b16 %v1145
    %v1237 = vunpack.c.l.b16 %v1146
    %v1238 = vunpack.c.h.b16 %v1146
    %v1239 = vunpack.c.l.b16 %v1147
    %v1240 = vunpack.c.h.b16 %v1147
    %v1241 = vunpack.c.l.b16 %v1148
    %v1242 = vunpack.c.h.b16 %v1148
    %v1243 = vunpack.c.l.b16 %v1149
    %v1244 = vunpack.c.h.b16 %v1149
    %v1245 = vunpack.c.l.b16 %v1150
    %v1246 = vunpack.c.h.b16 %v1150
    %v1247 = vpack.c.b16 %v1187, %v1183
    %v1248 = vpack.c.b16 %v1188, %v1184
    %v1249 = vpack.c.b16 %v1189, %v1185
    %v1250 = vpack.c.b16 %v1190, %v1186
    %v1251 = vpack.c.b16 %v1195, %v1191
    %v1252 = vpack.c.b16 %v1196, %v1192
    %v1253 = vpack.c.b16 %v1197, %v1193
    %v1254 = vpack.c.b16 %v1198, %v1194
    %v1255 = vpack.c.b16 %v1203, %v1199
    %v1256 = vpack.c.b16 %v1204, %v1200
    %v1257 = vpack.c.b16 %v1205, %v1201
    %v1258 = vpack.c.b16 %v1206, %v1202
    %v1259 = vpack.c.b16 %v1211, %v1207
    %v1260 = vpack.c.b16 %v1212, %v1208
    %v1261 = vpack.c.b16 %v1213, %v1209
    %v1262 = vpack.c.b16 %v1214, %v1210
    %v1263 = vpack.c.b16 %v1219, %v1215
    %v1264 = vpack.c.b16 %v1220, %v1216
    %v1265 = vpack.c.b16 %v1221, %v1217
    %v1266 = vpack.c.b16 %v1222, %v1218
    %v1267 = vpack.c.b16 %v1227, %v1223
    %v1268 = vpack.c.b16 %v1228, %v1224
    %v1269 = vpack.c.b16 %v1229, %v1225
    %v1270 = vpack.c.b16 %v1230, %v1226
    %v1271 = vpack.c.b16 %v1235, %v1231
    %v1272 = vpack.c.b16 %v1236, %v1232
    %v1273 = vpack.c.b16 %v1237, %v1233
    %v1274 = vpack.c.b16 %v1238, %v1234
    %v1275 = vpack.c.b16 %v1243, %v1239
    %v1276 = vpack.c.b16 %v1244, %v1240
    %v1277 = vpack.c.b16 %v1245, %v1241
    %v1278 = vpack.c.b16 %v1246, %v1242
    %1311 = vmatpush.bf16.msra.mxu0 %v1275
    %1312 = vmatpush.bf16.msra.mxu0 %v1271
    %1313 = vmatpush.bf16.msra.mxu0 %v1267
    %1314 = vmatpush.bf16.msra.mxu0 %v1263
    %1315 = vmatpush.bf16.msra.mxu0 %v1259
    %1316 = vmatpush.bf16.msra.mxu0 %v1255
    %1317 = vmatpush.bf16.msra.mxu0 %v1251
    %1318 = vmatpush.bf16.msra.mxu0 %v1247
    %1319 = vmatmul.bf16.gmra.mxu0 %v1113
    %v1320 = vpop.f32.mrf.mxu0
    %v1321 = vadd.f32 0.0, %v1320
    %v1322 = vpop.f32.mrf.mxu0
    %1323 = vdwg.mxu0
    %1324 = vmatpush.bf16.msra.mxu0 %v1276
    %1325 = vmatpush.bf16.msra.mxu0 %v1272
    %1326 = vmatpush.bf16.msra.mxu0 %v1268
    %1327 = vmatpush.bf16.msra.mxu0 %v1264
    %1328 = vmatpush.bf16.msra.mxu0 %v1260
    %1329 = vmatpush.bf16.msra.mxu0 %v1256
    %1330 = vmatpush.bf16.msra.mxu0 %v1252
    %1331 = vmatpush.bf16.msra.mxu0 %v1248
    %1332 = vmatmul.bf16.gmra.mxu0 %v1113
    %v1333 = vpop.f32.mrf.mxu0
    %v1334 = vadd.f32 0.0, %v1333
    %v1335 = vpop.f32.mrf.mxu0
    %1336 = vdwg.mxu0
    %1337 = vmatpush.bf16.msra.mxu0 %v1277
    %1338 = vmatpush.bf16.msra.mxu0 %v1273
    %1339 = vmatpush.bf16.msra.mxu0 %v1269
    %1340 = vmatpush.bf16.msra.mxu0 %v1265
    %1341 = vmatpush.bf16.msra.mxu0 %v1261
    %1342 = vmatpush.bf16.msra.mxu0 %v1257
    %1343 = vmatpush.bf16.msra.mxu0 %v1253
    %1344 = vmatpush.bf16.msra.mxu0 %v1249
    %1345 = vmatmul.bf16.gmra.mxu0 %v1113
    %v1346 = vpop.f32.mrf.mxu0
    %v1347 = vadd.f32 0.0, %v1346
    %v1348 = vpop.f32.mrf.mxu0
    %1349 = vdwg.mxu0
    %1350 = vmatpush.bf16.msra.mxu0 %v1278
    %1351 = vmatpush.bf16.msra.mxu0 %v1274
    %1352 = vmatpush.bf16.msra.mxu0 %v1270
    %1353 = vmatpush.bf16.msra.mxu0 %v1266
    %1354 = vmatpush.bf16.msra.mxu0 %v1262
    %1355 = vmatpush.bf16.msra.mxu0 %v1258
    %1356 = vmatpush.bf16.msra.mxu0 %v1254
    %1357 = vmatpush.bf16.msra.mxu0 %v1250
    %1358 = vmatmul.bf16.gmra.mxu0 %v1113
    %v1359 = vpop.f32.mrf.mxu0
    %v1360 = vadd.f32 0.0, %v1359
    %v1361 = vpop.f32.mrf.mxu0
    %1362 = vdwg.mxu0
    %v1363 = vadd.f32 %v1115, %v1321
    %v1364 = vadd.f32 %v1116, %v1334
    %v1365 = vadd.f32 %v1117, %v1347
    %v1366 = vadd.f32 %v1118, %v1360
    %v1367 = vld [vmem:[#allocation5] sm:$0xff]
    %v1368 = vld [vmem:[#allocation5 + $0x8] sm:$0xff]
    %v1369 = vld [vmem:[#allocation5 + $0x10] sm:$0xff]
    %v1370 = vld [vmem:[#allocation5 + $0x18] sm:$0xff]
    %v1371 = vld [vmem:[#allocation5 + $0x20] sm:$0xff]
    %v1372 = vld [vmem:[#allocation5 + $0x28] sm:$0xff]
    %v1373 = vld [vmem:[#allocation5 + $0x30] sm:$0xff]
    %v1374 = vld [vmem:[#allocation5 + $0x38] sm:$0xff]
    %v1375 = vld [vmem:[#allocation5 + $0x40] sm:$0xff]
    %v1376 = vld [vmem:[#allocation5 + $0x48] sm:$0xff]
    %v1377 = vld [vmem:[#allocation5 + $0x50] sm:$0xff]
    %v1378 = vld [vmem:[#allocation5 + $0x58] sm:$0xff]
    %v1379 = vld [vmem:[#allocation5 + $0x60] sm:$0xff]
    %v1380 = vld [vmem:[#allocation5 + $0x68] sm:$0xff]
    %v1381 = vld [vmem:[#allocation5 + $0x70] sm:$0xff]
    %v1382 = vld [vmem:[#allocation5 + $0x78] sm:$0xff]
    %v1383 = vld [vmem:[#allocation5 + $0x80] sm:$0xff]
    %v1384 = vld [vmem:[#allocation5 + $0x88] sm:$0xff]
    %v1385 = vld [vmem:[#allocation5 + $0x90] sm:$0xff]
    %v1386 = vld [vmem:[#allocation5 + $0x98] sm:$0xff]
    %v1387 = vld [vmem:[#allocation5 + $0xa0] sm:$0xff]
    %v1388 = vld [vmem:[#allocation5 + $0xa8] sm:$0xff]
    %v1389 = vld [vmem:[#allocation5 + $0xb0] sm:$0xff]
    %v1390 = vld [vmem:[#allocation5 + $0xb8] sm:$0xff]
    %v1391 = vld [vmem:[#allocation5 + $0xc0] sm:$0xff]
    %v1392 = vld [vmem:[#allocation5 + $0xc8] sm:$0xff]
    %v1393 = vld [vmem:[#allocation5 + $0xd0] sm:$0xff]
    %v1394 = vld [vmem:[#allocation5 + $0xd8] sm:$0xff]
    %v1395 = vld [vmem:[#allocation5 + $0xe0] sm:$0xff]
    %v1396 = vld [vmem:[#allocation5 + $0xe8] sm:$0xff]
    %v1397 = vld [vmem:[#allocation5 + $0xf0] sm:$0xff]
    %v1398 = vld [vmem:[#allocation5 + $0xf8] sm:$0xff]
    %v1399 = vld [vmem:[#allocation5 + $0x100] sm:$0xff]
    %v1400 = vld [vmem:[#allocation5 + $0x108] sm:$0xff]
    %v1401 = vld [vmem:[#allocation5 + $0x110] sm:$0xff]
    %v1402 = vld [vmem:[#allocation5 + $0x118] sm:$0xff]
    %v1403 = vld [vmem:[#allocation5 + $0x120] sm:$0xff]
    %v1404 = vld [vmem:[#allocation5 + $0x128] sm:$0xff]
    %v1405 = vld [vmem:[#allocation5 + $0x130] sm:$0xff]
    %v1406 = vld [vmem:[#allocation5 + $0x138] sm:$0xff]
    %v1407 = vld [vmem:[#allocation5 + $0x140] sm:$0xff]
    %v1408 = vld [vmem:[#allocation5 + $0x148] sm:$0xff]
    %v1409 = vld [vmem:[#allocation5 + $0x150] sm:$0xff]
    %v1410 = vld [vmem:[#allocation5 + $0x158] sm:$0xff]
    %v1411 = vld [vmem:[#allocation5 + $0x160] sm:$0xff]
    %v1412 = vld [vmem:[#allocation5 + $0x168] sm:$0xff]
    %v1413 = vld [vmem:[#allocation5 + $0x170] sm:$0xff]
    %v1414 = vld [vmem:[#allocation5 + $0x178] sm:$0xff]
    %v1415 = vld [vmem:[#allocation5 + $0x180] sm:$0xff]
    %v1416 = vld [vmem:[#allocation5 + $0x188] sm:$0xff]
    %v1417 = vld [vmem:[#allocation5 + $0x190] sm:$0xff]
    %v1418 = vld [vmem:[#allocation5 + $0x198] sm:$0xff]
    %v1419 = vld [vmem:[#allocation5 + $0x1a0] sm:$0xff]
    %v1420 = vld [vmem:[#allocation5 + $0x1a8] sm:$0xff]
    %v1421 = vld [vmem:[#allocation5 + $0x1b0] sm:$0xff]
    %v1422 = vld [vmem:[#allocation5 + $0x1b8] sm:$0xff]
    %v1423 = vld [vmem:[#allocation5 + $0x1c0] sm:$0xff]
    %v1424 = vld [vmem:[#allocation5 + $0x1c8] sm:$0xff]
    %v1425 = vld [vmem:[#allocation5 + $0x1d0] sm:$0xff]
    %v1426 = vld [vmem:[#allocation5 + $0x1d8] sm:$0xff]
    %v1427 = vld [vmem:[#allocation5 + $0x1e0] sm:$0xff]
    %v1428 = vld [vmem:[#allocation5 + $0x1e8] sm:$0xff]
    %v1429 = vld [vmem:[#allocation5 + $0x1f0] sm:$0xff]
    %v1430 = vld [vmem:[#allocation5 + $0x1f8] sm:$0xff]
    %v1431 = vld [vmem:[%s5] sm:$0xf]
    %v1433 = vperm.slane %v1431, 0
    %v1434 = vperm.slane %v1431, 1
    %v1435 = vperm.slane %v1431, 2
    %v1436 = vperm.slane %v1431, 3
    %v1505 = vunpack.c.l.b16 %v1367
    %v1506 = vunpack.c.h.b16 %v1367
    %v1507 = vunpack.c.l.b16 %v1368
    %v1508 = vunpack.c.h.b16 %v1368
    %v1509 = vunpack.c.l.b16 %v1369
    %v1510 = vunpack.c.h.b16 %v1369
    %v1511 = vunpack.c.l.b16 %v1370
    %v1512 = vunpack.c.h.b16 %v1370
    %v1513 = vunpack.c.l.b16 %v1371
    %v1514 = vunpack.c.h.b16 %v1371
    %v1515 = vunpack.c.l.b16 %v1372
    %v1516 = vunpack.c.h.b16 %v1372
    %v1517 = vunpack.c.l.b16 %v1373
    %v1518 = vunpack.c.h.b16 %v1373
    %v1519 = vunpack.c.l.b16 %v1374
    %v1520 = vunpack.c.h.b16 %v1374
    %v1521 = vunpack.c.l.b16 %v1375
    %v1522 = vunpack.c.h.b16 %v1375
    %v1523 = vunpack.c.l.b16 %v1376
    %v1524 = vunpack.c.h.b16 %v1376
    %v1525 = vunpack.c.l.b16 %v1377
    %v1526 = vunpack.c.h.b16 %v1377
    %v1527 = vunpack.c.l.b16 %v1378
    %v1528 = vunpack.c.h.b16 %v1378
    %v1529 = vunpack.c.l.b16 %v1379
    %v1530 = vunpack.c.h.b16 %v1379
    %v1531 = vunpack.c.l.b16 %v1380
    %v1532 = vunpack.c.h.b16 %v1380
    %v1533 = vunpack.c.l.b16 %v1381
    %v1534 = vunpack.c.h.b16 %v1381
    %v1535 = vunpack.c.l.b16 %v1382
    %v1536 = vunpack.c.h.b16 %v1382
    %v1537 = vunpack.c.l.b16 %v1383
    %v1538 = vunpack.c.h.b16 %v1383
    %v1539 = vunpack.c.l.b16 %v1384
    %v1540 = vunpack.c.h.b16 %v1384
    %v1541 = vunpack.c.l.b16 %v1385
    %v1542 = vunpack.c.h.b16 %v1385
    %v1543 = vunpack.c.l.b16 %v1386
    %v1544 = vunpack.c.h.b16 %v1386
    %v1545 = vunpack.c.l.b16 %v1387
    %v1546 = vunpack.c.h.b16 %v1387
    %v1547 = vunpack.c.l.b16 %v1388
    %v1548 = vunpack.c.h.b16 %v1388
    %v1549 = vunpack.c.l.b16 %v1389
    %v1550 = vunpack.c.h.b16 %v1389
    %v1551 = vunpack.c.l.b16 %v1390
    %v1552 = vunpack.c.h.b16 %v1390
    %v1553 = vunpack.c.l.b16 %v1391
    %v1554 = vunpack.c.h.b16 %v1391
    %v1555 = vunpack.c.l.b16 %v1392
    %v1556 = vunpack.c.h.b16 %v1392
    %v1557 = vunpack.c.l.b16 %v1393
    %v1558 = vunpack.c.h.b16 %v1393
    %v1559 = vunpack.c.l.b16 %v1394
    %v1560 = vunpack.c.h.b16 %v1394
    %v1561 = vunpack.c.l.b16 %v1395
    %v1562 = vunpack.c.h.b16 %v1395
    %v1563 = vunpack.c.l.b16 %v1396
    %v1564 = vunpack.c.h.b16 %v1396
    %v1565 = vunpack.c.l.b16 %v1397
    %v1566 = vunpack.c.h.b16 %v1397
    %v1567 = vunpack.c.l.b16 %v1398
    %v1568 = vunpack.c.h.b16 %v1398
    %v1569 = vunpack.c.l.b16 %v1399
    %v1570 = vunpack.c.h.b16 %v1399
    %v1571 = vunpack.c.l.b16 %v1400
    %v1572 = vunpack.c.h.b16 %v1400
    %v1573 = vunpack.c.l.b16 %v1401
    %v1574 = vunpack.c.h.b16 %v1401
    %v1575 = vunpack.c.l.b16 %v1402
    %v1576 = vunpack.c.h.b16 %v1402
    %v1577 = vunpack.c.l.b16 %v1403
    %v1578 = vunpack.c.h.b16 %v1403
    %v1579 = vunpack.c.l.b16 %v1404
    %v1580 = vunpack.c.h.b16 %v1404
    %v1581 = vunpack.c.l.b16 %v1405
    %v1582 = vunpack.c.h.b16 %v1405
    %v1583 = vunpack.c.l.b16 %v1406
    %v1584 = vunpack.c.h.b16 %v1406
    %v1585 = vunpack.c.l.b16 %v1407
    %v1586 = vunpack.c.h.b16 %v1407
    %v1587 = vunpack.c.l.b16 %v1408
    %v1588 = vunpack.c.h.b16 %v1408
    %v1589 = vunpack.c.l.b16 %v1409
    %v1590 = vunpack.c.h.b16 %v1409
    %v1591 = vunpack.c.l.b16 %v1410
    %v1592 = vunpack.c.h.b16 %v1410
    %v1593 = vunpack.c.l.b16 %v1411
    %v1594 = vunpack.c.h.b16 %v1411
    %v1595 = vunpack.c.l.b16 %v1412
    %v1596 = vunpack.c.h.b16 %v1412
    %v1597 = vunpack.c.l.b16 %v1413
    %v1598 = vunpack.c.h.b16 %v1413
    %v1599 = vunpack.c.l.b16 %v1414
    %v1600 = vunpack.c.h.b16 %v1414
    %v1601 = vunpack.c.l.b16 %v1415
    %v1602 = vunpack.c.h.b16 %v1415
    %v1603 = vunpack.c.l.b16 %v1416
    %v1604 = vunpack.c.h.b16 %v1416
    %v1605 = vunpack.c.l.b16 %v1417
    %v1606 = vunpack.c.h.b16 %v1417
    %v1607 = vunpack.c.l.b16 %v1418
    %v1608 = vunpack.c.h.b16 %v1418
    %v1609 = vunpack.c.l.b16 %v1419
    %v1610 = vunpack.c.h.b16 %v1419
    %v1611 = vunpack.c.l.b16 %v1420
    %v1612 = vunpack.c.h.b16 %v1420
    %v1613 = vunpack.c.l.b16 %v1421
    %v1614 = vunpack.c.h.b16 %v1421
    %v1615 = vunpack.c.l.b16 %v1422
    %v1616 = vunpack.c.h.b16 %v1422
    %v1617 = vunpack.c.l.b16 %v1423
    %v1618 = vunpack.c.h.b16 %v1423
    %v1619 = vunpack.c.l.b16 %v1424
    %v1620 = vunpack.c.h.b16 %v1424
    %v1621 = vunpack.c.l.b16 %v1425
    %v1622 = vunpack.c.h.b16 %v1425
    %v1623 = vunpack.c.l.b16 %v1426
    %v1624 = vunpack.c.h.b16 %v1426
    %v1625 = vunpack.c.l.b16 %v1427
    %v1626 = vunpack.c.h.b16 %v1427
    %v1627 = vunpack.c.l.b16 %v1428
    %v1628 = vunpack.c.h.b16 %v1428
    %v1629 = vunpack.c.l.b16 %v1429
    %v1630 = vunpack.c.h.b16 %v1429
    %v1631 = vunpack.c.l.b16 %v1430
    %v1632 = vunpack.c.h.b16 %v1430
    %v1633 = vpack.c.b16 %v1509, %v1505
    %v1634 = vpack.c.b16 %v1510, %v1506
    %v1635 = vpack.c.b16 %v1511, %v1507
    %v1636 = vpack.c.b16 %v1512, %v1508
    %v1637 = vpack.c.b16 %v1517, %v1513
    %v1638 = vpack.c.b16 %v1518, %v1514
    %v1639 = vpack.c.b16 %v1519, %v1515
    %v1640 = vpack.c.b16 %v1520, %v1516
    %v1641 = vpack.c.b16 %v1525, %v1521
    %v1642 = vpack.c.b16 %v1526, %v1522
    %v1643 = vpack.c.b16 %v1527, %v1523
    %v1644 = vpack.c.b16 %v1528, %v1524
    %v1645 = vpack.c.b16 %v1533, %v1529
    %v1646 = vpack.c.b16 %v1534, %v1530
    %v1647 = vpack.c.b16 %v1535, %v1531
    %v1648 = vpack.c.b16 %v1536, %v1532
    %v1649 = vpack.c.b16 %v1541, %v1537
    %v1650 = vpack.c.b16 %v1542, %v1538
    %v1651 = vpack.c.b16 %v1543, %v1539
    %v1652 = vpack.c.b16 %v1544, %v1540
    %v1653 = vpack.c.b16 %v1549, %v1545
    %v1654 = vpack.c.b16 %v1550, %v1546
    %v1655 = vpack.c.b16 %v1551, %v1547
    %v1656 = vpack.c.b16 %v1552, %v1548
    %v1657 = vpack.c.b16 %v1557, %v1553
    %v1658 = vpack.c.b16 %v1558, %v1554
    %v1659 = vpack.c.b16 %v1559, %v1555
    %v1660 = vpack.c.b16 %v1560, %v1556
    %v1661 = vpack.c.b16 %v1565, %v1561
    %v1662 = vpack.c.b16 %v1566, %v1562
    %v1663 = vpack.c.b16 %v1567, %v1563
    %v1664 = vpack.c.b16 %v1568, %v1564
    %v1665 = vpack.c.b16 %v1573, %v1569
    %v1666 = vpack.c.b16 %v1574, %v1570
    %v1667 = vpack.c.b16 %v1575, %v1571
    %v1668 = vpack.c.b16 %v1576, %v1572
    %v1669 = vpack.c.b16 %v1581, %v1577
    %v1670 = vpack.c.b16 %v1582, %v1578
    %v1671 = vpack.c.b16 %v1583, %v1579
    %v1672 = vpack.c.b16 %v1584, %v1580
    %v1673 = vpack.c.b16 %v1589, %v1585
    %v1674 = vpack.c.b16 %v1590, %v1586
    %v1675 = vpack.c.b16 %v1591, %v1587
    %v1676 = vpack.c.b16 %v1592, %v1588
    %v1677 = vpack.c.b16 %v1597, %v1593
    %v1678 = vpack.c.b16 %v1598, %v1594
    %v1679 = vpack.c.b16 %v1599, %v1595
    %v1680 = vpack.c.b16 %v1600, %v1596
    %v1681 = vpack.c.b16 %v1605, %v1601
    %v1682 = vpack.c.b16 %v1606, %v1602
    %v1683 = vpack.c.b16 %v1607, %v1603
    %v1684 = vpack.c.b16 %v1608, %v1604
    %v1685 = vpack.c.b16 %v1613, %v1609
    %v1686 = vpack.c.b16 %v1614, %v1610
    %v1687 = vpack.c.b16 %v1615, %v1611
    %v1688 = vpack.c.b16 %v1616, %v1612
    %v1689 = vpack.c.b16 %v1621, %v1617
    %v1690 = vpack.c.b16 %v1622, %v1618
    %v1691 = vpack.c.b16 %v1623, %v1619
    %v1692 = vpack.c.b16 %v1624, %v1620
    %v1693 = vpack.c.b16 %v1629, %v1625
    %v1694 = vpack.c.b16 %v1630, %v1626
    %v1695 = vpack.c.b16 %v1631, %v1627
    %v1696 = vpack.c.b16 %v1632, %v1628
    %1761 = vmatpush.bf16.msra.mxu0 %v1661
    %1762 = vmatpush.bf16.msra.mxu0 %v1657
    %1763 = vmatpush.bf16.msra.mxu0 %v1653
    %1764 = vmatpush.bf16.msra.mxu0 %v1649
    %1765 = vmatpush.bf16.msra.mxu0 %v1645
    %1766 = vmatpush.bf16.msra.mxu0 %v1641
    %1767 = vmatpush.bf16.msra.mxu0 %v1637
    %1768 = vmatpush.bf16.msra.mxu0 %v1633
    %1769 = vmatmul.bf16.gmra.mxu0 %v1113
    %v1770 = vpop.f32.mrf.mxu0
    %v1771 = vadd.f32 %v1433, %v1770
    %v1772 = vpop.f32.mrf.mxu0
    %1773 = vdwg.mxu0
    %1774 = vmatpush.bf16.msra.mxu0 %v1693
    %1775 = vmatpush.bf16.msra.mxu0 %v1689
    %1776 = vmatpush.bf16.msra.mxu0 %v1685
    %1777 = vmatpush.bf16.msra.mxu0 %v1681
    %1778 = vmatpush.bf16.msra.mxu0 %v1677
    %1779 = vmatpush.bf16.msra.mxu0 %v1673
    %1780 = vmatpush.bf16.msra.mxu0 %v1669
    %1781 = vmatpush.bf16.msra.mxu0 %v1665
    %1782 = vmatmul.bf16.gmra.mxu0 %v1114
    %v1783 = vpop.f32.mrf.mxu0
    %v1784 = vadd.f32 %v1771, %v1783
    %v1785 = vpop.f32.mrf.mxu0
    %1786 = vdwg.mxu0
    %1787 = vmatpush.bf16.msra.mxu0 %v1662
    %1788 = vmatpush.bf16.msra.mxu0 %v1658
    %1789 = vmatpush.bf16.msra.mxu0 %v1654
    %1790 = vmatpush.bf16.msra.mxu0 %v1650
    %1791 = vmatpush.bf16.msra.mxu0 %v1646
    %1792 = vmatpush.bf16.msra.mxu0 %v1642
    %1793 = vmatpush.bf16.msra.mxu0 %v1638
    %1794 = vmatpush.bf16.msra.mxu0 %v1634
    %1795 = vmatmul.bf16.gmra.mxu0 %v1113
    %v1796 = vpop.f32.mrf.mxu0
    %v1797 = vadd.f32 %v1434, %v1796
    %v1798 = vpop.f32.mrf.mxu0
    %1799 = vdwg.mxu0
    %1800 = vmatpush.bf16.msra.mxu0 %v1694
    %1801 = vmatpush.bf16.msra.mxu0 %v1690
    %1802 = vmatpush.bf16.msra.mxu0 %v1686
    %1803 = vmatpush.bf16.msra.mxu0 %v1682
    %1804 = vmatpush.bf16.msra.mxu0 %v1678
    %1805 = vmatpush.bf16.msra.mxu0 %v1674
    %1806 = vmatpush.bf16.msra.mxu0 %v1670
    %1807 = vmatpush.bf16.msra.mxu0 %v1666
    %1808 = vmatmul.bf16.gmra.mxu0 %v1114
    %v1809 = vpop.f32.mrf.mxu0
    %v1810 = vadd.f32 %v1797, %v1809
    %v1811 = vpop.f32.mrf.mxu0
    %1812 = vdwg.mxu0
    %1813 = vmatpush.bf16.msra.mxu0 %v1663
    %1814 = vmatpush.bf16.msra.mxu0 %v1659
    %1815 = vmatpush.bf16.msra.mxu0 %v1655
    %1816 = vmatpush.bf16.msra.mxu0 %v1651
    %1817 = vmatpush.bf16.msra.mxu0 %v1647
    %1818 = vmatpush.bf16.msra.mxu0 %v1643
    %1819 = vmatpush.bf16.msra.mxu0 %v1639
    %1820 = vmatpush.bf16.msra.mxu0 %v1635
    %1821 = vmatmul.bf16.gmra.mxu0 %v1113
    %v1822 = vpop.f32.mrf.mxu0
    %v1823 = vadd.f32 %v1435, %v1822
    %v1824 = vpop.f32.mrf.mxu0
    %1825 = vdwg.mxu0
    %1826 = vmatpush.bf16.msra.mxu0 %v1695
    %1827 = vmatpush.bf16.msra.mxu0 %v1691
    %1828 = vmatpush.bf16.msra.mxu0 %v1687
    %1829 = vmatpush.bf16.msra.mxu0 %v1683
    %1830 = vmatpush.bf16.msra.mxu0 %v1679
    %1831 = vmatpush.bf16.msra.mxu0 %v1675
    %1832 = vmatpush.bf16.msra.mxu0 %v1671
    %1833 = vmatpush.bf16.msra.mxu0 %v1667
    %1834 = vmatmul.bf16.gmra.mxu0 %v1114
    %v1835 = vpop.f32.mrf.mxu0
    %v1836 = vadd.f32 %v1823, %v1835
    %v1837 = vpop.f32.mrf.mxu0
    %1838 = vdwg.mxu0
    %1839 = vmatpush.bf16.msra.mxu0 %v1664
    %1840 = vmatpush.bf16.msra.mxu0 %v1660
    %1841 = vmatpush.bf16.msra.mxu0 %v1656
    %1842 = vmatpush.bf16.msra.mxu0 %v1652
    %1843 = vmatpush.bf16.msra.mxu0 %v1648
    %1844 = vmatpush.bf16.msra.mxu0 %v1644
    %1845 = vmatpush.bf16.msra.mxu0 %v1640
    %1846 = vmatpush.bf16.msra.mxu0 %v1636
    %1847 = vmatmul.bf16.gmra.mxu0 %v1113
    %v1848 = vpop.f32.mrf.mxu0
    %v1849 = vadd.f32 %v1436, %v1848
    %v1850 = vpop.f32.mrf.mxu0
    %1851 = vdwg.mxu0
    %1852 = vmatpush.bf16.msra.mxu0 %v1696
    %1853 = vmatpush.bf16.msra.mxu0 %v1692
    %1854 = vmatpush.bf16.msra.mxu0 %v1688
    %1855 = vmatpush.bf16.msra.mxu0 %v1684
    %1856 = vmatpush.bf16.msra.mxu0 %v1680
    %1857 = vmatpush.bf16.msra.mxu0 %v1676
    %1858 = vmatpush.bf16.msra.mxu0 %v1672
    %1859 = vmatpush.bf16.msra.mxu0 %v1668
    %1860 = vmatmul.bf16.gmra.mxu0 %v1114
    %v1861 = vpop.f32.mrf.mxu0
    %v1862 = vadd.f32 %v1849, %v1861
    %v1863 = vpop.f32.mrf.mxu0
    %1864 = vdwg.mxu0
    %v1865 = vmul.f32 %v1363, 0.5
    %v1866 = vmul.f32 %v1364, 0.5
    %v1867 = vmul.f32 %v1365, 0.5
    %v1868 = vtanh.pop %v1865
    %v1869 = vtanh.pop %v1866
    %v1870 = vtanh.pop %v1867
    %v1871 = vmul.f32 %v1868, 0.5
    %v1872 = vmul.f32 %v1869, 0.5
    %v1873 = vmul.f32 %v1870, 0.5
    %v1874 = vadd.f32 %v1871, 0.5
    %v1875 = vadd.f32 %v1872, 0.5
    %v1876 = vadd.f32 %v1873, 0.5
    %v1877 = vtanh.pop %v1366
    %v1878 = vmul.f32 %v1875, %v1091
    %v1879 = vmul.f32 %v1874, %v1877
    %v1880 = vadd.f32 %v1878, %v1879
    %v1881 = vtanh.pop %v1880
    %v1882 = vmul.f32 %v1876, %v1881
    %v1883 = vmul.f32 %v1784, 0.5
    %v1884 = vmul.f32 %v1810, 0.5
    %v1885 = vmul.f32 %v1836, 0.5
    %v1886 = vtanh.pop %v1883
    %v1887 = vtanh.pop %v1884
    %v1888 = vtanh.pop %v1885
    %v1889 = vmul.f32 %v1886, 0.5
    %v1890 = vmul.f32 %v1887, 0.5
    %v1891 = vmul.f32 %v1888, 0.5
    %v1892 = vadd.f32 %v1889, 0.5
    %v1893 = vadd.f32 %v1890, 0.5
    %v1894 = vadd.f32 %v1891, 0.5
    %v1895 = vtanh.pop %v1862
    %v1896 = vmul.f32 %v1893, %v1109
    %v1897 = vmul.f32 %v1892, %v1895
    %v1898 = vadd.f32 %v1896, %v1897
    %v1899 = vtanh.pop %v1898
    %v1900 = vmul.f32 %v1894, %v1899
    %s1901 = scalar_lea.vmem %s6, 8
    %1902 = vst [vmem:[%s1901] sm:$0xff] %v1900
    %v1903 = vpack.c.bf16 %v1882, %v1882
    %v1904 = vpack.c.bf16 %v1900, %v1900
    %v1905 = vld [vmem:[#allocation2 + $0x60] sm:$0xff]
    %v1906 = vld [vmem:[#allocation2 + $0x68] sm:$0xff]
    %v1907 = vld [vmem:[#allocation2 + $0x70] sm:$0xff]
    %v1908 = vld [vmem:[#allocation2 + $0x78] sm:$0xff]
    %v1909 = vld [vmem:[#allocation3] sm:$0xff]
    %v1910 = vld [vmem:[#allocation3 + $0x8] sm:$0xff]
    %v1911 = vld [vmem:[#allocation3 + $0x10] sm:$0xff]
    %v1912 = vld [vmem:[#allocation3 + $0x18] sm:$0xff]
    %v1913 = vld [vmem:[#allocation3 + $0x20] sm:$0xff]
    %v1914 = vld [vmem:[#allocation3 + $0x28] sm:$0xff]
    %v1915 = vld [vmem:[#allocation3 + $0x30] sm:$0xff]
    %v1916 = vld [vmem:[#allocation3 + $0x38] sm:$0xff]
    %v1917 = vld [vmem:[#allocation3 + $0x40] sm:$0xff]
    %v1918 = vld [vmem:[#allocation3 + $0x48] sm:$0xff]
    %v1919 = vld [vmem:[#allocation3 + $0x50] sm:$0xff]
    %v1920 = vld [vmem:[#allocation3 + $0x58] sm:$0xff]
    %v1921 = vld [vmem:[#allocation3 + $0x60] sm:$0xff]
    %v1922 = vld [vmem:[#allocation3 + $0x68] sm:$0xff]
    %v1923 = vld [vmem:[#allocation3 + $0x70] sm:$0xff]
    %v1924 = vld [vmem:[#allocation3 + $0x78] sm:$0xff]
    %v1925 = vld [vmem:[#allocation3 + $0x80] sm:$0xff]
    %v1926 = vld [vmem:[#allocation3 + $0x88] sm:$0xff]
    %v1927 = vld [vmem:[#allocation3 + $0x90] sm:$0xff]
    %v1928 = vld [vmem:[#allocation3 + $0x98] sm:$0xff]
    %v1929 = vld [vmem:[#allocation3 + $0xa0] sm:$0xff]
    %v1930 = vld [vmem:[#allocation3 + $0xa8] sm:$0xff]
    %v1931 = vld [vmem:[#allocation3 + $0xb0] sm:$0xff]
    %v1932 = vld [vmem:[#allocation3 + $0xb8] sm:$0xff]
    %v1933 = vld [vmem:[#allocation3 + $0xc0] sm:$0xff]
    %v1934 = vld [vmem:[#allocation3 + $0xc8] sm:$0xff]
    %v1935 = vld [vmem:[#allocation3 + $0xd0] sm:$0xff]
    %v1936 = vld [vmem:[#allocation3 + $0xd8] sm:$0xff]
    %v1937 = vld [vmem:[#allocation3 + $0xe0] sm:$0xff]
    %v1938 = vld [vmem:[#allocation3 + $0xe8] sm:$0xff]
    %v1939 = vld [vmem:[#allocation3 + $0xf0] sm:$0xff]
    %v1940 = vld [vmem:[#allocation3 + $0xf8] sm:$0xff]
    %v1973 = vunpack.c.l.b16 %v1909
    %v1974 = vunpack.c.h.b16 %v1909
    %v1975 = vunpack.c.l.b16 %v1910
    %v1976 = vunpack.c.h.b16 %v1910
    %v1977 = vunpack.c.l.b16 %v1911
    %v1978 = vunpack.c.h.b16 %v1911
    %v1979 = vunpack.c.l.b16 %v1912
    %v1980 = vunpack.c.h.b16 %v1912
    %v1981 = vunpack.c.l.b16 %v1913
    %v1982 = vunpack.c.h.b16 %v1913
    %v1983 = vunpack.c.l.b16 %v1914
    %v1984 = vunpack.c.h.b16 %v1914
    %v1985 = vunpack.c.l.b16 %v1915
    %v1986 = vunpack.c.h.b16 %v1915
    %v1987 = vunpack.c.l.b16 %v1916
    %v1988 = vunpack.c.h.b16 %v1916
    %v1989 = vunpack.c.l.b16 %v1917
    %v1990 = vunpack.c.h.b16 %v1917
    %v1991 = vunpack.c.l.b16 %v1918
    %v1992 = vunpack.c.h.b16 %v1918
    %v1993 = vunpack.c.l.b16 %v1919
    %v1994 = vunpack.c.h.b16 %v1919
    %v1995 = vunpack.c.l.b16 %v1920
    %v1996 = vunpack.c.h.b16 %v1920
    %v1997 = vunpack.c.l.b16 %v1921
    %v1998 = vunpack.c.h.b16 %v1921
    %v1999 = vunpack.c.l.b16 %v1922
    %v2000 = vunpack.c.h.b16 %v1922
    %v2001 = vunpack.c.l.b16 %v1923
    %v2002 = vunpack.c.h.b16 %v1923
    %v2003 = vunpack.c.l.b16 %v1924
    %v2004 = vunpack.c.h.b16 %v1924
    %v2005 = vunpack.c.l.b16 %v1925
    %v2006 = vunpack.c.h.b16 %v1925
    %v2007 = vunpack.c.l.b16 %v1926
    %v2008 = vunpack.c.h.b16 %v1926
    %v2009 = vunpack.c.l.b16 %v1927
    %v2010 = vunpack.c.h.b16 %v1927
    %v2011 = vunpack.c.l.b16 %v1928
    %v2012 = vunpack.c.h.b16 %v1928
    %v2013 = vunpack.c.l.b16 %v1929
    %v2014 = vunpack.c.h.b16 %v1929
    %v2015 = vunpack.c.l.b16 %v1930
    %v2016 = vunpack.c.h.b16 %v1930
    %v2017 = vunpack.c.l.b16 %v1931
    %v2018 = vunpack.c.h.b16 %v1931
    %v2019 = vunpack.c.l.b16 %v1932
    %v2020 = vunpack.c.h.b16 %v1932
    %v2021 = vunpack.c.l.b16 %v1933
    %v2022 = vunpack.c.h.b16 %v1933
    %v2023 = vunpack.c.l.b16 %v1934
    %v2024 = vunpack.c.h.b16 %v1934
    %v2025 = vunpack.c.l.b16 %v1935
    %v2026 = vunpack.c.h.b16 %v1935
    %v2027 = vunpack.c.l.b16 %v1936
    %v2028 = vunpack.c.h.b16 %v1936
    %v2029 = vunpack.c.l.b16 %v1937
    %v2030 = vunpack.c.h.b16 %v1937
    %v2031 = vunpack.c.l.b16 %v1938
    %v2032 = vunpack.c.h.b16 %v1938
    %v2033 = vunpack.c.l.b16 %v1939
    %v2034 = vunpack.c.h.b16 %v1939
    %v2035 = vunpack.c.l.b16 %v1940
    %v2036 = vunpack.c.h.b16 %v1940
    %v2037 = vpack.c.b16 %v1977, %v1973
    %v2038 = vpack.c.b16 %v1978, %v1974
    %v2039 = vpack.c.b16 %v1979, %v1975
    %v2040 = vpack.c.b16 %v1980, %v1976
    %v2041 = vpack.c.b16 %v1985, %v1981
    %v2042 = vpack.c.b16 %v1986, %v1982
    %v2043 = vpack.c.b16 %v1987, %v1983
    %v2044 = vpack.c.b16 %v1988, %v1984
    %v2045 = vpack.c.b16 %v1993, %v1989
    %v2046 = vpack.c.b16 %v1994, %v1990
    %v2047 = vpack.c.b16 %v1995, %v1991
    %v2048 = vpack.c.b16 %v1996, %v1992
    %v2049 = vpack.c.b16 %v2001, %v1997
    %v2050 = vpack.c.b16 %v2002, %v1998
    %v2051 = vpack.c.b16 %v2003, %v1999
    %v2052 = vpack.c.b16 %v2004, %v2000
    %v2053 = vpack.c.b16 %v2009, %v2005
    %v2054 = vpack.c.b16 %v2010, %v2006
    %v2055 = vpack.c.b16 %v2011, %v2007
    %v2056 = vpack.c.b16 %v2012, %v2008
    %v2057 = vpack.c.b16 %v2017, %v2013
    %v2058 = vpack.c.b16 %v2018, %v2014
    %v2059 = vpack.c.b16 %v2019, %v2015
    %v2060 = vpack.c.b16 %v2020, %v2016
    %v2061 = vpack.c.b16 %v2025, %v2021
    %v2062 = vpack.c.b16 %v2026, %v2022
    %v2063 = vpack.c.b16 %v2027, %v2023
    %v2064 = vpack.c.b16 %v2028, %v2024
    %v2065 = vpack.c.b16 %v2033, %v2029
    %v2066 = vpack.c.b16 %v2034, %v2030
    %v2067 = vpack.c.b16 %v2035, %v2031
    %v2068 = vpack.c.b16 %v2036, %v2032
    %2101 = vmatpush.bf16.msra.mxu0 %v2065
    %2102 = vmatpush.bf16.msra.mxu0 %v2061
    %2103 = vmatpush.bf16.msra.mxu0 %v2057
    %2104 = vmatpush.bf16.msra.mxu0 %v2053
    %2105 = vmatpush.bf16.msra.mxu0 %v2049
    %2106 = vmatpush.bf16.msra.mxu0 %v2045
    %2107 = vmatpush.bf16.msra.mxu0 %v2041
    %2108 = vmatpush.bf16.msra.mxu0 %v2037
    %2109 = vmatmul.bf16.gmra.mxu0 %v1903
    %v2110 = vpop.f32.mrf.mxu0
    %v2111 = vadd.f32 0.0, %v2110
    %v2112 = vpop.f32.mrf.mxu0
    %2113 = vdwg.mxu0
    %2114 = vmatpush.bf16.msra.mxu0 %v2066
    %2115 = vmatpush.bf16.msra.mxu0 %v2062
    %2116 = vmatpush.bf16.msra.mxu0 %v2058
    %2117 = vmatpush.bf16.msra.mxu0 %v2054
    %2118 = vmatpush.bf16.msra.mxu0 %v2050
    %2119 = vmatpush.bf16.msra.mxu0 %v2046
    %2120 = vmatpush.bf16.msra.mxu0 %v2042
    %2121 = vmatpush.bf16.msra.mxu0 %v2038
    %2122 = vmatmul.bf16.gmra.mxu0 %v1903
    %v2123 = vpop.f32.mrf.mxu0
    %v2124 = vadd.f32 0.0, %v2123
    %v2125 = vpop.f32.mrf.mxu0
    %2126 = vdwg.mxu0
    %2127 = vmatpush.bf16.msra.mxu0 %v2067
    %2128 = vmatpush.bf16.msra.mxu0 %v2063
    %2129 = vmatpush.bf16.msra.mxu0 %v2059
    %2130 = vmatpush.bf16.msra.mxu0 %v2055
    %2131 = vmatpush.bf16.msra.mxu0 %v2051
    %2132 = vmatpush.bf16.msra.mxu0 %v2047
    %2133 = vmatpush.bf16.msra.mxu0 %v2043
    %2134 = vmatpush.bf16.msra.mxu0 %v2039
    %2135 = vmatmul.bf16.gmra.mxu0 %v1903
    %v2136 = vpop.f32.mrf.mxu0
    %v2137 = vadd.f32 0.0, %v2136
    %v2138 = vpop.f32.mrf.mxu0
    %2139 = vdwg.mxu0
    %2140 = vmatpush.bf16.msra.mxu0 %v2068
    %2141 = vmatpush.bf16.msra.mxu0 %v2064
    %2142 = vmatpush.bf16.msra.mxu0 %v2060
    %2143 = vmatpush.bf16.msra.mxu0 %v2056
    %2144 = vmatpush.bf16.msra.mxu0 %v2052
    %2145 = vmatpush.bf16.msra.mxu0 %v2048
    %2146 = vmatpush.bf16.msra.mxu0 %v2044
    %2147 = vmatpush.bf16.msra.mxu0 %v2040
    %2148 = vmatmul.bf16.gmra.mxu0 %v1903
    %v2149 = vpop.f32.mrf.mxu0
    %v2150 = vadd.f32 0.0, %v2149
    %v2151 = vpop.f32.mrf.mxu0
    %2152 = vdwg.mxu0
    %v2153 = vadd.f32 %v1905, %v2111
    %v2154 = vadd.f32 %v1906, %v2124
    %v2155 = vadd.f32 %v1907, %v2137
    %v2156 = vadd.f32 %v1908, %v2150
    %v2157 = vld [vmem:[#allocation5] sm:$0xff]
    %v2158 = vld [vmem:[#allocation5 + $0x8] sm:$0xff]
    %v2159 = vld [vmem:[#allocation5 + $0x10] sm:$0xff]
    %v2160 = vld [vmem:[#allocation5 + $0x18] sm:$0xff]
    %v2161 = vld [vmem:[#allocation5 + $0x20] sm:$0xff]
    %v2162 = vld [vmem:[#allocation5 + $0x28] sm:$0xff]
    %v2163 = vld [vmem:[#allocation5 + $0x30] sm:$0xff]
    %v2164 = vld [vmem:[#allocation5 + $0x38] sm:$0xff]
    %v2165 = vld [vmem:[#allocation5 + $0x40] sm:$0xff]
    %v2166 = vld [vmem:[#allocation5 + $0x48] sm:$0xff]
    %v2167 = vld [vmem:[#allocation5 + $0x50] sm:$0xff]
    %v2168 = vld [vmem:[#allocation5 + $0x58] sm:$0xff]
    %v2169 = vld [vmem:[#allocation5 + $0x60] sm:$0xff]
    %v2170 = vld [vmem:[#allocation5 + $0x68] sm:$0xff]
    %v2171 = vld [vmem:[#allocation5 + $0x70] sm:$0xff]
    %v2172 = vld [vmem:[#allocation5 + $0x78] sm:$0xff]
    %v2173 = vld [vmem:[#allocation5 + $0x80] sm:$0xff]
    %v2174 = vld [vmem:[#allocation5 + $0x88] sm:$0xff]
    %v2175 = vld [vmem:[#allocation5 + $0x90] sm:$0xff]
    %v2176 = vld [vmem:[#allocation5 + $0x98] sm:$0xff]
    %v2177 = vld [vmem:[#allocation5 + $0xa0] sm:$0xff]
    %v2178 = vld [vmem:[#allocation5 + $0xa8] sm:$0xff]
    %v2179 = vld [vmem:[#allocation5 + $0xb0] sm:$0xff]
    %v2180 = vld [vmem:[#allocation5 + $0xb8] sm:$0xff]
    %v2181 = vld [vmem:[#allocation5 + $0xc0] sm:$0xff]
    %v2182 = vld [vmem:[#allocation5 + $0xc8] sm:$0xff]
    %v2183 = vld [vmem:[#allocation5 + $0xd0] sm:$0xff]
    %v2184 = vld [vmem:[#allocation5 + $0xd8] sm:$0xff]
    %v2185 = vld [vmem:[#allocation5 + $0xe0] sm:$0xff]
    %v2186 = vld [vmem:[#allocation5 + $0xe8] sm:$0xff]
    %v2187 = vld [vmem:[#allocation5 + $0xf0] sm:$0xff]
    %v2188 = vld [vmem:[#allocation5 + $0xf8] sm:$0xff]
    %v2189 = vld [vmem:[#allocation5 + $0x100] sm:$0xff]
    %v2190 = vld [vmem:[#allocation5 + $0x108] sm:$0xff]
    %v2191 = vld [vmem:[#allocation5 + $0x110] sm:$0xff]
    %v2192 = vld [vmem:[#allocation5 + $0x118] sm:$0xff]
    %v2193 = vld [vmem:[#allocation5 + $0x120] sm:$0xff]
    %v2194 = vld [vmem:[#allocation5 + $0x128] sm:$0xff]
    %v2195 = vld [vmem:[#allocation5 + $0x130] sm:$0xff]
    %v2196 = vld [vmem:[#allocation5 + $0x138] sm:$0xff]
    %v2197 = vld [vmem:[#allocation5 + $0x140] sm:$0xff]
    %v2198 = vld [vmem:[#allocation5 + $0x148] sm:$0xff]
    %v2199 = vld [vmem:[#allocation5 + $0x150] sm:$0xff]
    %v2200 = vld [vmem:[#allocation5 + $0x158] sm:$0xff]
    %v2201 = vld [vmem:[#allocation5 + $0x160] sm:$0xff]
    %v2202 = vld [vmem:[#allocation5 + $0x168] sm:$0xff]
    %v2203 = vld [vmem:[#allocation5 + $0x170] sm:$0xff]
    %v2204 = vld [vmem:[#allocation5 + $0x178] sm:$0xff]
    %v2205 = vld [vmem:[#allocation5 + $0x180] sm:$0xff]
    %v2206 = vld [vmem:[#allocation5 + $0x188] sm:$0xff]
    %v2207 = vld [vmem:[#allocation5 + $0x190] sm:$0xff]
    %v2208 = vld [vmem:[#allocation5 + $0x198] sm:$0xff]
    %v2209 = vld [vmem:[#allocation5 + $0x1a0] sm:$0xff]
    %v2210 = vld [vmem:[#allocation5 + $0x1a8] sm:$0xff]
    %v2211 = vld [vmem:[#allocation5 + $0x1b0] sm:$0xff]
    %v2212 = vld [vmem:[#allocation5 + $0x1b8] sm:$0xff]
    %v2213 = vld [vmem:[#allocation5 + $0x1c0] sm:$0xff]
    %v2214 = vld [vmem:[#allocation5 + $0x1c8] sm:$0xff]
    %v2215 = vld [vmem:[#allocation5 + $0x1d0] sm:$0xff]
    %v2216 = vld [vmem:[#allocation5 + $0x1d8] sm:$0xff]
    %v2217 = vld [vmem:[#allocation5 + $0x1e0] sm:$0xff]
    %v2218 = vld [vmem:[#allocation5 + $0x1e8] sm:$0xff]
    %v2219 = vld [vmem:[#allocation5 + $0x1f0] sm:$0xff]
    %v2220 = vld [vmem:[#allocation5 + $0x1f8] sm:$0xff]
    %v2221 = vld [vmem:[%s5] sm:$0xf]
    %v2223 = vperm.slane %v2221, 0
    %v2224 = vperm.slane %v2221, 1
    %v2225 = vperm.slane %v2221, 2
    %v2226 = vperm.slane %v2221, 3
    %v2295 = vunpack.c.l.b16 %v2157
    %v2296 = vunpack.c.h.b16 %v2157
    %v2297 = vunpack.c.l.b16 %v2158
    %v2298 = vunpack.c.h.b16 %v2158
    %v2299 = vunpack.c.l.b16 %v2159
    %v2300 = vunpack.c.h.b16 %v2159
    %v2301 = vunpack.c.l.b16 %v2160
    %v2302 = vunpack.c.h.b16 %v2160
    %v2303 = vunpack.c.l.b16 %v2161
    %v2304 = vunpack.c.h.b16 %v2161
    %v2305 = vunpack.c.l.b16 %v2162
    %v2306 = vunpack.c.h.b16 %v2162
    %v2307 = vunpack.c.l.b16 %v2163
    %v2308 = vunpack.c.h.b16 %v2163
    %v2309 = vunpack.c.l.b16 %v2164
    %v2310 = vunpack.c.h.b16 %v2164
    %v2311 = vunpack.c.l.b16 %v2165
    %v2312 = vunpack.c.h.b16 %v2165
    %v2313 = vunpack.c.l.b16 %v2166
    %v2314 = vunpack.c.h.b16 %v2166
    %v2315 = vunpack.c.l.b16 %v2167
    %v2316 = vunpack.c.h.b16 %v2167
    %v2317 = vunpack.c.l.b16 %v2168
    %v2318 = vunpack.c.h.b16 %v2168
    %v2319 = vunpack.c.l.b16 %v2169
    %v2320 = vunpack.c.h.b16 %v2169
    %v2321 = vunpack.c.l.b16 %v2170
    %v2322 = vunpack.c.h.b16 %v2170
    %v2323 = vunpack.c.l.b16 %v2171
    %v2324 = vunpack.c.h.b16 %v2171
    %v2325 = vunpack.c.l.b16 %v2172
    %v2326 = vunpack.c.h.b16 %v2172
    %v2327 = vunpack.c.l.b16 %v2173
    %v2328 = vunpack.c.h.b16 %v2173
    %v2329 = vunpack.c.l.b16 %v2174
    %v2330 = vunpack.c.h.b16 %v2174
    %v2331 = vunpack.c.l.b16 %v2175
    %v2332 = vunpack.c.h.b16 %v2175
    %v2333 = vunpack.c.l.b16 %v2176
    %v2334 = vunpack.c.h.b16 %v2176
    %v2335 = vunpack.c.l.b16 %v2177
    %v2336 = vunpack.c.h.b16 %v2177
    %v2337 = vunpack.c.l.b16 %v2178
    %v2338 = vunpack.c.h.b16 %v2178
    %v2339 = vunpack.c.l.b16 %v2179
    %v2340 = vunpack.c.h.b16 %v2179
    %v2341 = vunpack.c.l.b16 %v2180
    %v2342 = vunpack.c.h.b16 %v2180
    %v2343 = vunpack.c.l.b16 %v2181
    %v2344 = vunpack.c.h.b16 %v2181
    %v2345 = vunpack.c.l.b16 %v2182
    %v2346 = vunpack.c.h.b16 %v2182
    %v2347 = vunpack.c.l.b16 %v2183
    %v2348 = vunpack.c.h.b16 %v2183
    %v2349 = vunpack.c.l.b16 %v2184
    %v2350 = vunpack.c.h.b16 %v2184
    %v2351 = vunpack.c.l.b16 %v2185
    %v2352 = vunpack.c.h.b16 %v2185
    %v2353 = vunpack.c.l.b16 %v2186
    %v2354 = vunpack.c.h.b16 %v2186
    %v2355 = vunpack.c.l.b16 %v2187
    %v2356 = vunpack.c.h.b16 %v2187
    %v2357 = vunpack.c.l.b16 %v2188
    %v2358 = vunpack.c.h.b16 %v2188
    %v2359 = vunpack.c.l.b16 %v2189
    %v2360 = vunpack.c.h.b16 %v2189
    %v2361 = vunpack.c.l.b16 %v2190
    %v2362 = vunpack.c.h.b16 %v2190
    %v2363 = vunpack.c.l.b16 %v2191
    %v2364 = vunpack.c.h.b16 %v2191
    %v2365 = vunpack.c.l.b16 %v2192
    %v2366 = vunpack.c.h.b16 %v2192
    %v2367 = vunpack.c.l.b16 %v2193
    %v2368 = vunpack.c.h.b16 %v2193
    %v2369 = vunpack.c.l.b16 %v2194
    %v2370 = vunpack.c.h.b16 %v2194
    %v2371 = vunpack.c.l.b16 %v2195
    %v2372 = vunpack.c.h.b16 %v2195
    %v2373 = vunpack.c.l.b16 %v2196
    %v2374 = vunpack.c.h.b16 %v2196
    %v2375 = vunpack.c.l.b16 %v2197
    %v2376 = vunpack.c.h.b16 %v2197
    %v2377 = vunpack.c.l.b16 %v2198
    %v2378 = vunpack.c.h.b16 %v2198
    %v2379 = vunpack.c.l.b16 %v2199
    %v2380 = vunpack.c.h.b16 %v2199
    %v2381 = vunpack.c.l.b16 %v2200
    %v2382 = vunpack.c.h.b16 %v2200
    %v2383 = vunpack.c.l.b16 %v2201
    %v2384 = vunpack.c.h.b16 %v2201
    %v2385 = vunpack.c.l.b16 %v2202
    %v2386 = vunpack.c.h.b16 %v2202
    %v2387 = vunpack.c.l.b16 %v2203
    %v2388 = vunpack.c.h.b16 %v2203
    %v2389 = vunpack.c.l.b16 %v2204
    %v2390 = vunpack.c.h.b16 %v2204
    %v2391 = vunpack.c.l.b16 %v2205
    %v2392 = vunpack.c.h.b16 %v2205
    %v2393 = vunpack.c.l.b16 %v2206
    %v2394 = vunpack.c.h.b16 %v2206
    %v2395 = vunpack.c.l.b16 %v2207
    %v2396 = vunpack.c.h.b16 %v2207
    %v2397 = vunpack.c.l.b16 %v2208
    %v2398 = vunpack.c.h.b16 %v2208
    %v2399 = vunpack.c.l.b16 %v2209
    %v2400 = vunpack.c.h.b16 %v2209
    %v2401 = vunpack.c.l.b16 %v2210
    %v2402 = vunpack.c.h.b16 %v2210
    %v2403 = vunpack.c.l.b16 %v2211
    %v2404 = vunpack.c.h.b16 %v2211
    %v2405 = vunpack.c.l.b16 %v2212
    %v2406 = vunpack.c.h.b16 %v2212
    %v2407 = vunpack.c.l.b16 %v2213
    %v2408 = vunpack.c.h.b16 %v2213
    %v2409 = vunpack.c.l.b16 %v2214
    %v2410 = vunpack.c.h.b16 %v2214
    %v2411 = vunpack.c.l.b16 %v2215
    %v2412 = vunpack.c.h.b16 %v2215
    %v2413 = vunpack.c.l.b16 %v2216
    %v2414 = vunpack.c.h.b16 %v2216
    %v2415 = vunpack.c.l.b16 %v2217
    %v2416 = vunpack.c.h.b16 %v2217
    %v2417 = vunpack.c.l.b16 %v2218
    %v2418 = vunpack.c.h.b16 %v2218
    %v2419 = vunpack.c.l.b16 %v2219
    %v2420 = vunpack.c.h.b16 %v2219
    %v2421 = vunpack.c.l.b16 %v2220
    %v2422 = vunpack.c.h.b16 %v2220
    %v2423 = vpack.c.b16 %v2299, %v2295
    %v2424 = vpack.c.b16 %v2300, %v2296
    %v2425 = vpack.c.b16 %v2301, %v2297
    %v2426 = vpack.c.b16 %v2302, %v2298
    %v2427 = vpack.c.b16 %v2307, %v2303
    %v2428 = vpack.c.b16 %v2308, %v2304
    %v2429 = vpack.c.b16 %v2309, %v2305
    %v2430 = vpack.c.b16 %v2310, %v2306
    %v2431 = vpack.c.b16 %v2315, %v2311
    %v2432 = vpack.c.b16 %v2316, %v2312
    %v2433 = vpack.c.b16 %v2317, %v2313
    %v2434 = vpack.c.b16 %v2318, %v2314
    %v2435 = vpack.c.b16 %v2323, %v2319
    %v2436 = vpack.c.b16 %v2324, %v2320
    %v2437 = vpack.c.b16 %v2325, %v2321
    %v2438 = vpack.c.b16 %v2326, %v2322
    %v2439 = vpack.c.b16 %v2331, %v2327
    %v2440 = vpack.c.b16 %v2332, %v2328
    %v2441 = vpack.c.b16 %v2333, %v2329
    %v2442 = vpack.c.b16 %v2334, %v2330
    %v2443 = vpack.c.b16 %v2339, %v2335
    %v2444 = vpack.c.b16 %v2340, %v2336
    %v2445 = vpack.c.b16 %v2341, %v2337
    %v2446 = vpack.c.b16 %v2342, %v2338
    %v2447 = vpack.c.b16 %v2347, %v2343
    %v2448 = vpack.c.b16 %v2348, %v2344
    %v2449 = vpack.c.b16 %v2349, %v2345
    %v2450 = vpack.c.b16 %v2350, %v2346
    %v2451 = vpack.c.b16 %v2355, %v2351
    %v2452 = vpack.c.b16 %v2356, %v2352
    %v2453 = vpack.c.b16 %v2357, %v2353
    %v2454 = vpack.c.b16 %v2358, %v2354
    %v2455 = vpack.c.b16 %v2363, %v2359
    %v2456 = vpack.c.b16 %v2364, %v2360
    %v2457 = vpack.c.b16 %v2365, %v2361
    %v2458 = vpack.c.b16 %v2366, %v2362
    %v2459 = vpack.c.b16 %v2371, %v2367
    %v2460 = vpack.c.b16 %v2372, %v2368
    %v2461 = vpack.c.b16 %v2373, %v2369
    %v2462 = vpack.c.b16 %v2374, %v2370
    %v2463 = vpack.c.b16 %v2379, %v2375
    %v2464 = vpack.c.b16 %v2380, %v2376
    %v2465 = vpack.c.b16 %v2381, %v2377
    %v2466 = vpack.c.b16 %v2382, %v2378
    %v2467 = vpack.c.b16 %v2387, %v2383
    %v2468 = vpack.c.b16 %v2388, %v2384
    %v2469 = vpack.c.b16 %v2389, %v2385
    %v2470 = vpack.c.b16 %v2390, %v2386
    %v2471 = vpack.c.b16 %v2395, %v2391
    %v2472 = vpack.c.b16 %v2396, %v2392
    %v2473 = vpack.c.b16 %v2397, %v2393
    %v2474 = vpack.c.b16 %v2398, %v2394
    %v2475 = vpack.c.b16 %v2403, %v2399
    %v2476 = vpack.c.b16 %v2404, %v2400
    %v2477 = vpack.c.b16 %v2405, %v2401
    %v2478 = vpack.c.b16 %v2406, %v2402
    %v2479 = vpack.c.b16 %v2411, %v2407
    %v2480 = vpack.c.b16 %v2412, %v2408
    %v2481 = vpack.c.b16 %v2413, %v2409
    %v2482 = vpack.c.b16 %v2414, %v2410
    %v2483 = vpack.c.b16 %v2419, %v2415
    %v2484 = vpack.c.b16 %v2420, %v2416
    %v2485 = vpack.c.b16 %v2421, %v2417
    %v2486 = vpack.c.b16 %v2422, %v2418
    %2551 = vmatpush.bf16.msra.mxu0 %v2451
    %2552 = vmatpush.bf16.msra.mxu0 %v2447
    %2553 = vmatpush.bf16.msra.mxu0 %v2443
    %2554 = vmatpush.bf16.msra.mxu0 %v2439
    %2555 = vmatpush.bf16.msra.mxu0 %v2435
    %2556 = vmatpush.bf16.msra.mxu0 %v2431
    %2557 = vmatpush.bf16.msra.mxu0 %v2427
    %2558 = vmatpush.bf16.msra.mxu0 %v2423
    %2559 = vmatmul.bf16.gmra.mxu0 %v1903
    %v2560 = vpop.f32.mrf.mxu0
    %v2561 = vadd.f32 %v2223, %v2560
    %v2562 = vpop.f32.mrf.mxu0
    %2563 = vdwg.mxu0
    %2564 = vmatpush.bf16.msra.mxu0 %v2483
    %2565 = vmatpush.bf16.msra.mxu0 %v2479
    %2566 = vmatpush.bf16.msra.mxu0 %v2475
    %2567 = vmatpush.bf16.msra.mxu0 %v2471
    %2568 = vmatpush.bf16.msra.mxu0 %v2467
    %2569 = vmatpush.bf16.msra.mxu0 %v2463
    %2570 = vmatpush.bf16.msra.mxu0 %v2459
    %2571 = vmatpush.bf16.msra.mxu0 %v2455
    %2572 = vmatmul.bf16.gmra.mxu0 %v1904
    %v2573 = vpop.f32.mrf.mxu0
    %v2574 = vadd.f32 %v2561, %v2573
    %v2575 = vpop.f32.mrf.mxu0
    %2576 = vdwg.mxu0
    %2577 = vmatpush.bf16.msra.mxu0 %v2452
    %2578 = vmatpush.bf16.msra.mxu0 %v2448
    %2579 = vmatpush.bf16.msra.mxu0 %v2444
    %2580 = vmatpush.bf16.msra.mxu0 %v2440
    %2581 = vmatpush.bf16.msra.mxu0 %v2436
    %2582 = vmatpush.bf16.msra.mxu0 %v2432
    %2583 = vmatpush.bf16.msra.mxu0 %v2428
    %2584 = vmatpush.bf16.msra.mxu0 %v2424
    %2585 = vmatmul.bf16.gmra.mxu0 %v1903
    %v2586 = vpop.f32.mrf.mxu0
    %v2587 = vadd.f32 %v2224, %v2586
    %v2588 = vpop.f32.mrf.mxu0
    %2589 = vdwg.mxu0
    %2590 = vmatpush.bf16.msra.mxu0 %v2484
    %2591 = vmatpush.bf16.msra.mxu0 %v2480
    %2592 = vmatpush.bf16.msra.mxu0 %v2476
    %2593 = vmatpush.bf16.msra.mxu0 %v2472
    %2594 = vmatpush.bf16.msra.mxu0 %v2468
    %2595 = vmatpush.bf16.msra.mxu0 %v2464
    %2596 = vmatpush.bf16.msra.mxu0 %v2460
    %2597 = vmatpush.bf16.msra.mxu0 %v2456
    %2598 = vmatmul.bf16.gmra.mxu0 %v1904
    %v2599 = vpop.f32.mrf.mxu0
    %v2600 = vadd.f32 %v2587, %v2599
    %v2601 = vpop.f32.mrf.mxu0
    %2602 = vdwg.mxu0
    %2603 = vmatpush.bf16.msra.mxu0 %v2453
    %2604 = vmatpush.bf16.msra.mxu0 %v2449
    %2605 = vmatpush.bf16.msra.mxu0 %v2445
    %2606 = vmatpush.bf16.msra.mxu0 %v2441
    %2607 = vmatpush.bf16.msra.mxu0 %v2437
    %2608 = vmatpush.bf16.msra.mxu0 %v2433
    %2609 = vmatpush.bf16.msra.mxu0 %v2429
    %2610 = vmatpush.bf16.msra.mxu0 %v2425
    %2611 = vmatmul.bf16.gmra.mxu0 %v1903
    %v2612 = vpop.f32.mrf.mxu0
    %v2613 = vadd.f32 %v2225, %v2612
    %v2614 = vpop.f32.mrf.mxu0
    %2615 = vdwg.mxu0
    %2616 = vmatpush.bf16.msra.mxu0 %v2485
    %2617 = vmatpush.bf16.msra.mxu0 %v2481
    %2618 = vmatpush.bf16.msra.mxu0 %v2477
    %2619 = vmatpush.bf16.msra.mxu0 %v2473
    %2620 = vmatpush.bf16.msra.mxu0 %v2469
    %2621 = vmatpush.bf16.msra.mxu0 %v2465
    %2622 = vmatpush.bf16.msra.mxu0 %v2461
    %2623 = vmatpush.bf16.msra.mxu0 %v2457
    %2624 = vmatmul.bf16.gmra.mxu0 %v1904
    %v2625 = vpop.f32.mrf.mxu0
    %v2626 = vadd.f32 %v2613, %v2625
    %v2627 = vpop.f32.mrf.mxu0
    %2628 = vdwg.mxu0
    %2629 = vmatpush.bf16.msra.mxu0 %v2454
    %2630 = vmatpush.bf16.msra.mxu0 %v2450
    %2631 = vmatpush.bf16.msra.mxu0 %v2446
    %2632 = vmatpush.bf16.msra.mxu0 %v2442
    %2633 = vmatpush.bf16.msra.mxu0 %v2438
    %2634 = vmatpush.bf16.msra.mxu0 %v2434
    %2635 = vmatpush.bf16.msra.mxu0 %v2430
    %2636 = vmatpush.bf16.msra.mxu0 %v2426
    %2637 = vmatmul.bf16.gmra.mxu0 %v1903
    %v2638 = vpop.f32.mrf.mxu0
    %v2639 = vadd.f32 %v2226, %v2638
    %v2640 = vpop.f32.mrf.mxu0
    %2641 = vdwg.mxu0
    %2642 = vmatpush.bf16.msra.mxu0 %v2486
    %2643 = vmatpush.bf16.msra.mxu0 %v2482
    %2644 = vmatpush.bf16.msra.mxu0 %v2478
    %2645 = vmatpush.bf16.msra.mxu0 %v2474
    %2646 = vmatpush.bf16.msra.mxu0 %v2470
    %2647 = vmatpush.bf16.msra.mxu0 %v2466
    %2648 = vmatpush.bf16.msra.mxu0 %v2462
    %2649 = vmatpush.bf16.msra.mxu0 %v2458
    %2650 = vmatmul.bf16.gmra.mxu0 %v1904
    %v2651 = vpop.f32.mrf.mxu0
    %v2652 = vadd.f32 %v2639, %v2651
    %v2653 = vpop.f32.mrf.mxu0
    %2654 = vdwg.mxu0
    %v2655 = vmul.f32 %v2153, 0.5
    %v2656 = vmul.f32 %v2154, 0.5
    %v2657 = vmul.f32 %v2155, 0.5
    %v2658 = vtanh.pop %v2655
    %v2659 = vtanh.pop %v2656
    %v2660 = vtanh.pop %v2657
    %v2661 = vmul.f32 %v2658, 0.5
    %v2662 = vmul.f32 %v2659, 0.5
    %v2663 = vmul.f32 %v2660, 0.5
    %v2664 = vadd.f32 %v2661, 0.5
    %v2665 = vadd.f32 %v2662, 0.5
    %v2666 = vadd.f32 %v2663, 0.5
    %v2667 = vtanh.pop %v2156
    %v2668 = vmul.f32 %v2665, %v1880
    %v2669 = vmul.f32 %v2664, %v2667
    %v2670 = vadd.f32 %v2668, %v2669
    %v2671 = vtanh.pop %v2670
    %v2672 = vmul.f32 %v2666, %v2671
    %v2673 = vmul.f32 %v2574, 0.5
    %v2674 = vmul.f32 %v2600, 0.5
    %v2675 = vmul.f32 %v2626, 0.5
    %v2676 = vtanh.pop %v2673
    %v2677 = vtanh.pop %v2674
    %v2678 = vtanh.pop %v2675
    %v2679 = vmul.f32 %v2676, 0.5
    %v2680 = vmul.f32 %v2677, 0.5
    %v2681 = vmul.f32 %v2678, 0.5
    %v2682 = vadd.f32 %v2679, 0.5
    %v2683 = vadd.f32 %v2680, 0.5
    %v2684 = vadd.f32 %v2681, 0.5
    %v2685 = vtanh.pop %v2652
    %v2686 = vmul.f32 %v2683, %v1898
    %v2687 = vmul.f32 %v2682, %v2685
    %v2688 = vadd.f32 %v2686, %v2687
    %v2689 = vtanh.pop %v2688
    %v2690 = vmul.f32 %v2684, %v2689
    %s2691 = scalar_lea.vmem %s6, 16
    %2692 = vst [vmem:[%s2691] sm:$0xff] %v2690
    %v2693 = vpack.c.bf16 %v2672, %v2672
    %v2694 = vpack.c.bf16 %v2690, %v2690
    %v2695 = vld [vmem:[#allocation2 + $0x80] sm:$0xff]
    %v2696 = vld [vmem:[#allocation2 + $0x88] sm:$0xff]
    %v2697 = vld [vmem:[#allocation2 + $0x90] sm:$0xff]
    %v2698 = vld [vmem:[#allocation2 + $0x98] sm:$0xff]
    %v2699 = vld [vmem:[#allocation3] sm:$0xff]
    %v2700 = vld [vmem:[#allocation3 + $0x8] sm:$0xff]
    %v2701 = vld [vmem:[#allocation3 + $0x10] sm:$0xff]
    %v2702 = vld [vmem:[#allocation3 + $0x18] sm:$0xff]
    %v2703 = vld [vmem:[#allocation3 + $0x20] sm:$0xff]
    %v2704 = vld [vmem:[#allocation3 + $0x28] sm:$0xff]
    %v2705 = vld [vmem:[#allocation3 + $0x30] sm:$0xff]
    %v2706 = vld [vmem:[#allocation3 + $0x38] sm:$0xff]
    %v2707 = vld [vmem:[#allocation3 + $0x40] sm:$0xff]
    %v2708 = vld [vmem:[#allocation3 + $0x48] sm:$0xff]
    %v2709 = vld [vmem:[#allocation3 + $0x50] sm:$0xff]
    %v2710 = vld [vmem:[#allocation3 + $0x58] sm:$0xff]
    %v2711 = vld [vmem:[#allocation3 + $0x60] sm:$0xff]
    %v2712 = vld [vmem:[#allocation3 + $0x68] sm:$0xff]
    %v2713 = vld [vmem:[#allocation3 + $0x70] sm:$0xff]
    %v2714 = vld [vmem:[#allocation3 + $0x78] sm:$0xff]
    %v2715 = vld [vmem:[#allocation3 + $0x80] sm:$0xff]
    %v2716 = vld [vmem:[#allocation3 + $0x88] sm:$0xff]
    %v2717 = vld [vmem:[#allocation3 + $0x90] sm:$0xff]
    %v2718 = vld [vmem:[#allocation3 + $0x98] sm:$0xff]
    %v2719 = vld [vmem:[#allocation3 + $0xa0] sm:$0xff]
    %v2720 = vld [vmem:[#allocation3 + $0xa8] sm:$0xff]
    %v2721 = vld [vmem:[#allocation3 + $0xb0] sm:$0xff]
    %v2722 = vld [vmem:[#allocation3 + $0xb8] sm:$0xff]
    %v2723 = vld [vmem:[#allocation3 + $0xc0] sm:$0xff]
    %v2724 = vld [vmem:[#allocation3 + $0xc8] sm:$0xff]
    %v2725 = vld [vmem:[#allocation3 + $0xd0] sm:$0xff]
    %v2726 = vld [vmem:[#allocation3 + $0xd8] sm:$0xff]
    %v2727 = vld [vmem:[#allocation3 + $0xe0] sm:$0xff]
    %v2728 = vld [vmem:[#allocation3 + $0xe8] sm:$0xff]
    %v2729 = vld [vmem:[#allocation3 + $0xf0] sm:$0xff]
    %v2730 = vld [vmem:[#allocation3 + $0xf8] sm:$0xff]
    %v2763 = vunpack.c.l.b16 %v2699
    %v2764 = vunpack.c.h.b16 %v2699
    %v2765 = vunpack.c.l.b16 %v2700
    %v2766 = vunpack.c.h.b16 %v2700
    %v2767 = vunpack.c.l.b16 %v2701
    %v2768 = vunpack.c.h.b16 %v2701
    %v2769 = vunpack.c.l.b16 %v2702
    %v2770 = vunpack.c.h.b16 %v2702
    %v2771 = vunpack.c.l.b16 %v2703
    %v2772 = vunpack.c.h.b16 %v2703
    %v2773 = vunpack.c.l.b16 %v2704
    %v2774 = vunpack.c.h.b16 %v2704
    %v2775 = vunpack.c.l.b16 %v2705
    %v2776 = vunpack.c.h.b16 %v2705
    %v2777 = vunpack.c.l.b16 %v2706
    %v2778 = vunpack.c.h.b16 %v2706
    %v2779 = vunpack.c.l.b16 %v2707
    %v2780 = vunpack.c.h.b16 %v2707
    %v2781 = vunpack.c.l.b16 %v2708
    %v2782 = vunpack.c.h.b16 %v2708
    %v2783 = vunpack.c.l.b16 %v2709
    %v2784 = vunpack.c.h.b16 %v2709
    %v2785 = vunpack.c.l.b16 %v2710
    %v2786 = vunpack.c.h.b16 %v2710
    %v2787 = vunpack.c.l.b16 %v2711
    %v2788 = vunpack.c.h.b16 %v2711
    %v2789 = vunpack.c.l.b16 %v2712
    %v2790 = vunpack.c.h.b16 %v2712
    %v2791 = vunpack.c.l.b16 %v2713
    %v2792 = vunpack.c.h.b16 %v2713
    %v2793 = vunpack.c.l.b16 %v2714
    %v2794 = vunpack.c.h.b16 %v2714
    %v2795 = vunpack.c.l.b16 %v2715
    %v2796 = vunpack.c.h.b16 %v2715
    %v2797 = vunpack.c.l.b16 %v2716
    %v2798 = vunpack.c.h.b16 %v2716
    %v2799 = vunpack.c.l.b16 %v2717
    %v2800 = vunpack.c.h.b16 %v2717
    %v2801 = vunpack.c.l.b16 %v2718
    %v2802 = vunpack.c.h.b16 %v2718
    %v2803 = vunpack.c.l.b16 %v2719
    %v2804 = vunpack.c.h.b16 %v2719
    %v2805 = vunpack.c.l.b16 %v2720
    %v2806 = vunpack.c.h.b16 %v2720
    %v2807 = vunpack.c.l.b16 %v2721
    %v2808 = vunpack.c.h.b16 %v2721
    %v2809 = vunpack.c.l.b16 %v2722
    %v2810 = vunpack.c.h.b16 %v2722
    %v2811 = vunpack.c.l.b16 %v2723
    %v2812 = vunpack.c.h.b16 %v2723
    %v2813 = vunpack.c.l.b16 %v2724
    %v2814 = vunpack.c.h.b16 %v2724
    %v2815 = vunpack.c.l.b16 %v2725
    %v2816 = vunpack.c.h.b16 %v2725
    %v2817 = vunpack.c.l.b16 %v2726
    %v2818 = vunpack.c.h.b16 %v2726
    %v2819 = vunpack.c.l.b16 %v2727
    %v2820 = vunpack.c.h.b16 %v2727
    %v2821 = vunpack.c.l.b16 %v2728
    %v2822 = vunpack.c.h.b16 %v2728
    %v2823 = vunpack.c.l.b16 %v2729
    %v2824 = vunpack.c.h.b16 %v2729
    %v2825 = vunpack.c.l.b16 %v2730
    %v2826 = vunpack.c.h.b16 %v2730
    %v2827 = vpack.c.b16 %v2767, %v2763
    %v2828 = vpack.c.b16 %v2768, %v2764
    %v2829 = vpack.c.b16 %v2769, %v2765
    %v2830 = vpack.c.b16 %v2770, %v2766
    %v2831 = vpack.c.b16 %v2775, %v2771
    %v2832 = vpack.c.b16 %v2776, %v2772
    %v2833 = vpack.c.b16 %v2777, %v2773
    %v2834 = vpack.c.b16 %v2778, %v2774
    %v2835 = vpack.c.b16 %v2783, %v2779
    %v2836 = vpack.c.b16 %v2784, %v2780
    %v2837 = vpack.c.b16 %v2785, %v2781
    %v2838 = vpack.c.b16 %v2786, %v2782
    %v2839 = vpack.c.b16 %v2791, %v2787
    %v2840 = vpack.c.b16 %v2792, %v2788
    %v2841 = vpack.c.b16 %v2793, %v2789
    %v2842 = vpack.c.b16 %v2794, %v2790
    %v2843 = vpack.c.b16 %v2799, %v2795
    %v2844 = vpack.c.b16 %v2800, %v2796
    %v2845 = vpack.c.b16 %v2801, %v2797
    %v2846 = vpack.c.b16 %v2802, %v2798
    %v2847 = vpack.c.b16 %v2807, %v2803
    %v2848 = vpack.c.b16 %v2808, %v2804
    %v2849 = vpack.c.b16 %v2809, %v2805
    %v2850 = vpack.c.b16 %v2810, %v2806
    %v2851 = vpack.c.b16 %v2815, %v2811
    %v2852 = vpack.c.b16 %v2816, %v2812
    %v2853 = vpack.c.b16 %v2817, %v2813
    %v2854 = vpack.c.b16 %v2818, %v2814
    %v2855 = vpack.c.b16 %v2823, %v2819
    %v2856 = vpack.c.b16 %v2824, %v2820
    %v2857 = vpack.c.b16 %v2825, %v2821
    %v2858 = vpack.c.b16 %v2826, %v2822
    %2891 = vmatpush.bf16.msra.mxu0 %v2855
    %2892 = vmatpush.bf16.msra.mxu0 %v2851
    %2893 = vmatpush.bf16.msra.mxu0 %v2847
    %2894 = vmatpush.bf16.msra.mxu0 %v2843
    %2895 = vmatpush.bf16.msra.mxu0 %v2839
    %2896 = vmatpush.bf16.msra.mxu0 %v2835
    %2897 = vmatpush.bf16.msra.mxu0 %v2831
    %2898 = vmatpush.bf16.msra.mxu0 %v2827
    %2899 = vmatmul.bf16.gmra.mxu0 %v2693
    %v2900 = vpop.f32.mrf.mxu0
    %v2901 = vadd.f32 0.0, %v2900
    %v2902 = vpop.f32.mrf.mxu0
    %2903 = vdwg.mxu0
    %2904 = vmatpush.bf16.msra.mxu0 %v2856
    %2905 = vmatpush.bf16.msra.mxu0 %v2852
    %2906 = vmatpush.bf16.msra.mxu0 %v2848
    %2907 = vmatpush.bf16.msra.mxu0 %v2844
    %2908 = vmatpush.bf16.msra.mxu0 %v2840
    %2909 = vmatpush.bf16.msra.mxu0 %v2836
    %2910 = vmatpush.bf16.msra.mxu0 %v2832
    %2911 = vmatpush.bf16.msra.mxu0 %v2828
    %2912 = vmatmul.bf16.gmra.mxu0 %v2693
    %v2913 = vpop.f32.mrf.mxu0
    %v2914 = vadd.f32 0.0, %v2913
    %v2915 = vpop.f32.mrf.mxu0
    %2916 = vdwg.mxu0
    %2917 = vmatpush.bf16.msra.mxu0 %v2857
    %2918 = vmatpush.bf16.msra.mxu0 %v2853
    %2919 = vmatpush.bf16.msra.mxu0 %v2849
    %2920 = vmatpush.bf16.msra.mxu0 %v2845
    %2921 = vmatpush.bf16.msra.mxu0 %v2841
    %2922 = vmatpush.bf16.msra.mxu0 %v2837
    %2923 = vmatpush.bf16.msra.mxu0 %v2833
    %2924 = vmatpush.bf16.msra.mxu0 %v2829
    %2925 = vmatmul.bf16.gmra.mxu0 %v2693
    %v2926 = vpop.f32.mrf.mxu0
    %v2927 = vadd.f32 0.0, %v2926
    %v2928 = vpop.f32.mrf.mxu0
    %2929 = vdwg.mxu0
    %2930 = vmatpush.bf16.msra.mxu0 %v2858
    %2931 = vmatpush.bf16.msra.mxu0 %v2854
    %2932 = vmatpush.bf16.msra.mxu0 %v2850
    %2933 = vmatpush.bf16.msra.mxu0 %v2846
    %2934 = vmatpush.bf16.msra.mxu0 %v2842
    %2935 = vmatpush.bf16.msra.mxu0 %v2838
    %2936 = vmatpush.bf16.msra.mxu0 %v2834
    %2937 = vmatpush.bf16.msra.mxu0 %v2830
    %2938 = vmatmul.bf16.gmra.mxu0 %v2693
    %v2939 = vpop.f32.mrf.mxu0
    %v2940 = vadd.f32 0.0, %v2939
    %v2941 = vpop.f32.mrf.mxu0
    %2942 = vdwg.mxu0
    %v2943 = vadd.f32 %v2695, %v2901
    %v2944 = vadd.f32 %v2696, %v2914
    %v2945 = vadd.f32 %v2697, %v2927
    %v2946 = vadd.f32 %v2698, %v2940
    %v2947 = vld [vmem:[#allocation5] sm:$0xff]
    %v2948 = vld [vmem:[#allocation5 + $0x8] sm:$0xff]
    %v2949 = vld [vmem:[#allocation5 + $0x10] sm:$0xff]
    %v2950 = vld [vmem:[#allocation5 + $0x18] sm:$0xff]
    %v2951 = vld [vmem:[#allocation5 + $0x20] sm:$0xff]
    %v2952 = vld [vmem:[#allocation5 + $0x28] sm:$0xff]
    %v2953 = vld [vmem:[#allocation5 + $0x30] sm:$0xff]
    %v2954 = vld [vmem:[#allocation5 + $0x38] sm:$0xff]
    %v2955 = vld [vmem:[#allocation5 + $0x40] sm:$0xff]
    %v2956 = vld [vmem:[#allocation5 + $0x48] sm:$0xff]
    %v2957 = vld [vmem:[#allocation5 + $0x50] sm:$0xff]
    %v2958 = vld [vmem:[#allocation5 + $0x58] sm:$0xff]
    %v2959 = vld [vmem:[#allocation5 + $0x60] sm:$0xff]
    %v2960 = vld [vmem:[#allocation5 + $0x68] sm:$0xff]
    %v2961 = vld [vmem:[#allocation5 + $0x70] sm:$0xff]
    %v2962 = vld [vmem:[#allocation5 + $0x78] sm:$0xff]
    %v2963 = vld [vmem:[#allocation5 + $0x80] sm:$0xff]
    %v2964 = vld [vmem:[#allocation5 + $0x88] sm:$0xff]
    %v2965 = vld [vmem:[#allocation5 + $0x90] sm:$0xff]
    %v2966 = vld [vmem:[#allocation5 + $0x98] sm:$0xff]
    %v2967 = vld [vmem:[#allocation5 + $0xa0] sm:$0xff]
    %v2968 = vld [vmem:[#allocation5 + $0xa8] sm:$0xff]
    %v2969 = vld [vmem:[#allocation5 + $0xb0] sm:$0xff]
    %v2970 = vld [vmem:[#allocation5 + $0xb8] sm:$0xff]
    %v2971 = vld [vmem:[#allocation5 + $0xc0] sm:$0xff]
    %v2972 = vld [vmem:[#allocation5 + $0xc8] sm:$0xff]
    %v2973 = vld [vmem:[#allocation5 + $0xd0] sm:$0xff]
    %v2974 = vld [vmem:[#allocation5 + $0xd8] sm:$0xff]
    %v2975 = vld [vmem:[#allocation5 + $0xe0] sm:$0xff]
    %v2976 = vld [vmem:[#allocation5 + $0xe8] sm:$0xff]
    %v2977 = vld [vmem:[#allocation5 + $0xf0] sm:$0xff]
    %v2978 = vld [vmem:[#allocation5 + $0xf8] sm:$0xff]
    %v2979 = vld [vmem:[#allocation5 + $0x100] sm:$0xff]
    %v2980 = vld [vmem:[#allocation5 + $0x108] sm:$0xff]
    %v2981 = vld [vmem:[#allocation5 + $0x110] sm:$0xff]
    %v2982 = vld [vmem:[#allocation5 + $0x118] sm:$0xff]
    %v2983 = vld [vmem:[#allocation5 + $0x120] sm:$0xff]
    %v2984 = vld [vmem:[#allocation5 + $0x128] sm:$0xff]
    %v2985 = vld [vmem:[#allocation5 + $0x130] sm:$0xff]
    %v2986 = vld [vmem:[#allocation5 + $0x138] sm:$0xff]
    %v2987 = vld [vmem:[#allocation5 + $0x140] sm:$0xff]
    %v2988 = vld [vmem:[#allocation5 + $0x148] sm:$0xff]
    %v2989 = vld [vmem:[#allocation5 + $0x150] sm:$0xff]
    %v2990 = vld [vmem:[#allocation5 + $0x158] sm:$0xff]
    %v2991 = vld [vmem:[#allocation5 + $0x160] sm:$0xff]
    %v2992 = vld [vmem:[#allocation5 + $0x168] sm:$0xff]
    %v2993 = vld [vmem:[#allocation5 + $0x170] sm:$0xff]
    %v2994 = vld [vmem:[#allocation5 + $0x178] sm:$0xff]
    %v2995 = vld [vmem:[#allocation5 + $0x180] sm:$0xff]
    %v2996 = vld [vmem:[#allocation5 + $0x188] sm:$0xff]
    %v2997 = vld [vmem:[#allocation5 + $0x190] sm:$0xff]
    %v2998 = vld [vmem:[#allocation5 + $0x198] sm:$0xff]
    %v2999 = vld [vmem:[#allocation5 + $0x1a0] sm:$0xff]
    %v3000 = vld [vmem:[#allocation5 + $0x1a8] sm:$0xff]
    %v3001 = vld [vmem:[#allocation5 + $0x1b0] sm:$0xff]
    %v3002 = vld [vmem:[#allocation5 + $0x1b8] sm:$0xff]
    %v3003 = vld [vmem:[#allocation5 + $0x1c0] sm:$0xff]
    %v3004 = vld [vmem:[#allocation5 + $0x1c8] sm:$0xff]
    %v3005 = vld [vmem:[#allocation5 + $0x1d0] sm:$0xff]
    %v3006 = vld [vmem:[#allocation5 + $0x1d8] sm:$0xff]
    %v3007 = vld [vmem:[#allocation5 + $0x1e0] sm:$0xff]
    %v3008 = vld [vmem:[#allocation5 + $0x1e8] sm:$0xff]
    %v3009 = vld [vmem:[#allocation5 + $0x1f0] sm:$0xff]
    %v3010 = vld [vmem:[#allocation5 + $0x1f8] sm:$0xff]
    %v3011 = vld [vmem:[%s5] sm:$0xf]
    %v3013 = vperm.slane %v3011, 0
    %v3014 = vperm.slane %v3011, 1
    %v3015 = vperm.slane %v3011, 2
    %v3016 = vperm.slane %v3011, 3
    %v3085 = vunpack.c.l.b16 %v2947
    %v3086 = vunpack.c.h.b16 %v2947
    %v3087 = vunpack.c.l.b16 %v2948
    %v3088 = vunpack.c.h.b16 %v2948
    %v3089 = vunpack.c.l.b16 %v2949
    %v3090 = vunpack.c.h.b16 %v2949
    %v3091 = vunpack.c.l.b16 %v2950
    %v3092 = vunpack.c.h.b16 %v2950
    %v3093 = vunpack.c.l.b16 %v2951
    %v3094 = vunpack.c.h.b16 %v2951
    %v3095 = vunpack.c.l.b16 %v2952
    %v3096 = vunpack.c.h.b16 %v2952
    %v3097 = vunpack.c.l.b16 %v2953
    %v3098 = vunpack.c.h.b16 %v2953
    %v3099 = vunpack.c.l.b16 %v2954
    %v3100 = vunpack.c.h.b16 %v2954
    %v3101 = vunpack.c.l.b16 %v2955
    %v3102 = vunpack.c.h.b16 %v2955
    %v3103 = vunpack.c.l.b16 %v2956
    %v3104 = vunpack.c.h.b16 %v2956
    %v3105 = vunpack.c.l.b16 %v2957
    %v3106 = vunpack.c.h.b16 %v2957
    %v3107 = vunpack.c.l.b16 %v2958
    %v3108 = vunpack.c.h.b16 %v2958
    %v3109 = vunpack.c.l.b16 %v2959
    %v3110 = vunpack.c.h.b16 %v2959
    %v3111 = vunpack.c.l.b16 %v2960
    %v3112 = vunpack.c.h.b16 %v2960
    %v3113 = vunpack.c.l.b16 %v2961
    %v3114 = vunpack.c.h.b16 %v2961
    %v3115 = vunpack.c.l.b16 %v2962
    %v3116 = vunpack.c.h.b16 %v2962
    %v3117 = vunpack.c.l.b16 %v2963
    %v3118 = vunpack.c.h.b16 %v2963
    %v3119 = vunpack.c.l.b16 %v2964
    %v3120 = vunpack.c.h.b16 %v2964
    %v3121 = vunpack.c.l.b16 %v2965
    %v3122 = vunpack.c.h.b16 %v2965
    %v3123 = vunpack.c.l.b16 %v2966
    %v3124 = vunpack.c.h.b16 %v2966
    %v3125 = vunpack.c.l.b16 %v2967
    %v3126 = vunpack.c.h.b16 %v2967
    %v3127 = vunpack.c.l.b16 %v2968
    %v3128 = vunpack.c.h.b16 %v2968
    %v3129 = vunpack.c.l.b16 %v2969
    %v3130 = vunpack.c.h.b16 %v2969
    %v3131 = vunpack.c.l.b16 %v2970
    %v3132 = vunpack.c.h.b16 %v2970
    %v3133 = vunpack.c.l.b16 %v2971
    %v3134 = vunpack.c.h.b16 %v2971
    %v3135 = vunpack.c.l.b16 %v2972
    %v3136 = vunpack.c.h.b16 %v2972
    %v3137 = vunpack.c.l.b16 %v2973
    %v3138 = vunpack.c.h.b16 %v2973
    %v3139 = vunpack.c.l.b16 %v2974
    %v3140 = vunpack.c.h.b16 %v2974
    %v3141 = vunpack.c.l.b16 %v2975
    %v3142 = vunpack.c.h.b16 %v2975
    %v3143 = vunpack.c.l.b16 %v2976
    %v3144 = vunpack.c.h.b16 %v2976
    %v3145 = vunpack.c.l.b16 %v2977
    %v3146 = vunpack.c.h.b16 %v2977
    %v3147 = vunpack.c.l.b16 %v2978
    %v3148 = vunpack.c.h.b16 %v2978
    %v3149 = vunpack.c.l.b16 %v2979
    %v3150 = vunpack.c.h.b16 %v2979
    %v3151 = vunpack.c.l.b16 %v2980
    %v3152 = vunpack.c.h.b16 %v2980
    %v3153 = vunpack.c.l.b16 %v2981
    %v3154 = vunpack.c.h.b16 %v2981
    %v3155 = vunpack.c.l.b16 %v2982
    %v3156 = vunpack.c.h.b16 %v2982
    %v3157 = vunpack.c.l.b16 %v2983
    %v3158 = vunpack.c.h.b16 %v2983
    %v3159 = vunpack.c.l.b16 %v2984
    %v3160 = vunpack.c.h.b16 %v2984
    %v3161 = vunpack.c.l.b16 %v2985
    %v3162 = vunpack.c.h.b16 %v2985
    %v3163 = vunpack.c.l.b16 %v2986
    %v3164 = vunpack.c.h.b16 %v2986
    %v3165 = vunpack.c.l.b16 %v2987
    %v3166 = vunpack.c.h.b16 %v2987
    %v3167 = vunpack.c.l.b16 %v2988
    %v3168 = vunpack.c.h.b16 %v2988
    %v3169 = vunpack.c.l.b16 %v2989
    %v3170 = vunpack.c.h.b16 %v2989
    %v3171 = vunpack.c.l.b16 %v2990
    %v3172 = vunpack.c.h.b16 %v2990
    %v3173 = vunpack.c.l.b16 %v2991
    %v3174 = vunpack.c.h.b16 %v2991
    %v3175 = vunpack.c.l.b16 %v2992
    %v3176 = vunpack.c.h.b16 %v2992
    %v3177 = vunpack.c.l.b16 %v2993
    %v3178 = vunpack.c.h.b16 %v2993
    %v3179 = vunpack.c.l.b16 %v2994
    %v3180 = vunpack.c.h.b16 %v2994
    %v3181 = vunpack.c.l.b16 %v2995
    %v3182 = vunpack.c.h.b16 %v2995
    %v3183 = vunpack.c.l.b16 %v2996
    %v3184 = vunpack.c.h.b16 %v2996
    %v3185 = vunpack.c.l.b16 %v2997
    %v3186 = vunpack.c.h.b16 %v2997
    %v3187 = vunpack.c.l.b16 %v2998
    %v3188 = vunpack.c.h.b16 %v2998
    %v3189 = vunpack.c.l.b16 %v2999
    %v3190 = vunpack.c.h.b16 %v2999
    %v3191 = vunpack.c.l.b16 %v3000
    %v3192 = vunpack.c.h.b16 %v3000
    %v3193 = vunpack.c.l.b16 %v3001
    %v3194 = vunpack.c.h.b16 %v3001
    %v3195 = vunpack.c.l.b16 %v3002
    %v3196 = vunpack.c.h.b16 %v3002
    %v3197 = vunpack.c.l.b16 %v3003
    %v3198 = vunpack.c.h.b16 %v3003
    %v3199 = vunpack.c.l.b16 %v3004
    %v3200 = vunpack.c.h.b16 %v3004
    %v3201 = vunpack.c.l.b16 %v3005
    %v3202 = vunpack.c.h.b16 %v3005
    %v3203 = vunpack.c.l.b16 %v3006
    %v3204 = vunpack.c.h.b16 %v3006
    %v3205 = vunpack.c.l.b16 %v3007
    %v3206 = vunpack.c.h.b16 %v3007
    %v3207 = vunpack.c.l.b16 %v3008
    %v3208 = vunpack.c.h.b16 %v3008
    %v3209 = vunpack.c.l.b16 %v3009
    %v3210 = vunpack.c.h.b16 %v3009
    %v3211 = vunpack.c.l.b16 %v3010
    %v3212 = vunpack.c.h.b16 %v3010
    %v3213 = vpack.c.b16 %v3089, %v3085
    %v3214 = vpack.c.b16 %v3090, %v3086
    %v3215 = vpack.c.b16 %v3091, %v3087
    %v3216 = vpack.c.b16 %v3092, %v3088
    %v3217 = vpack.c.b16 %v3097, %v3093
    %v3218 = vpack.c.b16 %v3098, %v3094
    %v3219 = vpack.c.b16 %v3099, %v3095
    %v3220 = vpack.c.b16 %v3100, %v3096
    %v3221 = vpack.c.b16 %v3105, %v3101
    %v3222 = vpack.c.b16 %v3106, %v3102
    %v3223 = vpack.c.b16 %v3107, %v3103
    %v3224 = vpack.c.b16 %v3108, %v3104
    %v3225 = vpack.c.b16 %v3113, %v3109
    %v3226 = vpack.c.b16 %v3114, %v3110
    %v3227 = vpack.c.b16 %v3115, %v3111
    %v3228 = vpack.c.b16 %v3116, %v3112
    %v3229 = vpack.c.b16 %v3121, %v3117
    %v3230 = vpack.c.b16 %v3122, %v3118
    %v3231 = vpack.c.b16 %v3123, %v3119
    %v3232 = vpack.c.b16 %v3124, %v3120
    %v3233 = vpack.c.b16 %v3129, %v3125
    %v3234 = vpack.c.b16 %v3130, %v3126
    %v3235 = vpack.c.b16 %v3131, %v3127
    %v3236 = vpack.c.b16 %v3132, %v3128
    %v3237 = vpack.c.b16 %v3137, %v3133
    %v3238 = vpack.c.b16 %v3138, %v3134
    %v3239 = vpack.c.b16 %v3139, %v3135
    %v3240 = vpack.c.b16 %v3140, %v3136
    %v3241 = vpack.c.b16 %v3145, %v3141
    %v3242 = vpack.c.b16 %v3146, %v3142
    %v3243 = vpack.c.b16 %v3147, %v3143
    %v3244 = vpack.c.b16 %v3148, %v3144
    %v3245 = vpack.c.b16 %v3153, %v3149
    %v3246 = vpack.c.b16 %v3154, %v3150
    %v3247 = vpack.c.b16 %v3155, %v3151
    %v3248 = vpack.c.b16 %v3156, %v3152
    %v3249 = vpack.c.b16 %v3161, %v3157
    %v3250 = vpack.c.b16 %v3162, %v3158
    %v3251 = vpack.c.b16 %v3163, %v3159
    %v3252 = vpack.c.b16 %v3164, %v3160
    %v3253 = vpack.c.b16 %v3169, %v3165
    %v3254 = vpack.c.b16 %v3170, %v3166
    %v3255 = vpack.c.b16 %v3171, %v3167
    %v3256 = vpack.c.b16 %v3172, %v3168
    %v3257 = vpack.c.b16 %v3177, %v3173
    %v3258 = vpack.c.b16 %v3178, %v3174
    %v3259 = vpack.c.b16 %v3179, %v3175
    %v3260 = vpack.c.b16 %v3180, %v3176
    %v3261 = vpack.c.b16 %v3185, %v3181
    %v3262 = vpack.c.b16 %v3186, %v3182
    %v3263 = vpack.c.b16 %v3187, %v3183
    %v3264 = vpack.c.b16 %v3188, %v3184
    %v3265 = vpack.c.b16 %v3193, %v3189
    %v3266 = vpack.c.b16 %v3194, %v3190
    %v3267 = vpack.c.b16 %v3195, %v3191
    %v3268 = vpack.c.b16 %v3196, %v3192
    %v3269 = vpack.c.b16 %v3201, %v3197
    %v3270 = vpack.c.b16 %v3202, %v3198
    %v3271 = vpack.c.b16 %v3203, %v3199
    %v3272 = vpack.c.b16 %v3204, %v3200
    %v3273 = vpack.c.b16 %v3209, %v3205
    %v3274 = vpack.c.b16 %v3210, %v3206
    %v3275 = vpack.c.b16 %v3211, %v3207
    %v3276 = vpack.c.b16 %v3212, %v3208
    %3341 = vmatpush.bf16.msra.mxu0 %v3241
    %3342 = vmatpush.bf16.msra.mxu0 %v3237
    %3343 = vmatpush.bf16.msra.mxu0 %v3233
    %3344 = vmatpush.bf16.msra.mxu0 %v3229
    %3345 = vmatpush.bf16.msra.mxu0 %v3225
    %3346 = vmatpush.bf16.msra.mxu0 %v3221
    %3347 = vmatpush.bf16.msra.mxu0 %v3217
    %3348 = vmatpush.bf16.msra.mxu0 %v3213
    %3349 = vmatmul.bf16.gmra.mxu0 %v2693
    %v3350 = vpop.f32.mrf.mxu0
    %v3351 = vadd.f32 %v3013, %v3350
    %v3352 = vpop.f32.mrf.mxu0
    %3353 = vdwg.mxu0
    %3354 = vmatpush.bf16.msra.mxu0 %v3273
    %3355 = vmatpush.bf16.msra.mxu0 %v3269
    %3356 = vmatpush.bf16.msra.mxu0 %v3265
    %3357 = vmatpush.bf16.msra.mxu0 %v3261
    %3358 = vmatpush.bf16.msra.mxu0 %v3257
    %3359 = vmatpush.bf16.msra.mxu0 %v3253
    %3360 = vmatpush.bf16.msra.mxu0 %v3249
    %3361 = vmatpush.bf16.msra.mxu0 %v3245
    %3362 = vmatmul.bf16.gmra.mxu0 %v2694
    %v3363 = vpop.f32.mrf.mxu0
    %v3364 = vadd.f32 %v3351, %v3363
    %v3365 = vpop.f32.mrf.mxu0
    %3366 = vdwg.mxu0
    %3367 = vmatpush.bf16.msra.mxu0 %v3242
    %3368 = vmatpush.bf16.msra.mxu0 %v3238
    %3369 = vmatpush.bf16.msra.mxu0 %v3234
    %3370 = vmatpush.bf16.msra.mxu0 %v3230
    %3371 = vmatpush.bf16.msra.mxu0 %v3226
    %3372 = vmatpush.bf16.msra.mxu0 %v3222
    %3373 = vmatpush.bf16.msra.mxu0 %v3218
    %3374 = vmatpush.bf16.msra.mxu0 %v3214
    %3375 = vmatmul.bf16.gmra.mxu0 %v2693
    %v3376 = vpop.f32.mrf.mxu0
    %v3377 = vadd.f32 %v3014, %v3376
    %v3378 = vpop.f32.mrf.mxu0
    %3379 = vdwg.mxu0
    %3380 = vmatpush.bf16.msra.mxu0 %v3274
    %3381 = vmatpush.bf16.msra.mxu0 %v3270
    %3382 = vmatpush.bf16.msra.mxu0 %v3266
    %3383 = vmatpush.bf16.msra.mxu0 %v3262
    %3384 = vmatpush.bf16.msra.mxu0 %v3258
    %3385 = vmatpush.bf16.msra.mxu0 %v3254
    %3386 = vmatpush.bf16.msra.mxu0 %v3250
    %3387 = vmatpush.bf16.msra.mxu0 %v3246
    %3388 = vmatmul.bf16.gmra.mxu0 %v2694
    %v3389 = vpop.f32.mrf.mxu0
    %v3390 = vadd.f32 %v3377, %v3389
    %v3391 = vpop.f32.mrf.mxu0
    %3392 = vdwg.mxu0
    %3393 = vmatpush.bf16.msra.mxu0 %v3243
    %3394 = vmatpush.bf16.msra.mxu0 %v3239
    %3395 = vmatpush.bf16.msra.mxu0 %v3235
    %3396 = vmatpush.bf16.msra.mxu0 %v3231
    %3397 = vmatpush.bf16.msra.mxu0 %v3227
    %3398 = vmatpush.bf16.msra.mxu0 %v3223
    %3399 = vmatpush.bf16.msra.mxu0 %v3219
    %3400 = vmatpush.bf16.msra.mxu0 %v3215
    %3401 = vmatmul.bf16.gmra.mxu0 %v2693
    %v3402 = vpop.f32.mrf.mxu0
    %v3403 = vadd.f32 %v3015, %v3402
    %v3404 = vpop.f32.mrf.mxu0
    %3405 = vdwg.mxu0
    %3406 = vmatpush.bf16.msra.mxu0 %v3275
    %3407 = vmatpush.bf16.msra.mxu0 %v3271
    %3408 = vmatpush.bf16.msra.mxu0 %v3267
    %3409 = vmatpush.bf16.msra.mxu0 %v3263
    %3410 = vmatpush.bf16.msra.mxu0 %v3259
    %3411 = vmatpush.bf16.msra.mxu0 %v3255
    %3412 = vmatpush.bf16.msra.mxu0 %v3251
    %3413 = vmatpush.bf16.msra.mxu0 %v3247
    %3414 = vmatmul.bf16.gmra.mxu0 %v2694
    %v3415 = vpop.f32.mrf.mxu0
    %v3416 = vadd.f32 %v3403, %v3415
    %v3417 = vpop.f32.mrf.mxu0
    %3418 = vdwg.mxu0
    %3419 = vmatpush.bf16.msra.mxu0 %v3244
    %3420 = vmatpush.bf16.msra.mxu0 %v3240
    %3421 = vmatpush.bf16.msra.mxu0 %v3236
    %3422 = vmatpush.bf16.msra.mxu0 %v3232
    %3423 = vmatpush.bf16.msra.mxu0 %v3228
    %3424 = vmatpush.bf16.msra.mxu0 %v3224
    %3425 = vmatpush.bf16.msra.mxu0 %v3220
    %3426 = vmatpush.bf16.msra.mxu0 %v3216
    %3427 = vmatmul.bf16.gmra.mxu0 %v2693
    %v3428 = vpop.f32.mrf.mxu0
    %v3429 = vadd.f32 %v3016, %v3428
    %v3430 = vpop.f32.mrf.mxu0
    %3431 = vdwg.mxu0
    %3432 = vmatpush.bf16.msra.mxu0 %v3276
    %3433 = vmatpush.bf16.msra.mxu0 %v3272
    %3434 = vmatpush.bf16.msra.mxu0 %v3268
    %3435 = vmatpush.bf16.msra.mxu0 %v3264
    %3436 = vmatpush.bf16.msra.mxu0 %v3260
    %3437 = vmatpush.bf16.msra.mxu0 %v3256
    %3438 = vmatpush.bf16.msra.mxu0 %v3252
    %3439 = vmatpush.bf16.msra.mxu0 %v3248
    %3440 = vmatmul.bf16.gmra.mxu0 %v2694
    %v3441 = vpop.f32.mrf.mxu0
    %v3442 = vadd.f32 %v3429, %v3441
    %v3443 = vpop.f32.mrf.mxu0
    %3444 = vdwg.mxu0
    %v3445 = vmul.f32 %v2943, 0.5
    %v3446 = vmul.f32 %v2944, 0.5
    %v3447 = vmul.f32 %v2945, 0.5
    %v3448 = vtanh.pop %v3445
    %v3449 = vtanh.pop %v3446
    %v3450 = vtanh.pop %v3447
    %v3451 = vmul.f32 %v3448, 0.5
    %v3452 = vmul.f32 %v3449, 0.5
    %v3453 = vmul.f32 %v3450, 0.5
    %v3454 = vadd.f32 %v3451, 0.5
    %v3455 = vadd.f32 %v3452, 0.5
    %v3456 = vadd.f32 %v3453, 0.5
    %v3457 = vtanh.pop %v2946
    %v3458 = vmul.f32 %v3455, %v2670
    %v3459 = vmul.f32 %v3454, %v3457
    %v3460 = vadd.f32 %v3458, %v3459
    %v3461 = vtanh.pop %v3460
    %v3462 = vmul.f32 %v3456, %v3461
    %v3463 = vmul.f32 %v3364, 0.5
    %v3464 = vmul.f32 %v3390, 0.5
    %v3465 = vmul.f32 %v3416, 0.5
    %v3466 = vtanh.pop %v3463
    %v3467 = vtanh.pop %v3464
    %v3468 = vtanh.pop %v3465
    %v3469 = vmul.f32 %v3466, 0.5
    %v3470 = vmul.f32 %v3467, 0.5
    %v3471 = vmul.f32 %v3468, 0.5
    %v3472 = vadd.f32 %v3469, 0.5
    %v3473 = vadd.f32 %v3470, 0.5
    %v3474 = vadd.f32 %v3471, 0.5
    %v3475 = vtanh.pop %v3442
    %v3476 = vmul.f32 %v3473, %v2688
    %v3477 = vmul.f32 %v3472, %v3475
    %v3478 = vadd.f32 %v3476, %v3477
    %v3479 = vtanh.pop %v3478
    %v3480 = vmul.f32 %v3474, %v3479
    %s3481 = scalar_lea.vmem %s6, 24
    %3482 = vst [vmem:[%s3481] sm:$0xff] %v3480
    %v3483 = vpack.c.bf16 %v3462, %v3462
    %v3484 = vpack.c.bf16 %v3480, %v3480
    %v3485 = vld [vmem:[#allocation2 + $0xa0] sm:$0xff]
    %v3486 = vld [vmem:[#allocation2 + $0xa8] sm:$0xff]
    %v3487 = vld [vmem:[#allocation2 + $0xb0] sm:$0xff]
    %v3488 = vld [vmem:[#allocation2 + $0xb8] sm:$0xff]
    %v3489 = vld [vmem:[#allocation3] sm:$0xff]
    %v3490 = vld [vmem:[#allocation3 + $0x8] sm:$0xff]
    %v3491 = vld [vmem:[#allocation3 + $0x10] sm:$0xff]
    %v3492 = vld [vmem:[#allocation3 + $0x18] sm:$0xff]
    %v3493 = vld [vmem:[#allocation3 + $0x20] sm:$0xff]
    %v3494 = vld [vmem:[#allocation3 + $0x28] sm:$0xff]
    %v3495 = vld [vmem:[#allocation3 + $0x30] sm:$0xff]
    %v3496 = vld [vmem:[#allocation3 + $0x38] sm:$0xff]
    %v3497 = vld [vmem:[#allocation3 + $0x40] sm:$0xff]
    %v3498 = vld [vmem:[#allocation3 + $0x48] sm:$0xff]
    %v3499 = vld [vmem:[#allocation3 + $0x50] sm:$0xff]
    %v3500 = vld [vmem:[#allocation3 + $0x58] sm:$0xff]
    %v3501 = vld [vmem:[#allocation3 + $0x60] sm:$0xff]
    %v3502 = vld [vmem:[#allocation3 + $0x68] sm:$0xff]
    %v3503 = vld [vmem:[#allocation3 + $0x70] sm:$0xff]
    %v3504 = vld [vmem:[#allocation3 + $0x78] sm:$0xff]
    %v3505 = vld [vmem:[#allocation3 + $0x80] sm:$0xff]
    %v3506 = vld [vmem:[#allocation3 + $0x88] sm:$0xff]
    %v3507 = vld [vmem:[#allocation3 + $0x90] sm:$0xff]
    %v3508 = vld [vmem:[#allocation3 + $0x98] sm:$0xff]
    %v3509 = vld [vmem:[#allocation3 + $0xa0] sm:$0xff]
    %v3510 = vld [vmem:[#allocation3 + $0xa8] sm:$0xff]
    %v3511 = vld [vmem:[#allocation3 + $0xb0] sm:$0xff]
    %v3512 = vld [vmem:[#allocation3 + $0xb8] sm:$0xff]
    %v3513 = vld [vmem:[#allocation3 + $0xc0] sm:$0xff]
    %v3514 = vld [vmem:[#allocation3 + $0xc8] sm:$0xff]
    %v3515 = vld [vmem:[#allocation3 + $0xd0] sm:$0xff]
    %v3516 = vld [vmem:[#allocation3 + $0xd8] sm:$0xff]
    %v3517 = vld [vmem:[#allocation3 + $0xe0] sm:$0xff]
    %v3518 = vld [vmem:[#allocation3 + $0xe8] sm:$0xff]
    %v3519 = vld [vmem:[#allocation3 + $0xf0] sm:$0xff]
    %v3520 = vld [vmem:[#allocation3 + $0xf8] sm:$0xff]
    %v3553 = vunpack.c.l.b16 %v3489
    %v3554 = vunpack.c.h.b16 %v3489
    %v3555 = vunpack.c.l.b16 %v3490
    %v3556 = vunpack.c.h.b16 %v3490
    %v3557 = vunpack.c.l.b16 %v3491
    %v3558 = vunpack.c.h.b16 %v3491
    %v3559 = vunpack.c.l.b16 %v3492
    %v3560 = vunpack.c.h.b16 %v3492
    %v3561 = vunpack.c.l.b16 %v3493
    %v3562 = vunpack.c.h.b16 %v3493
    %v3563 = vunpack.c.l.b16 %v3494
    %v3564 = vunpack.c.h.b16 %v3494
    %v3565 = vunpack.c.l.b16 %v3495
    %v3566 = vunpack.c.h.b16 %v3495
    %v3567 = vunpack.c.l.b16 %v3496
    %v3568 = vunpack.c.h.b16 %v3496
    %v3569 = vunpack.c.l.b16 %v3497
    %v3570 = vunpack.c.h.b16 %v3497
    %v3571 = vunpack.c.l.b16 %v3498
    %v3572 = vunpack.c.h.b16 %v3498
    %v3573 = vunpack.c.l.b16 %v3499
    %v3574 = vunpack.c.h.b16 %v3499
    %v3575 = vunpack.c.l.b16 %v3500
    %v3576 = vunpack.c.h.b16 %v3500
    %v3577 = vunpack.c.l.b16 %v3501
    %v3578 = vunpack.c.h.b16 %v3501
    %v3579 = vunpack.c.l.b16 %v3502
    %v3580 = vunpack.c.h.b16 %v3502
    %v3581 = vunpack.c.l.b16 %v3503
    %v3582 = vunpack.c.h.b16 %v3503
    %v3583 = vunpack.c.l.b16 %v3504
    %v3584 = vunpack.c.h.b16 %v3504
    %v3585 = vunpack.c.l.b16 %v3505
    %v3586 = vunpack.c.h.b16 %v3505
    %v3587 = vunpack.c.l.b16 %v3506
    %v3588 = vunpack.c.h.b16 %v3506
    %v3589 = vunpack.c.l.b16 %v3507
    %v3590 = vunpack.c.h.b16 %v3507
    %v3591 = vunpack.c.l.b16 %v3508
    %v3592 = vunpack.c.h.b16 %v3508
    %v3593 = vunpack.c.l.b16 %v3509
    %v3594 = vunpack.c.h.b16 %v3509
    %v3595 = vunpack.c.l.b16 %v3510
    %v3596 = vunpack.c.h.b16 %v3510
    %v3597 = vunpack.c.l.b16 %v3511
    %v3598 = vunpack.c.h.b16 %v3511
    %v3599 = vunpack.c.l.b16 %v3512
    %v3600 = vunpack.c.h.b16 %v3512
    %v3601 = vunpack.c.l.b16 %v3513
    %v3602 = vunpack.c.h.b16 %v3513
    %v3603 = vunpack.c.l.b16 %v3514
    %v3604 = vunpack.c.h.b16 %v3514
    %v3605 = vunpack.c.l.b16 %v3515
    %v3606 = vunpack.c.h.b16 %v3515
    %v3607 = vunpack.c.l.b16 %v3516
    %v3608 = vunpack.c.h.b16 %v3516
    %v3609 = vunpack.c.l.b16 %v3517
    %v3610 = vunpack.c.h.b16 %v3517
    %v3611 = vunpack.c.l.b16 %v3518
    %v3612 = vunpack.c.h.b16 %v3518
    %v3613 = vunpack.c.l.b16 %v3519
    %v3614 = vunpack.c.h.b16 %v3519
    %v3615 = vunpack.c.l.b16 %v3520
    %v3616 = vunpack.c.h.b16 %v3520
    %v3617 = vpack.c.b16 %v3557, %v3553
    %v3618 = vpack.c.b16 %v3558, %v3554
    %v3619 = vpack.c.b16 %v3559, %v3555
    %v3620 = vpack.c.b16 %v3560, %v3556
    %v3621 = vpack.c.b16 %v3565, %v3561
    %v3622 = vpack.c.b16 %v3566, %v3562
    %v3623 = vpack.c.b16 %v3567, %v3563
    %v3624 = vpack.c.b16 %v3568, %v3564
    %v3625 = vpack.c.b16 %v3573, %v3569
    %v3626 = vpack.c.b16 %v3574, %v3570
    %v3627 = vpack.c.b16 %v3575, %v3571
    %v3628 = vpack.c.b16 %v3576, %v3572
    %v3629 = vpack.c.b16 %v3581, %v3577
    %v3630 = vpack.c.b16 %v3582, %v3578
    %v3631 = vpack.c.b16 %v3583, %v3579
    %v3632 = vpack.c.b16 %v3584, %v3580
    %v3633 = vpack.c.b16 %v3589, %v3585
    %v3634 = vpack.c.b16 %v3590, %v3586
    %v3635 = vpack.c.b16 %v3591, %v3587
    %v3636 = vpack.c.b16 %v3592, %v3588
    %v3637 = vpack.c.b16 %v3597, %v3593
    %v3638 = vpack.c.b16 %v3598, %v3594
    %v3639 = vpack.c.b16 %v3599, %v3595
    %v3640 = vpack.c.b16 %v3600, %v3596
    %v3641 = vpack.c.b16 %v3605, %v3601
    %v3642 = vpack.c.b16 %v3606, %v3602
    %v3643 = vpack.c.b16 %v3607, %v3603
    %v3644 = vpack.c.b16 %v3608, %v3604
    %v3645 = vpack.c.b16 %v3613, %v3609
    %v3646 = vpack.c.b16 %v3614, %v3610
    %v3647 = vpack.c.b16 %v3615, %v3611
    %v3648 = vpack.c.b16 %v3616, %v3612
    %3681 = vmatpush.bf16.msra.mxu0 %v3645
    %3682 = vmatpush.bf16.msra.mxu0 %v3641
    %3683 = vmatpush.bf16.msra.mxu0 %v3637
    %3684 = vmatpush.bf16.msra.mxu0 %v3633
    %3685 = vmatpush.bf16.msra.mxu0 %v3629
    %3686 = vmatpush.bf16.msra.mxu0 %v3625
    %3687 = vmatpush.bf16.msra.mxu0 %v3621
    %3688 = vmatpush.bf16.msra.mxu0 %v3617
    %3689 = vmatmul.bf16.gmra.mxu0 %v3483
    %v3690 = vpop.f32.mrf.mxu0
    %v3691 = vadd.f32 0.0, %v3690
    %v3692 = vpop.f32.mrf.mxu0
    %3693 = vdwg.mxu0
    %3694 = vmatpush.bf16.msra.mxu0 %v3646
    %3695 = vmatpush.bf16.msra.mxu0 %v3642
    %3696 = vmatpush.bf16.msra.mxu0 %v3638
    %3697 = vmatpush.bf16.msra.mxu0 %v3634
    %3698 = vmatpush.bf16.msra.mxu0 %v3630
    %3699 = vmatpush.bf16.msra.mxu0 %v3626
    %3700 = vmatpush.bf16.msra.mxu0 %v3622
    %3701 = vmatpush.bf16.msra.mxu0 %v3618
    %3702 = vmatmul.bf16.gmra.mxu0 %v3483
    %v3703 = vpop.f32.mrf.mxu0
    %v3704 = vadd.f32 0.0, %v3703
    %v3705 = vpop.f32.mrf.mxu0
    %3706 = vdwg.mxu0
    %3707 = vmatpush.bf16.msra.mxu0 %v3647
    %3708 = vmatpush.bf16.msra.mxu0 %v3643
    %3709 = vmatpush.bf16.msra.mxu0 %v3639
    %3710 = vmatpush.bf16.msra.mxu0 %v3635
    %3711 = vmatpush.bf16.msra.mxu0 %v3631
    %3712 = vmatpush.bf16.msra.mxu0 %v3627
    %3713 = vmatpush.bf16.msra.mxu0 %v3623
    %3714 = vmatpush.bf16.msra.mxu0 %v3619
    %3715 = vmatmul.bf16.gmra.mxu0 %v3483
    %v3716 = vpop.f32.mrf.mxu0
    %v3717 = vadd.f32 0.0, %v3716
    %v3718 = vpop.f32.mrf.mxu0
    %3719 = vdwg.mxu0
    %3720 = vmatpush.bf16.msra.mxu0 %v3648
    %3721 = vmatpush.bf16.msra.mxu0 %v3644
    %3722 = vmatpush.bf16.msra.mxu0 %v3640
    %3723 = vmatpush.bf16.msra.mxu0 %v3636
    %3724 = vmatpush.bf16.msra.mxu0 %v3632
    %3725 = vmatpush.bf16.msra.mxu0 %v3628
    %3726 = vmatpush.bf16.msra.mxu0 %v3624
    %3727 = vmatpush.bf16.msra.mxu0 %v3620
    %3728 = vmatmul.bf16.gmra.mxu0 %v3483
    %v3729 = vpop.f32.mrf.mxu0
    %v3730 = vadd.f32 0.0, %v3729
    %v3731 = vpop.f32.mrf.mxu0
    %3732 = vdwg.mxu0
    %v3733 = vadd.f32 %v3485, %v3691
    %v3734 = vadd.f32 %v3486, %v3704
    %v3735 = vadd.f32 %v3487, %v3717
    %v3736 = vadd.f32 %v3488, %v3730
    %v3737 = vld [vmem:[#allocation5] sm:$0xff]
    %v3738 = vld [vmem:[#allocation5 + $0x8] sm:$0xff]
    %v3739 = vld [vmem:[#allocation5 + $0x10] sm:$0xff]
    %v3740 = vld [vmem:[#allocation5 + $0x18] sm:$0xff]
    %v3741 = vld [vmem:[#allocation5 + $0x20] sm:$0xff]
    %v3742 = vld [vmem:[#allocation5 + $0x28] sm:$0xff]
    %v3743 = vld [vmem:[#allocation5 + $0x30] sm:$0xff]
    %v3744 = vld [vmem:[#allocation5 + $0x38] sm:$0xff]
    %v3745 = vld [vmem:[#allocation5 + $0x40] sm:$0xff]
    %v3746 = vld [vmem:[#allocation5 + $0x48] sm:$0xff]
    %v3747 = vld [vmem:[#allocation5 + $0x50] sm:$0xff]
    %v3748 = vld [vmem:[#allocation5 + $0x58] sm:$0xff]
    %v3749 = vld [vmem:[#allocation5 + $0x60] sm:$0xff]
    %v3750 = vld [vmem:[#allocation5 + $0x68] sm:$0xff]
    %v3751 = vld [vmem:[#allocation5 + $0x70] sm:$0xff]
    %v3752 = vld [vmem:[#allocation5 + $0x78] sm:$0xff]
    %v3753 = vld [vmem:[#allocation5 + $0x80] sm:$0xff]
    %v3754 = vld [vmem:[#allocation5 + $0x88] sm:$0xff]
    %v3755 = vld [vmem:[#allocation5 + $0x90] sm:$0xff]
    %v3756 = vld [vmem:[#allocation5 + $0x98] sm:$0xff]
    %v3757 = vld [vmem:[#allocation5 + $0xa0] sm:$0xff]
    %v3758 = vld [vmem:[#allocation5 + $0xa8] sm:$0xff]
    %v3759 = vld [vmem:[#allocation5 + $0xb0] sm:$0xff]
    %v3760 = vld [vmem:[#allocation5 + $0xb8] sm:$0xff]
    %v3761 = vld [vmem:[#allocation5 + $0xc0] sm:$0xff]
    %v3762 = vld [vmem:[#allocation5 + $0xc8] sm:$0xff]
    %v3763 = vld [vmem:[#allocation5 + $0xd0] sm:$0xff]
    %v3764 = vld [vmem:[#allocation5 + $0xd8] sm:$0xff]
    %v3765 = vld [vmem:[#allocation5 + $0xe0] sm:$0xff]
    %v3766 = vld [vmem:[#allocation5 + $0xe8] sm:$0xff]
    %v3767 = vld [vmem:[#allocation5 + $0xf0] sm:$0xff]
    %v3768 = vld [vmem:[#allocation5 + $0xf8] sm:$0xff]
    %v3769 = vld [vmem:[#allocation5 + $0x100] sm:$0xff]
    %v3770 = vld [vmem:[#allocation5 + $0x108] sm:$0xff]
    %v3771 = vld [vmem:[#allocation5 + $0x110] sm:$0xff]
    %v3772 = vld [vmem:[#allocation5 + $0x118] sm:$0xff]
    %v3773 = vld [vmem:[#allocation5 + $0x120] sm:$0xff]
    %v3774 = vld [vmem:[#allocation5 + $0x128] sm:$0xff]
    %v3775 = vld [vmem:[#allocation5 + $0x130] sm:$0xff]
    %v3776 = vld [vmem:[#allocation5 + $0x138] sm:$0xff]
    %v3777 = vld [vmem:[#allocation5 + $0x140] sm:$0xff]
    %v3778 = vld [vmem:[#allocation5 + $0x148] sm:$0xff]
    %v3779 = vld [vmem:[#allocation5 + $0x150] sm:$0xff]
    %v3780 = vld [vmem:[#allocation5 + $0x158] sm:$0xff]
    %v3781 = vld [vmem:[#allocation5 + $0x160] sm:$0xff]
    %v3782 = vld [vmem:[#allocation5 + $0x168] sm:$0xff]
    %v3783 = vld [vmem:[#allocation5 + $0x170] sm:$0xff]
    %v3784 = vld [vmem:[#allocation5 + $0x178] sm:$0xff]
    %v3785 = vld [vmem:[#allocation5 + $0x180] sm:$0xff]
    %v3786 = vld [vmem:[#allocation5 + $0x188] sm:$0xff]
    %v3787 = vld [vmem:[#allocation5 + $0x190] sm:$0xff]
    %v3788 = vld [vmem:[#allocation5 + $0x198] sm:$0xff]
    %v3789 = vld [vmem:[#allocation5 + $0x1a0] sm:$0xff]
    %v3790 = vld [vmem:[#allocation5 + $0x1a8] sm:$0xff]
    %v3791 = vld [vmem:[#allocation5 + $0x1b0] sm:$0xff]
    %v3792 = vld [vmem:[#allocation5 + $0x1b8] sm:$0xff]
    %v3793 = vld [vmem:[#allocation5 + $0x1c0] sm:$0xff]
    %v3794 = vld [vmem:[#allocation5 + $0x1c8] sm:$0xff]
    %v3795 = vld [vmem:[#allocation5 + $0x1d0] sm:$0xff]
    %v3796 = vld [vmem:[#allocation5 + $0x1d8] sm:$0xff]
    %v3797 = vld [vmem:[#allocation5 + $0x1e0] sm:$0xff]
    %v3798 = vld [vmem:[#allocation5 + $0x1e8] sm:$0xff]
    %v3799 = vld [vmem:[#allocation5 + $0x1f0] sm:$0xff]
    %v3800 = vld [vmem:[#allocation5 + $0x1f8] sm:$0xff]
    %v3801 = vld [vmem:[%s5] sm:$0xf]
    %v3803 = vperm.slane %v3801, 0
    %v3804 = vperm.slane %v3801, 1
    %v3805 = vperm.slane %v3801, 2
    %v3806 = vperm.slane %v3801, 3
    %v3875 = vunpack.c.l.b16 %v3737
    %v3876 = vunpack.c.h.b16 %v3737
    %v3877 = vunpack.c.l.b16 %v3738
    %v3878 = vunpack.c.h.b16 %v3738
    %v3879 = vunpack.c.l.b16 %v3739
    %v3880 = vunpack.c.h.b16 %v3739
    %v3881 = vunpack.c.l.b16 %v3740
    %v3882 = vunpack.c.h.b16 %v3740
    %v3883 = vunpack.c.l.b16 %v3741
    %v3884 = vunpack.c.h.b16 %v3741
    %v3885 = vunpack.c.l.b16 %v3742
    %v3886 = vunpack.c.h.b16 %v3742
    %v3887 = vunpack.c.l.b16 %v3743
    %v3888 = vunpack.c.h.b16 %v3743
    %v3889 = vunpack.c.l.b16 %v3744
    %v3890 = vunpack.c.h.b16 %v3744
    %v3891 = vunpack.c.l.b16 %v3745
    %v3892 = vunpack.c.h.b16 %v3745
    %v3893 = vunpack.c.l.b16 %v3746
    %v3894 = vunpack.c.h.b16 %v3746
    %v3895 = vunpack.c.l.b16 %v3747
    %v3896 = vunpack.c.h.b16 %v3747
    %v3897 = vunpack.c.l.b16 %v3748
    %v3898 = vunpack.c.h.b16 %v3748
    %v3899 = vunpack.c.l.b16 %v3749
    %v3900 = vunpack.c.h.b16 %v3749
    %v3901 = vunpack.c.l.b16 %v3750
    %v3902 = vunpack.c.h.b16 %v3750
    %v3903 = vunpack.c.l.b16 %v3751
    %v3904 = vunpack.c.h.b16 %v3751
    %v3905 = vunpack.c.l.b16 %v3752
    %v3906 = vunpack.c.h.b16 %v3752
    %v3907 = vunpack.c.l.b16 %v3753
    %v3908 = vunpack.c.h.b16 %v3753
    %v3909 = vunpack.c.l.b16 %v3754
    %v3910 = vunpack.c.h.b16 %v3754
    %v3911 = vunpack.c.l.b16 %v3755
    %v3912 = vunpack.c.h.b16 %v3755
    %v3913 = vunpack.c.l.b16 %v3756
    %v3914 = vunpack.c.h.b16 %v3756
    %v3915 = vunpack.c.l.b16 %v3757
    %v3916 = vunpack.c.h.b16 %v3757
    %v3917 = vunpack.c.l.b16 %v3758
    %v3918 = vunpack.c.h.b16 %v3758
    %v3919 = vunpack.c.l.b16 %v3759
    %v3920 = vunpack.c.h.b16 %v3759
    %v3921 = vunpack.c.l.b16 %v3760
    %v3922 = vunpack.c.h.b16 %v3760
    %v3923 = vunpack.c.l.b16 %v3761
    %v3924 = vunpack.c.h.b16 %v3761
    %v3925 = vunpack.c.l.b16 %v3762
    %v3926 = vunpack.c.h.b16 %v3762
    %v3927 = vunpack.c.l.b16 %v3763
    %v3928 = vunpack.c.h.b16 %v3763
    %v3929 = vunpack.c.l.b16 %v3764
    %v3930 = vunpack.c.h.b16 %v3764
    %v3931 = vunpack.c.l.b16 %v3765
    %v3932 = vunpack.c.h.b16 %v3765
    %v3933 = vunpack.c.l.b16 %v3766
    %v3934 = vunpack.c.h.b16 %v3766
    %v3935 = vunpack.c.l.b16 %v3767
    %v3936 = vunpack.c.h.b16 %v3767
    %v3937 = vunpack.c.l.b16 %v3768
    %v3938 = vunpack.c.h.b16 %v3768
    %v3939 = vunpack.c.l.b16 %v3769
    %v3940 = vunpack.c.h.b16 %v3769
    %v3941 = vunpack.c.l.b16 %v3770
    %v3942 = vunpack.c.h.b16 %v3770
    %v3943 = vunpack.c.l.b16 %v3771
    %v3944 = vunpack.c.h.b16 %v3771
    %v3945 = vunpack.c.l.b16 %v3772
    %v3946 = vunpack.c.h.b16 %v3772
    %v3947 = vunpack.c.l.b16 %v3773
    %v3948 = vunpack.c.h.b16 %v3773
    %v3949 = vunpack.c.l.b16 %v3774
    %v3950 = vunpack.c.h.b16 %v3774
    %v3951 = vunpack.c.l.b16 %v3775
    %v3952 = vunpack.c.h.b16 %v3775
    %v3953 = vunpack.c.l.b16 %v3776
    %v3954 = vunpack.c.h.b16 %v3776
    %v3955 = vunpack.c.l.b16 %v3777
    %v3956 = vunpack.c.h.b16 %v3777
    %v3957 = vunpack.c.l.b16 %v3778
    %v3958 = vunpack.c.h.b16 %v3778
    %v3959 = vunpack.c.l.b16 %v3779
    %v3960 = vunpack.c.h.b16 %v3779
    %v3961 = vunpack.c.l.b16 %v3780
    %v3962 = vunpack.c.h.b16 %v3780
    %v3963 = vunpack.c.l.b16 %v3781
    %v3964 = vunpack.c.h.b16 %v3781
    %v3965 = vunpack.c.l.b16 %v3782
    %v3966 = vunpack.c.h.b16 %v3782
    %v3967 = vunpack.c.l.b16 %v3783
    %v3968 = vunpack.c.h.b16 %v3783
    %v3969 = vunpack.c.l.b16 %v3784
    %v3970 = vunpack.c.h.b16 %v3784
    %v3971 = vunpack.c.l.b16 %v3785
    %v3972 = vunpack.c.h.b16 %v3785
    %v3973 = vunpack.c.l.b16 %v3786
    %v3974 = vunpack.c.h.b16 %v3786
    %v3975 = vunpack.c.l.b16 %v3787
    %v3976 = vunpack.c.h.b16 %v3787
    %v3977 = vunpack.c.l.b16 %v3788
    %v3978 = vunpack.c.h.b16 %v3788
    %v3979 = vunpack.c.l.b16 %v3789
    %v3980 = vunpack.c.h.b16 %v3789
    %v3981 = vunpack.c.l.b16 %v3790
    %v3982 = vunpack.c.h.b16 %v3790
    %v3983 = vunpack.c.l.b16 %v3791
    %v3984 = vunpack.c.h.b16 %v3791
    %v3985 = vunpack.c.l.b16 %v3792
    %v3986 = vunpack.c.h.b16 %v3792
    %v3987 = vunpack.c.l.b16 %v3793
    %v3988 = vunpack.c.h.b16 %v3793
    %v3989 = vunpack.c.l.b16 %v3794
    %v3990 = vunpack.c.h.b16 %v3794
    %v3991 = vunpack.c.l.b16 %v3795
    %v3992 = vunpack.c.h.b16 %v3795
    %v3993 = vunpack.c.l.b16 %v3796
    %v3994 = vunpack.c.h.b16 %v3796
    %v3995 = vunpack.c.l.b16 %v3797
    %v3996 = vunpack.c.h.b16 %v3797
    %v3997 = vunpack.c.l.b16 %v3798
    %v3998 = vunpack.c.h.b16 %v3798
    %v3999 = vunpack.c.l.b16 %v3799
    %v4000 = vunpack.c.h.b16 %v3799
    %v4001 = vunpack.c.l.b16 %v3800
    %v4002 = vunpack.c.h.b16 %v3800
    %v4003 = vpack.c.b16 %v3879, %v3875
    %v4004 = vpack.c.b16 %v3880, %v3876
    %v4005 = vpack.c.b16 %v3881, %v3877
    %v4006 = vpack.c.b16 %v3882, %v3878
    %v4007 = vpack.c.b16 %v3887, %v3883
    %v4008 = vpack.c.b16 %v3888, %v3884
    %v4009 = vpack.c.b16 %v3889, %v3885
    %v4010 = vpack.c.b16 %v3890, %v3886
    %v4011 = vpack.c.b16 %v3895, %v3891
    %v4012 = vpack.c.b16 %v3896, %v3892
    %v4013 = vpack.c.b16 %v3897, %v3893
    %v4014 = vpack.c.b16 %v3898, %v3894
    %v4015 = vpack.c.b16 %v3903, %v3899
    %v4016 = vpack.c.b16 %v3904, %v3900
    %v4017 = vpack.c.b16 %v3905, %v3901
    %v4018 = vpack.c.b16 %v3906, %v3902
    %v4019 = vpack.c.b16 %v3911, %v3907
    %v4020 = vpack.c.b16 %v3912, %v3908
    %v4021 = vpack.c.b16 %v3913, %v3909
    %v4022 = vpack.c.b16 %v3914, %v3910
    %v4023 = vpack.c.b16 %v3919, %v3915
    %v4024 = vpack.c.b16 %v3920, %v3916
    %v4025 = vpack.c.b16 %v3921, %v3917
    %v4026 = vpack.c.b16 %v3922, %v3918
    %v4027 = vpack.c.b16 %v3927, %v3923
    %v4028 = vpack.c.b16 %v3928, %v3924
    %v4029 = vpack.c.b16 %v3929, %v3925
    %v4030 = vpack.c.b16 %v3930, %v3926
    %v4031 = vpack.c.b16 %v3935, %v3931
    %v4032 = vpack.c.b16 %v3936, %v3932
    %v4033 = vpack.c.b16 %v3937, %v3933
    %v4034 = vpack.c.b16 %v3938, %v3934
    %v4035 = vpack.c.b16 %v3943, %v3939
    %v4036 = vpack.c.b16 %v3944, %v3940
    %v4037 = vpack.c.b16 %v3945, %v3941
    %v4038 = vpack.c.b16 %v3946, %v3942
    %v4039 = vpack.c.b16 %v3951, %v3947
    %v4040 = vpack.c.b16 %v3952, %v3948
    %v4041 = vpack.c.b16 %v3953, %v3949
    %v4042 = vpack.c.b16 %v3954, %v3950
    %v4043 = vpack.c.b16 %v3959, %v3955
    %v4044 = vpack.c.b16 %v3960, %v3956
    %v4045 = vpack.c.b16 %v3961, %v3957
    %v4046 = vpack.c.b16 %v3962, %v3958
    %v4047 = vpack.c.b16 %v3967, %v3963
    %v4048 = vpack.c.b16 %v3968, %v3964
    %v4049 = vpack.c.b16 %v3969, %v3965
    %v4050 = vpack.c.b16 %v3970, %v3966
    %v4051 = vpack.c.b16 %v3975, %v3971
    %v4052 = vpack.c.b16 %v3976, %v3972
    %v4053 = vpack.c.b16 %v3977, %v3973
    %v4054 = vpack.c.b16 %v3978, %v3974
    %v4055 = vpack.c.b16 %v3983, %v3979
    %v4056 = vpack.c.b16 %v3984, %v3980
    %v4057 = vpack.c.b16 %v3985, %v3981
    %v4058 = vpack.c.b16 %v3986, %v3982
    %v4059 = vpack.c.b16 %v3991, %v3987
    %v4060 = vpack.c.b16 %v3992, %v3988
    %v4061 = vpack.c.b16 %v3993, %v3989
    %v4062 = vpack.c.b16 %v3994, %v3990
    %v4063 = vpack.c.b16 %v3999, %v3995
    %v4064 = vpack.c.b16 %v4000, %v3996
    %v4065 = vpack.c.b16 %v4001, %v3997
    %v4066 = vpack.c.b16 %v4002, %v3998
    %4131 = vmatpush.bf16.msra.mxu0 %v4031
    %4132 = vmatpush.bf16.msra.mxu0 %v4027
    %4133 = vmatpush.bf16.msra.mxu0 %v4023
    %4134 = vmatpush.bf16.msra.mxu0 %v4019
    %4135 = vmatpush.bf16.msra.mxu0 %v4015
    %4136 = vmatpush.bf16.msra.mxu0 %v4011
    %4137 = vmatpush.bf16.msra.mxu0 %v4007
    %4138 = vmatpush.bf16.msra.mxu0 %v4003
    %4139 = vmatmul.bf16.gmra.mxu0 %v3483
    %v4140 = vpop.f32.mrf.mxu0
    %v4141 = vadd.f32 %v3803, %v4140
    %v4142 = vpop.f32.mrf.mxu0
    %4143 = vdwg.mxu0
    %4144 = vmatpush.bf16.msra.mxu0 %v4063
    %4145 = vmatpush.bf16.msra.mxu0 %v4059
    %4146 = vmatpush.bf16.msra.mxu0 %v4055
    %4147 = vmatpush.bf16.msra.mxu0 %v4051
    %4148 = vmatpush.bf16.msra.mxu0 %v4047
    %4149 = vmatpush.bf16.msra.mxu0 %v4043
    %4150 = vmatpush.bf16.msra.mxu0 %v4039
    %4151 = vmatpush.bf16.msra.mxu0 %v4035
    %4152 = vmatmul.bf16.gmra.mxu0 %v3484
    %v4153 = vpop.f32.mrf.mxu0
    %v4154 = vadd.f32 %v4141, %v4153
    %v4155 = vpop.f32.mrf.mxu0
    %4156 = vdwg.mxu0
    %4157 = vmatpush.bf16.msra.mxu0 %v4032
    %4158 = vmatpush.bf16.msra.mxu0 %v4028
    %4159 = vmatpush.bf16.msra.mxu0 %v4024
    %4160 = vmatpush.bf16.msra.mxu0 %v4020
    %4161 = vmatpush.bf16.msra.mxu0 %v4016
    %4162 = vmatpush.bf16.msra.mxu0 %v4012
    %4163 = vmatpush.bf16.msra.mxu0 %v4008
    %4164 = vmatpush.bf16.msra.mxu0 %v4004
    %4165 = vmatmul.bf16.gmra.mxu0 %v3483
    %v4166 = vpop.f32.mrf.mxu0
    %v4167 = vadd.f32 %v3804, %v4166
    %v4168 = vpop.f32.mrf.mxu0
    %4169 = vdwg.mxu0
    %4170 = vmatpush.bf16.msra.mxu0 %v4064
    %4171 = vmatpush.bf16.msra.mxu0 %v4060
    %4172 = vmatpush.bf16.msra.mxu0 %v4056
    %4173 = vmatpush.bf16.msra.mxu0 %v4052
    %4174 = vmatpush.bf16.msra.mxu0 %v4048
    %4175 = vmatpush.bf16.msra.mxu0 %v4044
    %4176 = vmatpush.bf16.msra.mxu0 %v4040
    %4177 = vmatpush.bf16.msra.mxu0 %v4036
    %4178 = vmatmul.bf16.gmra.mxu0 %v3484
    %v4179 = vpop.f32.mrf.mxu0
    %v4180 = vadd.f32 %v4167, %v4179
    %v4181 = vpop.f32.mrf.mxu0
    %4182 = vdwg.mxu0
    %4183 = vmatpush.bf16.msra.mxu0 %v4033
    %4184 = vmatpush.bf16.msra.mxu0 %v4029
    %4185 = vmatpush.bf16.msra.mxu0 %v4025
    %4186 = vmatpush.bf16.msra.mxu0 %v4021
    %4187 = vmatpush.bf16.msra.mxu0 %v4017
    %4188 = vmatpush.bf16.msra.mxu0 %v4013
    %4189 = vmatpush.bf16.msra.mxu0 %v4009
    %4190 = vmatpush.bf16.msra.mxu0 %v4005
    %4191 = vmatmul.bf16.gmra.mxu0 %v3483
    %v4192 = vpop.f32.mrf.mxu0
    %v4193 = vadd.f32 %v3805, %v4192
    %v4194 = vpop.f32.mrf.mxu0
    %4195 = vdwg.mxu0
    %4196 = vmatpush.bf16.msra.mxu0 %v4065
    %4197 = vmatpush.bf16.msra.mxu0 %v4061
    %4198 = vmatpush.bf16.msra.mxu0 %v4057
    %4199 = vmatpush.bf16.msra.mxu0 %v4053
    %4200 = vmatpush.bf16.msra.mxu0 %v4049
    %4201 = vmatpush.bf16.msra.mxu0 %v4045
    %4202 = vmatpush.bf16.msra.mxu0 %v4041
    %4203 = vmatpush.bf16.msra.mxu0 %v4037
    %4204 = vmatmul.bf16.gmra.mxu0 %v3484
    %v4205 = vpop.f32.mrf.mxu0
    %v4206 = vadd.f32 %v4193, %v4205
    %v4207 = vpop.f32.mrf.mxu0
    %4208 = vdwg.mxu0
    %4209 = vmatpush.bf16.msra.mxu0 %v4034
    %4210 = vmatpush.bf16.msra.mxu0 %v4030
    %4211 = vmatpush.bf16.msra.mxu0 %v4026
    %4212 = vmatpush.bf16.msra.mxu0 %v4022
    %4213 = vmatpush.bf16.msra.mxu0 %v4018
    %4214 = vmatpush.bf16.msra.mxu0 %v4014
    %4215 = vmatpush.bf16.msra.mxu0 %v4010
    %4216 = vmatpush.bf16.msra.mxu0 %v4006
    %4217 = vmatmul.bf16.gmra.mxu0 %v3483
    %v4218 = vpop.f32.mrf.mxu0
    %v4219 = vadd.f32 %v3806, %v4218
    %v4220 = vpop.f32.mrf.mxu0
    %4221 = vdwg.mxu0
    %4222 = vmatpush.bf16.msra.mxu0 %v4066
    %4223 = vmatpush.bf16.msra.mxu0 %v4062
    %4224 = vmatpush.bf16.msra.mxu0 %v4058
    %4225 = vmatpush.bf16.msra.mxu0 %v4054
    %4226 = vmatpush.bf16.msra.mxu0 %v4050
    %4227 = vmatpush.bf16.msra.mxu0 %v4046
    %4228 = vmatpush.bf16.msra.mxu0 %v4042
    %4229 = vmatpush.bf16.msra.mxu0 %v4038
    %4230 = vmatmul.bf16.gmra.mxu0 %v3484
    %v4231 = vpop.f32.mrf.mxu0
    %v4232 = vadd.f32 %v4219, %v4231
    %v4233 = vpop.f32.mrf.mxu0
    %4234 = vdwg.mxu0
    %v4235 = vmul.f32 %v3733, 0.5
    %v4236 = vmul.f32 %v3734, 0.5
    %v4237 = vmul.f32 %v3735, 0.5
    %v4238 = vtanh.pop %v4235
    %v4239 = vtanh.pop %v4236
    %v4240 = vtanh.pop %v4237
    %v4241 = vmul.f32 %v4238, 0.5
    %v4242 = vmul.f32 %v4239, 0.5
    %v4243 = vmul.f32 %v4240, 0.5
    %v4244 = vadd.f32 %v4241, 0.5
    %v4245 = vadd.f32 %v4242, 0.5
    %v4246 = vadd.f32 %v4243, 0.5
    %v4247 = vtanh.pop %v3736
    %v4248 = vmul.f32 %v4245, %v3460
    %v4249 = vmul.f32 %v4244, %v4247
    %v4250 = vadd.f32 %v4248, %v4249
    %v4251 = vtanh.pop %v4250
    %v4252 = vmul.f32 %v4246, %v4251
    %v4253 = vmul.f32 %v4154, 0.5
    %v4254 = vmul.f32 %v4180, 0.5
    %v4255 = vmul.f32 %v4206, 0.5
    %v4256 = vtanh.pop %v4253
    %v4257 = vtanh.pop %v4254
    %v4258 = vtanh.pop %v4255
    %v4259 = vmul.f32 %v4256, 0.5
    %v4260 = vmul.f32 %v4257, 0.5
    %v4261 = vmul.f32 %v4258, 0.5
    %v4262 = vadd.f32 %v4259, 0.5
    %v4263 = vadd.f32 %v4260, 0.5
    %v4264 = vadd.f32 %v4261, 0.5
    %v4265 = vtanh.pop %v4232
    %v4266 = vmul.f32 %v4263, %v3478
    %v4267 = vmul.f32 %v4262, %v4265
    %v4268 = vadd.f32 %v4266, %v4267
    %v4269 = vtanh.pop %v4268
    %v4270 = vmul.f32 %v4264, %v4269
    %s4271 = scalar_lea.vmem %s6, 32
    %4272 = vst [vmem:[%s4271] sm:$0xff] %v4270
    %v4273 = vpack.c.bf16 %v4252, %v4252
    %v4274 = vpack.c.bf16 %v4270, %v4270
    %v4275 = vld [vmem:[#allocation2 + $0xc0] sm:$0xff]
    %v4276 = vld [vmem:[#allocation2 + $0xc8] sm:$0xff]
    %v4277 = vld [vmem:[#allocation2 + $0xd0] sm:$0xff]
    %v4278 = vld [vmem:[#allocation2 + $0xd8] sm:$0xff]
    %v4279 = vld [vmem:[#allocation3] sm:$0xff]
    %v4280 = vld [vmem:[#allocation3 + $0x8] sm:$0xff]
    %v4281 = vld [vmem:[#allocation3 + $0x10] sm:$0xff]
    %v4282 = vld [vmem:[#allocation3 + $0x18] sm:$0xff]
    %v4283 = vld [vmem:[#allocation3 + $0x20] sm:$0xff]
    %v4284 = vld [vmem:[#allocation3 + $0x28] sm:$0xff]
    %v4285 = vld [vmem:[#allocation3 + $0x30] sm:$0xff]
    %v4286 = vld [vmem:[#allocation3 + $0x38] sm:$0xff]
    %v4287 = vld [vmem:[#allocation3 + $0x40] sm:$0xff]
    %v4288 = vld [vmem:[#allocation3 + $0x48] sm:$0xff]
    %v4289 = vld [vmem:[#allocation3 + $0x50] sm:$0xff]
    %v4290 = vld [vmem:[#allocation3 + $0x58] sm:$0xff]
    %v4291 = vld [vmem:[#allocation3 + $0x60] sm:$0xff]
    %v4292 = vld [vmem:[#allocation3 + $0x68] sm:$0xff]
    %v4293 = vld [vmem:[#allocation3 + $0x70] sm:$0xff]
    %v4294 = vld [vmem:[#allocation3 + $0x78] sm:$0xff]
    %v4295 = vld [vmem:[#allocation3 + $0x80] sm:$0xff]
    %v4296 = vld [vmem:[#allocation3 + $0x88] sm:$0xff]
    %v4297 = vld [vmem:[#allocation3 + $0x90] sm:$0xff]
    %v4298 = vld [vmem:[#allocation3 + $0x98] sm:$0xff]
    %v4299 = vld [vmem:[#allocation3 + $0xa0] sm:$0xff]
    %v4300 = vld [vmem:[#allocation3 + $0xa8] sm:$0xff]
    %v4301 = vld [vmem:[#allocation3 + $0xb0] sm:$0xff]
    %v4302 = vld [vmem:[#allocation3 + $0xb8] sm:$0xff]
    %v4303 = vld [vmem:[#allocation3 + $0xc0] sm:$0xff]
    %v4304 = vld [vmem:[#allocation3 + $0xc8] sm:$0xff]
    %v4305 = vld [vmem:[#allocation3 + $0xd0] sm:$0xff]
    %v4306 = vld [vmem:[#allocation3 + $0xd8] sm:$0xff]
    %v4307 = vld [vmem:[#allocation3 + $0xe0] sm:$0xff]
    %v4308 = vld [vmem:[#allocation3 + $0xe8] sm:$0xff]
    %v4309 = vld [vmem:[#allocation3 + $0xf0] sm:$0xff]
    %v4310 = vld [vmem:[#allocation3 + $0xf8] sm:$0xff]
    %v4343 = vunpack.c.l.b16 %v4279
    %v4344 = vunpack.c.h.b16 %v4279
    %v4345 = vunpack.c.l.b16 %v4280
    %v4346 = vunpack.c.h.b16 %v4280
    %v4347 = vunpack.c.l.b16 %v4281
    %v4348 = vunpack.c.h.b16 %v4281
    %v4349 = vunpack.c.l.b16 %v4282
    %v4350 = vunpack.c.h.b16 %v4282
    %v4351 = vunpack.c.l.b16 %v4283
    %v4352 = vunpack.c.h.b16 %v4283
    %v4353 = vunpack.c.l.b16 %v4284
    %v4354 = vunpack.c.h.b16 %v4284
    %v4355 = vunpack.c.l.b16 %v4285
    %v4356 = vunpack.c.h.b16 %v4285
    %v4357 = vunpack.c.l.b16 %v4286
    %v4358 = vunpack.c.h.b16 %v4286
    %v4359 = vunpack.c.l.b16 %v4287
    %v4360 = vunpack.c.h.b16 %v4287
    %v4361 = vunpack.c.l.b16 %v4288
    %v4362 = vunpack.c.h.b16 %v4288
    %v4363 = vunpack.c.l.b16 %v4289
    %v4364 = vunpack.c.h.b16 %v4289
    %v4365 = vunpack.c.l.b16 %v4290
    %v4366 = vunpack.c.h.b16 %v4290
    %v4367 = vunpack.c.l.b16 %v4291
    %v4368 = vunpack.c.h.b16 %v4291
    %v4369 = vunpack.c.l.b16 %v4292
    %v4370 = vunpack.c.h.b16 %v4292
    %v4371 = vunpack.c.l.b16 %v4293
    %v4372 = vunpack.c.h.b16 %v4293
    %v4373 = vunpack.c.l.b16 %v4294
    %v4374 = vunpack.c.h.b16 %v4294
    %v4375 = vunpack.c.l.b16 %v4295
    %v4376 = vunpack.c.h.b16 %v4295
    %v4377 = vunpack.c.l.b16 %v4296
    %v4378 = vunpack.c.h.b16 %v4296
    %v4379 = vunpack.c.l.b16 %v4297
    %v4380 = vunpack.c.h.b16 %v4297
    %v4381 = vunpack.c.l.b16 %v4298
    %v4382 = vunpack.c.h.b16 %v4298
    %v4383 = vunpack.c.l.b16 %v4299
    %v4384 = vunpack.c.h.b16 %v4299
    %v4385 = vunpack.c.l.b16 %v4300
    %v4386 = vunpack.c.h.b16 %v4300
    %v4387 = vunpack.c.l.b16 %v4301
    %v4388 = vunpack.c.h.b16 %v4301
    %v4389 = vunpack.c.l.b16 %v4302
    %v4390 = vunpack.c.h.b16 %v4302
    %v4391 = vunpack.c.l.b16 %v4303
    %v4392 = vunpack.c.h.b16 %v4303
    %v4393 = vunpack.c.l.b16 %v4304
    %v4394 = vunpack.c.h.b16 %v4304
    %v4395 = vunpack.c.l.b16 %v4305
    %v4396 = vunpack.c.h.b16 %v4305
    %v4397 = vunpack.c.l.b16 %v4306
    %v4398 = vunpack.c.h.b16 %v4306
    %v4399 = vunpack.c.l.b16 %v4307
    %v4400 = vunpack.c.h.b16 %v4307
    %v4401 = vunpack.c.l.b16 %v4308
    %v4402 = vunpack.c.h.b16 %v4308
    %v4403 = vunpack.c.l.b16 %v4309
    %v4404 = vunpack.c.h.b16 %v4309
    %v4405 = vunpack.c.l.b16 %v4310
    %v4406 = vunpack.c.h.b16 %v4310
    %v4407 = vpack.c.b16 %v4347, %v4343
    %v4408 = vpack.c.b16 %v4348, %v4344
    %v4409 = vpack.c.b16 %v4349, %v4345
    %v4410 = vpack.c.b16 %v4350, %v4346
    %v4411 = vpack.c.b16 %v4355, %v4351
    %v4412 = vpack.c.b16 %v4356, %v4352
    %v4413 = vpack.c.b16 %v4357, %v4353
    %v4414 = vpack.c.b16 %v4358, %v4354
    %v4415 = vpack.c.b16 %v4363, %v4359
    %v4416 = vpack.c.b16 %v4364, %v4360
    %v4417 = vpack.c.b16 %v4365, %v4361
    %v4418 = vpack.c.b16 %v4366, %v4362
    %v4419 = vpack.c.b16 %v4371, %v4367
    %v4420 = vpack.c.b16 %v4372, %v4368
    %v4421 = vpack.c.b16 %v4373, %v4369
    %v4422 = vpack.c.b16 %v4374, %v4370
    %v4423 = vpack.c.b16 %v4379, %v4375
    %v4424 = vpack.c.b16 %v4380, %v4376
    %v4425 = vpack.c.b16 %v4381, %v4377
    %v4426 = vpack.c.b16 %v4382, %v4378
    %v4427 = vpack.c.b16 %v4387, %v4383
    %v4428 = vpack.c.b16 %v4388, %v4384
    %v4429 = vpack.c.b16 %v4389, %v4385
    %v4430 = vpack.c.b16 %v4390, %v4386
    %v4431 = vpack.c.b16 %v4395, %v4391
    %v4432 = vpack.c.b16 %v4396, %v4392
    %v4433 = vpack.c.b16 %v4397, %v4393
    %v4434 = vpack.c.b16 %v4398, %v4394
    %v4435 = vpack.c.b16 %v4403, %v4399
    %v4436 = vpack.c.b16 %v4404, %v4400
    %v4437 = vpack.c.b16 %v4405, %v4401
    %v4438 = vpack.c.b16 %v4406, %v4402
    %4471 = vmatpush.bf16.msra.mxu0 %v4435
    %4472 = vmatpush.bf16.msra.mxu0 %v4431
    %4473 = vmatpush.bf16.msra.mxu0 %v4427
    %4474 = vmatpush.bf16.msra.mxu0 %v4423
    %4475 = vmatpush.bf16.msra.mxu0 %v4419
    %4476 = vmatpush.bf16.msra.mxu0 %v4415
    %4477 = vmatpush.bf16.msra.mxu0 %v4411
    %4478 = vmatpush.bf16.msra.mxu0 %v4407
    %4479 = vmatmul.bf16.gmra.mxu0 %v4273
    %v4480 = vpop.f32.mrf.mxu0
    %v4481 = vadd.f32 0.0, %v4480
    %v4482 = vpop.f32.mrf.mxu0
    %4483 = vdwg.mxu0
    %4484 = vmatpush.bf16.msra.mxu0 %v4436
    %4485 = vmatpush.bf16.msra.mxu0 %v4432
    %4486 = vmatpush.bf16.msra.mxu0 %v4428
    %4487 = vmatpush.bf16.msra.mxu0 %v4424
    %4488 = vmatpush.bf16.msra.mxu0 %v4420
    %4489 = vmatpush.bf16.msra.mxu0 %v4416
    %4490 = vmatpush.bf16.msra.mxu0 %v4412
    %4491 = vmatpush.bf16.msra.mxu0 %v4408
    %4492 = vmatmul.bf16.gmra.mxu0 %v4273
    %v4493 = vpop.f32.mrf.mxu0
    %v4494 = vadd.f32 0.0, %v4493
    %v4495 = vpop.f32.mrf.mxu0
    %4496 = vdwg.mxu0
    %4497 = vmatpush.bf16.msra.mxu0 %v4437
    %4498 = vmatpush.bf16.msra.mxu0 %v4433
    %4499 = vmatpush.bf16.msra.mxu0 %v4429
    %4500 = vmatpush.bf16.msra.mxu0 %v4425
    %4501 = vmatpush.bf16.msra.mxu0 %v4421
    %4502 = vmatpush.bf16.msra.mxu0 %v4417
    %4503 = vmatpush.bf16.msra.mxu0 %v4413
    %4504 = vmatpush.bf16.msra.mxu0 %v4409
    %4505 = vmatmul.bf16.gmra.mxu0 %v4273
    %v4506 = vpop.f32.mrf.mxu0
    %v4507 = vadd.f32 0.0, %v4506
    %v4508 = vpop.f32.mrf.mxu0
    %4509 = vdwg.mxu0
    %4510 = vmatpush.bf16.msra.mxu0 %v4438
    %4511 = vmatpush.bf16.msra.mxu0 %v4434
    %4512 = vmatpush.bf16.msra.mxu0 %v4430
    %4513 = vmatpush.bf16.msra.mxu0 %v4426
    %4514 = vmatpush.bf16.msra.mxu0 %v4422
    %4515 = vmatpush.bf16.msra.mxu0 %v4418
    %4516 = vmatpush.bf16.msra.mxu0 %v4414
    %4517 = vmatpush.bf16.msra.mxu0 %v4410
    %4518 = vmatmul.bf16.gmra.mxu0 %v4273
    %v4519 = vpop.f32.mrf.mxu0
    %v4520 = vadd.f32 0.0, %v4519
    %v4521 = vpop.f32.mrf.mxu0
    %4522 = vdwg.mxu0
    %v4523 = vadd.f32 %v4275, %v4481
    %v4524 = vadd.f32 %v4276, %v4494
    %v4525 = vadd.f32 %v4277, %v4507
    %v4526 = vadd.f32 %v4278, %v4520
    %v4527 = vld [vmem:[#allocation5] sm:$0xff]
    %v4528 = vld [vmem:[#allocation5 + $0x8] sm:$0xff]
    %v4529 = vld [vmem:[#allocation5 + $0x10] sm:$0xff]
    %v4530 = vld [vmem:[#allocation5 + $0x18] sm:$0xff]
    %v4531 = vld [vmem:[#allocation5 + $0x20] sm:$0xff]
    %v4532 = vld [vmem:[#allocation5 + $0x28] sm:$0xff]
    %v4533 = vld [vmem:[#allocation5 + $0x30] sm:$0xff]
    %v4534 = vld [vmem:[#allocation5 + $0x38] sm:$0xff]
    %v4535 = vld [vmem:[#allocation5 + $0x40] sm:$0xff]
    %v4536 = vld [vmem:[#allocation5 + $0x48] sm:$0xff]
    %v4537 = vld [vmem:[#allocation5 + $0x50] sm:$0xff]
    %v4538 = vld [vmem:[#allocation5 + $0x58] sm:$0xff]
    %v4539 = vld [vmem:[#allocation5 + $0x60] sm:$0xff]
    %v4540 = vld [vmem:[#allocation5 + $0x68] sm:$0xff]
    %v4541 = vld [vmem:[#allocation5 + $0x70] sm:$0xff]
    %v4542 = vld [vmem:[#allocation5 + $0x78] sm:$0xff]
    %v4543 = vld [vmem:[#allocation5 + $0x80] sm:$0xff]
    %v4544 = vld [vmem:[#allocation5 + $0x88] sm:$0xff]
    %v4545 = vld [vmem:[#allocation5 + $0x90] sm:$0xff]
    %v4546 = vld [vmem:[#allocation5 + $0x98] sm:$0xff]
    %v4547 = vld [vmem:[#allocation5 + $0xa0] sm:$0xff]
    %v4548 = vld [vmem:[#allocation5 + $0xa8] sm:$0xff]
    %v4549 = vld [vmem:[#allocation5 + $0xb0] sm:$0xff]
    %v4550 = vld [vmem:[#allocation5 + $0xb8] sm:$0xff]
    %v4551 = vld [vmem:[#allocation5 + $0xc0] sm:$0xff]
    %v4552 = vld [vmem:[#allocation5 + $0xc8] sm:$0xff]
    %v4553 = vld [vmem:[#allocation5 + $0xd0] sm:$0xff]
    %v4554 = vld [vmem:[#allocation5 + $0xd8] sm:$0xff]
    %v4555 = vld [vmem:[#allocation5 + $0xe0] sm:$0xff]
    %v4556 = vld [vmem:[#allocation5 + $0xe8] sm:$0xff]
    %v4557 = vld [vmem:[#allocation5 + $0xf0] sm:$0xff]
    %v4558 = vld [vmem:[#allocation5 + $0xf8] sm:$0xff]
    %v4559 = vld [vmem:[#allocation5 + $0x100] sm:$0xff]
    %v4560 = vld [vmem:[#allocation5 + $0x108] sm:$0xff]
    %v4561 = vld [vmem:[#allocation5 + $0x110] sm:$0xff]
    %v4562 = vld [vmem:[#allocation5 + $0x118] sm:$0xff]
    %v4563 = vld [vmem:[#allocation5 + $0x120] sm:$0xff]
    %v4564 = vld [vmem:[#allocation5 + $0x128] sm:$0xff]
    %v4565 = vld [vmem:[#allocation5 + $0x130] sm:$0xff]
    %v4566 = vld [vmem:[#allocation5 + $0x138] sm:$0xff]
    %v4567 = vld [vmem:[#allocation5 + $0x140] sm:$0xff]
    %v4568 = vld [vmem:[#allocation5 + $0x148] sm:$0xff]
    %v4569 = vld [vmem:[#allocation5 + $0x150] sm:$0xff]
    %v4570 = vld [vmem:[#allocation5 + $0x158] sm:$0xff]
    %v4571 = vld [vmem:[#allocation5 + $0x160] sm:$0xff]
    %v4572 = vld [vmem:[#allocation5 + $0x168] sm:$0xff]
    %v4573 = vld [vmem:[#allocation5 + $0x170] sm:$0xff]
    %v4574 = vld [vmem:[#allocation5 + $0x178] sm:$0xff]
    %v4575 = vld [vmem:[#allocation5 + $0x180] sm:$0xff]
    %v4576 = vld [vmem:[#allocation5 + $0x188] sm:$0xff]
    %v4577 = vld [vmem:[#allocation5 + $0x190] sm:$0xff]
    %v4578 = vld [vmem:[#allocation5 + $0x198] sm:$0xff]
    %v4579 = vld [vmem:[#allocation5 + $0x1a0] sm:$0xff]
    %v4580 = vld [vmem:[#allocation5 + $0x1a8] sm:$0xff]
    %v4581 = vld [vmem:[#allocation5 + $0x1b0] sm:$0xff]
    %v4582 = vld [vmem:[#allocation5 + $0x1b8] sm:$0xff]
    %v4583 = vld [vmem:[#allocation5 + $0x1c0] sm:$0xff]
    %v4584 = vld [vmem:[#allocation5 + $0x1c8] sm:$0xff]
    %v4585 = vld [vmem:[#allocation5 + $0x1d0] sm:$0xff]
    %v4586 = vld [vmem:[#allocation5 + $0x1d8] sm:$0xff]
    %v4587 = vld [vmem:[#allocation5 + $0x1e0] sm:$0xff]
    %v4588 = vld [vmem:[#allocation5 + $0x1e8] sm:$0xff]
    %v4589 = vld [vmem:[#allocation5 + $0x1f0] sm:$0xff]
    %v4590 = vld [vmem:[#allocation5 + $0x1f8] sm:$0xff]
    %v4591 = vld [vmem:[%s5] sm:$0xf]
    %v4593 = vperm.slane %v4591, 0
    %v4594 = vperm.slane %v4591, 1
    %v4595 = vperm.slane %v4591, 2
    %v4596 = vperm.slane %v4591, 3
    %v4665 = vunpack.c.l.b16 %v4527
    %v4666 = vunpack.c.h.b16 %v4527
    %v4667 = vunpack.c.l.b16 %v4528
    %v4668 = vunpack.c.h.b16 %v4528
    %v4669 = vunpack.c.l.b16 %v4529
    %v4670 = vunpack.c.h.b16 %v4529
    %v4671 = vunpack.c.l.b16 %v4530
    %v4672 = vunpack.c.h.b16 %v4530
    %v4673 = vunpack.c.l.b16 %v4531
    %v4674 = vunpack.c.h.b16 %v4531
    %v4675 = vunpack.c.l.b16 %v4532
    %v4676 = vunpack.c.h.b16 %v4532
    %v4677 = vunpack.c.l.b16 %v4533
    %v4678 = vunpack.c.h.b16 %v4533
    %v4679 = vunpack.c.l.b16 %v4534
    %v4680 = vunpack.c.h.b16 %v4534
    %v4681 = vunpack.c.l.b16 %v4535
    %v4682 = vunpack.c.h.b16 %v4535
    %v4683 = vunpack.c.l.b16 %v4536
    %v4684 = vunpack.c.h.b16 %v4536
    %v4685 = vunpack.c.l.b16 %v4537
    %v4686 = vunpack.c.h.b16 %v4537
    %v4687 = vunpack.c.l.b16 %v4538
    %v4688 = vunpack.c.h.b16 %v4538
    %v4689 = vunpack.c.l.b16 %v4539
    %v4690 = vunpack.c.h.b16 %v4539
    %v4691 = vunpack.c.l.b16 %v4540
    %v4692 = vunpack.c.h.b16 %v4540
    %v4693 = vunpack.c.l.b16 %v4541
    %v4694 = vunpack.c.h.b16 %v4541
    %v4695 = vunpack.c.l.b16 %v4542
    %v4696 = vunpack.c.h.b16 %v4542
    %v4697 = vunpack.c.l.b16 %v4543
    %v4698 = vunpack.c.h.b16 %v4543
    %v4699 = vunpack.c.l.b16 %v4544
    %v4700 = vunpack.c.h.b16 %v4544
    %v4701 = vunpack.c.l.b16 %v4545
    %v4702 = vunpack.c.h.b16 %v4545
    %v4703 = vunpack.c.l.b16 %v4546
    %v4704 = vunpack.c.h.b16 %v4546
    %v4705 = vunpack.c.l.b16 %v4547
    %v4706 = vunpack.c.h.b16 %v4547
    %v4707 = vunpack.c.l.b16 %v4548
    %v4708 = vunpack.c.h.b16 %v4548
    %v4709 = vunpack.c.l.b16 %v4549
    %v4710 = vunpack.c.h.b16 %v4549
    %v4711 = vunpack.c.l.b16 %v4550
    %v4712 = vunpack.c.h.b16 %v4550
    %v4713 = vunpack.c.l.b16 %v4551
    %v4714 = vunpack.c.h.b16 %v4551
    %v4715 = vunpack.c.l.b16 %v4552
    %v4716 = vunpack.c.h.b16 %v4552
    %v4717 = vunpack.c.l.b16 %v4553
    %v4718 = vunpack.c.h.b16 %v4553
    %v4719 = vunpack.c.l.b16 %v4554
    %v4720 = vunpack.c.h.b16 %v4554
    %v4721 = vunpack.c.l.b16 %v4555
    %v4722 = vunpack.c.h.b16 %v4555
    %v4723 = vunpack.c.l.b16 %v4556
    %v4724 = vunpack.c.h.b16 %v4556
    %v4725 = vunpack.c.l.b16 %v4557
    %v4726 = vunpack.c.h.b16 %v4557
    %v4727 = vunpack.c.l.b16 %v4558
    %v4728 = vunpack.c.h.b16 %v4558
    %v4729 = vunpack.c.l.b16 %v4559
    %v4730 = vunpack.c.h.b16 %v4559
    %v4731 = vunpack.c.l.b16 %v4560
    %v4732 = vunpack.c.h.b16 %v4560
    %v4733 = vunpack.c.l.b16 %v4561
    %v4734 = vunpack.c.h.b16 %v4561
    %v4735 = vunpack.c.l.b16 %v4562
    %v4736 = vunpack.c.h.b16 %v4562
    %v4737 = vunpack.c.l.b16 %v4563
    %v4738 = vunpack.c.h.b16 %v4563
    %v4739 = vunpack.c.l.b16 %v4564
    %v4740 = vunpack.c.h.b16 %v4564
    %v4741 = vunpack.c.l.b16 %v4565
    %v4742 = vunpack.c.h.b16 %v4565
    %v4743 = vunpack.c.l.b16 %v4566
    %v4744 = vunpack.c.h.b16 %v4566
    %v4745 = vunpack.c.l.b16 %v4567
    %v4746 = vunpack.c.h.b16 %v4567
    %v4747 = vunpack.c.l.b16 %v4568
    %v4748 = vunpack.c.h.b16 %v4568
    %v4749 = vunpack.c.l.b16 %v4569
    %v4750 = vunpack.c.h.b16 %v4569
    %v4751 = vunpack.c.l.b16 %v4570
    %v4752 = vunpack.c.h.b16 %v4570
    %v4753 = vunpack.c.l.b16 %v4571
    %v4754 = vunpack.c.h.b16 %v4571
    %v4755 = vunpack.c.l.b16 %v4572
    %v4756 = vunpack.c.h.b16 %v4572
    %v4757 = vunpack.c.l.b16 %v4573
    %v4758 = vunpack.c.h.b16 %v4573
    %v4759 = vunpack.c.l.b16 %v4574
    %v4760 = vunpack.c.h.b16 %v4574
    %v4761 = vunpack.c.l.b16 %v4575
    %v4762 = vunpack.c.h.b16 %v4575
    %v4763 = vunpack.c.l.b16 %v4576
    %v4764 = vunpack.c.h.b16 %v4576
    %v4765 = vunpack.c.l.b16 %v4577
    %v4766 = vunpack.c.h.b16 %v4577
    %v4767 = vunpack.c.l.b16 %v4578
    %v4768 = vunpack.c.h.b16 %v4578
    %v4769 = vunpack.c.l.b16 %v4579
    %v4770 = vunpack.c.h.b16 %v4579
    %v4771 = vunpack.c.l.b16 %v4580
    %v4772 = vunpack.c.h.b16 %v4580
    %v4773 = vunpack.c.l.b16 %v4581
    %v4774 = vunpack.c.h.b16 %v4581
    %v4775 = vunpack.c.l.b16 %v4582
    %v4776 = vunpack.c.h.b16 %v4582
    %v4777 = vunpack.c.l.b16 %v4583
    %v4778 = vunpack.c.h.b16 %v4583
    %v4779 = vunpack.c.l.b16 %v4584
    %v4780 = vunpack.c.h.b16 %v4584
    %v4781 = vunpack.c.l.b16 %v4585
    %v4782 = vunpack.c.h.b16 %v4585
    %v4783 = vunpack.c.l.b16 %v4586
    %v4784 = vunpack.c.h.b16 %v4586
    %v4785 = vunpack.c.l.b16 %v4587
    %v4786 = vunpack.c.h.b16 %v4587
    %v4787 = vunpack.c.l.b16 %v4588
    %v4788 = vunpack.c.h.b16 %v4588
    %v4789 = vunpack.c.l.b16 %v4589
    %v4790 = vunpack.c.h.b16 %v4589
    %v4791 = vunpack.c.l.b16 %v4590
    %v4792 = vunpack.c.h.b16 %v4590
    %v4793 = vpack.c.b16 %v4669, %v4665
    %v4794 = vpack.c.b16 %v4670, %v4666
    %v4795 = vpack.c.b16 %v4671, %v4667
    %v4796 = vpack.c.b16 %v4672, %v4668
    %v4797 = vpack.c.b16 %v4677, %v4673
    %v4798 = vpack.c.b16 %v4678, %v4674
    %v4799 = vpack.c.b16 %v4679, %v4675
    %v4800 = vpack.c.b16 %v4680, %v4676
    %v4801 = vpack.c.b16 %v4685, %v4681
    %v4802 = vpack.c.b16 %v4686, %v4682
    %v4803 = vpack.c.b16 %v4687, %v4683
    %v4804 = vpack.c.b16 %v4688, %v4684
    %v4805 = vpack.c.b16 %v4693, %v4689
    %v4806 = vpack.c.b16 %v4694, %v4690
    %v4807 = vpack.c.b16 %v4695, %v4691
    %v4808 = vpack.c.b16 %v4696, %v4692
    %v4809 = vpack.c.b16 %v4701, %v4697
    %v4810 = vpack.c.b16 %v4702, %v4698
    %v4811 = vpack.c.b16 %v4703, %v4699
    %v4812 = vpack.c.b16 %v4704, %v4700
    %v4813 = vpack.c.b16 %v4709, %v4705
    %v4814 = vpack.c.b16 %v4710, %v4706
    %v4815 = vpack.c.b16 %v4711, %v4707
    %v4816 = vpack.c.b16 %v4712, %v4708
    %v4817 = vpack.c.b16 %v4717, %v4713
    %v4818 = vpack.c.b16 %v4718, %v4714
    %v4819 = vpack.c.b16 %v4719, %v4715
    %v4820 = vpack.c.b16 %v4720, %v4716
    %v4821 = vpack.c.b16 %v4725, %v4721
    %v4822 = vpack.c.b16 %v4726, %v4722
    %v4823 = vpack.c.b16 %v4727, %v4723
    %v4824 = vpack.c.b16 %v4728, %v4724
    %v4825 = vpack.c.b16 %v4733, %v4729
    %v4826 = vpack.c.b16 %v4734, %v4730
    %v4827 = vpack.c.b16 %v4735, %v4731
    %v4828 = vpack.c.b16 %v4736, %v4732
    %v4829 = vpack.c.b16 %v4741, %v4737
    %v4830 = vpack.c.b16 %v4742, %v4738
    %v4831 = vpack.c.b16 %v4743, %v4739
    %v4832 = vpack.c.b16 %v4744, %v4740
    %v4833 = vpack.c.b16 %v4749, %v4745
    %v4834 = vpack.c.b16 %v4750, %v4746
    %v4835 = vpack.c.b16 %v4751, %v4747
    %v4836 = vpack.c.b16 %v4752, %v4748
    %v4837 = vpack.c.b16 %v4757, %v4753
    %v4838 = vpack.c.b16 %v4758, %v4754
    %v4839 = vpack.c.b16 %v4759, %v4755
    %v4840 = vpack.c.b16 %v4760, %v4756
    %v4841 = vpack.c.b16 %v4765, %v4761
    %v4842 = vpack.c.b16 %v4766, %v4762
    %v4843 = vpack.c.b16 %v4767, %v4763
    %v4844 = vpack.c.b16 %v4768, %v4764
    %v4845 = vpack.c.b16 %v4773, %v4769
    %v4846 = vpack.c.b16 %v4774, %v4770
    %v4847 = vpack.c.b16 %v4775, %v4771
    %v4848 = vpack.c.b16 %v4776, %v4772
    %v4849 = vpack.c.b16 %v4781, %v4777
    %v4850 = vpack.c.b16 %v4782, %v4778
    %v4851 = vpack.c.b16 %v4783, %v4779
    %v4852 = vpack.c.b16 %v4784, %v4780
    %v4853 = vpack.c.b16 %v4789, %v4785
    %v4854 = vpack.c.b16 %v4790, %v4786
    %v4855 = vpack.c.b16 %v4791, %v4787
    %v4856 = vpack.c.b16 %v4792, %v4788
    %4921 = vmatpush.bf16.msra.mxu0 %v4821
    %4922 = vmatpush.bf16.msra.mxu0 %v4817
    %4923 = vmatpush.bf16.msra.mxu0 %v4813
    %4924 = vmatpush.bf16.msra.mxu0 %v4809
    %4925 = vmatpush.bf16.msra.mxu0 %v4805
    %4926 = vmatpush.bf16.msra.mxu0 %v4801
    %4927 = vmatpush.bf16.msra.mxu0 %v4797
    %4928 = vmatpush.bf16.msra.mxu0 %v4793
    %4929 = vmatmul.bf16.gmra.mxu0 %v4273
    %v4930 = vpop.f32.mrf.mxu0
    %v4931 = vadd.f32 %v4593, %v4930
    %v4932 = vpop.f32.mrf.mxu0
    %4933 = vdwg.mxu0
    %4934 = vmatpush.bf16.msra.mxu0 %v4853
    %4935 = vmatpush.bf16.msra.mxu0 %v4849
    %4936 = vmatpush.bf16.msra.mxu0 %v4845
    %4937 = vmatpush.bf16.msra.mxu0 %v4841
    %4938 = vmatpush.bf16.msra.mxu0 %v4837
    %4939 = vmatpush.bf16.msra.mxu0 %v4833
    %4940 = vmatpush.bf16.msra.mxu0 %v4829
    %4941 = vmatpush.bf16.msra.mxu0 %v4825
    %4942 = vmatmul.bf16.gmra.mxu0 %v4274
    %v4943 = vpop.f32.mrf.mxu0
    %v4944 = vadd.f32 %v4931, %v4943
    %v4945 = vpop.f32.mrf.mxu0
    %4946 = vdwg.mxu0
    %4947 = vmatpush.bf16.msra.mxu0 %v4822
    %4948 = vmatpush.bf16.msra.mxu0 %v4818
    %4949 = vmatpush.bf16.msra.mxu0 %v4814
    %4950 = vmatpush.bf16.msra.mxu0 %v4810
    %4951 = vmatpush.bf16.msra.mxu0 %v4806
    %4952 = vmatpush.bf16.msra.mxu0 %v4802
    %4953 = vmatpush.bf16.msra.mxu0 %v4798
    %4954 = vmatpush.bf16.msra.mxu0 %v4794
    %4955 = vmatmul.bf16.gmra.mxu0 %v4273
    %v4956 = vpop.f32.mrf.mxu0
    %v4957 = vadd.f32 %v4594, %v4956
    %v4958 = vpop.f32.mrf.mxu0
    %4959 = vdwg.mxu0
    %4960 = vmatpush.bf16.msra.mxu0 %v4854
    %4961 = vmatpush.bf16.msra.mxu0 %v4850
    %4962 = vmatpush.bf16.msra.mxu0 %v4846
    %4963 = vmatpush.bf16.msra.mxu0 %v4842
    %4964 = vmatpush.bf16.msra.mxu0 %v4838
    %4965 = vmatpush.bf16.msra.mxu0 %v4834
    %4966 = vmatpush.bf16.msra.mxu0 %v4830
    %4967 = vmatpush.bf16.msra.mxu0 %v4826
    %4968 = vmatmul.bf16.gmra.mxu0 %v4274
    %v4969 = vpop.f32.mrf.mxu0
    %v4970 = vadd.f32 %v4957, %v4969
    %v4971 = vpop.f32.mrf.mxu0
    %4972 = vdwg.mxu0
    %4973 = vmatpush.bf16.msra.mxu0 %v4823
    %4974 = vmatpush.bf16.msra.mxu0 %v4819
    %4975 = vmatpush.bf16.msra.mxu0 %v4815
    %4976 = vmatpush.bf16.msra.mxu0 %v4811
    %4977 = vmatpush.bf16.msra.mxu0 %v4807
    %4978 = vmatpush.bf16.msra.mxu0 %v4803
    %4979 = vmatpush.bf16.msra.mxu0 %v4799
    %4980 = vmatpush.bf16.msra.mxu0 %v4795
    %4981 = vmatmul.bf16.gmra.mxu0 %v4273
    %v4982 = vpop.f32.mrf.mxu0
    %v4983 = vadd.f32 %v4595, %v4982
    %v4984 = vpop.f32.mrf.mxu0
    %4985 = vdwg.mxu0
    %4986 = vmatpush.bf16.msra.mxu0 %v4855
    %4987 = vmatpush.bf16.msra.mxu0 %v4851
    %4988 = vmatpush.bf16.msra.mxu0 %v4847
    %4989 = vmatpush.bf16.msra.mxu0 %v4843
    %4990 = vmatpush.bf16.msra.mxu0 %v4839
    %4991 = vmatpush.bf16.msra.mxu0 %v4835
    %4992 = vmatpush.bf16.msra.mxu0 %v4831
    %4993 = vmatpush.bf16.msra.mxu0 %v4827
    %4994 = vmatmul.bf16.gmra.mxu0 %v4274
    %v4995 = vpop.f32.mrf.mxu0
    %v4996 = vadd.f32 %v4983, %v4995
    %v4997 = vpop.f32.mrf.mxu0
    %4998 = vdwg.mxu0
    %4999 = vmatpush.bf16.msra.mxu0 %v4824
    %5000 = vmatpush.bf16.msra.mxu0 %v4820
    %5001 = vmatpush.bf16.msra.mxu0 %v4816
    %5002 = vmatpush.bf16.msra.mxu0 %v4812
    %5003 = vmatpush.bf16.msra.mxu0 %v4808
    %5004 = vmatpush.bf16.msra.mxu0 %v4804
    %5005 = vmatpush.bf16.msra.mxu0 %v4800
    %5006 = vmatpush.bf16.msra.mxu0 %v4796
    %5007 = vmatmul.bf16.gmra.mxu0 %v4273
    %v5008 = vpop.f32.mrf.mxu0
    %v5009 = vadd.f32 %v4596, %v5008
    %v5010 = vpop.f32.mrf.mxu0
    %5011 = vdwg.mxu0
    %5012 = vmatpush.bf16.msra.mxu0 %v4856
    %5013 = vmatpush.bf16.msra.mxu0 %v4852
    %5014 = vmatpush.bf16.msra.mxu0 %v4848
    %5015 = vmatpush.bf16.msra.mxu0 %v4844
    %5016 = vmatpush.bf16.msra.mxu0 %v4840
    %5017 = vmatpush.bf16.msra.mxu0 %v4836
    %5018 = vmatpush.bf16.msra.mxu0 %v4832
    %5019 = vmatpush.bf16.msra.mxu0 %v4828
    %5020 = vmatmul.bf16.gmra.mxu0 %v4274
    %v5021 = vpop.f32.mrf.mxu0
    %v5022 = vadd.f32 %v5009, %v5021
    %v5023 = vpop.f32.mrf.mxu0
    %5024 = vdwg.mxu0
    %v5025 = vmul.f32 %v4523, 0.5
    %v5026 = vmul.f32 %v4524, 0.5
    %v5027 = vmul.f32 %v4525, 0.5
    %v5028 = vtanh.pop %v5025
    %v5029 = vtanh.pop %v5026
    %v5030 = vtanh.pop %v5027
    %v5031 = vmul.f32 %v5028, 0.5
    %v5032 = vmul.f32 %v5029, 0.5
    %v5033 = vmul.f32 %v5030, 0.5
    %v5034 = vadd.f32 %v5031, 0.5
    %v5035 = vadd.f32 %v5032, 0.5
    %v5036 = vadd.f32 %v5033, 0.5
    %v5037 = vtanh.pop %v4526
    %v5038 = vmul.f32 %v5035, %v4250
    %v5039 = vmul.f32 %v5034, %v5037
    %v5040 = vadd.f32 %v5038, %v5039
    %v5041 = vtanh.pop %v5040
    %v5042 = vmul.f32 %v5036, %v5041
    %v5043 = vmul.f32 %v4944, 0.5
    %v5044 = vmul.f32 %v4970, 0.5
    %v5045 = vmul.f32 %v4996, 0.5
    %v5046 = vtanh.pop %v5043
    %v5047 = vtanh.pop %v5044
    %v5048 = vtanh.pop %v5045
    %v5049 = vmul.f32 %v5046, 0.5
    %v5050 = vmul.f32 %v5047, 0.5
    %v5051 = vmul.f32 %v5048, 0.5
    %v5052 = vadd.f32 %v5049, 0.5
    %v5053 = vadd.f32 %v5050, 0.5
    %v5054 = vadd.f32 %v5051, 0.5
    %v5055 = vtanh.pop %v5022
    %v5056 = vmul.f32 %v5053, %v4268
    %v5057 = vmul.f32 %v5052, %v5055
    %v5058 = vadd.f32 %v5056, %v5057
    %v5059 = vtanh.pop %v5058
    %v5060 = vmul.f32 %v5054, %v5059
    %s5061 = scalar_lea.vmem %s6, 40
    %5062 = vst [vmem:[%s5061] sm:$0xff] %v5060
    %v5063 = vpack.c.bf16 %v5042, %v5042
    %v5064 = vpack.c.bf16 %v5060, %v5060
    %v5065 = vld [vmem:[#allocation2 + $0xe0] sm:$0xff]
    %v5066 = vld [vmem:[#allocation2 + $0xe8] sm:$0xff]
    %v5067 = vld [vmem:[#allocation2 + $0xf0] sm:$0xff]
    %v5068 = vld [vmem:[#allocation2 + $0xf8] sm:$0xff]
    %v5069 = vld [vmem:[#allocation3] sm:$0xff]
    %v5070 = vld [vmem:[#allocation3 + $0x8] sm:$0xff]
    %v5071 = vld [vmem:[#allocation3 + $0x10] sm:$0xff]
    %v5072 = vld [vmem:[#allocation3 + $0x18] sm:$0xff]
    %v5073 = vld [vmem:[#allocation3 + $0x20] sm:$0xff]
    %v5074 = vld [vmem:[#allocation3 + $0x28] sm:$0xff]
    %v5075 = vld [vmem:[#allocation3 + $0x30] sm:$0xff]
    %v5076 = vld [vmem:[#allocation3 + $0x38] sm:$0xff]
    %v5077 = vld [vmem:[#allocation3 + $0x40] sm:$0xff]
    %v5078 = vld [vmem:[#allocation3 + $0x48] sm:$0xff]
    %v5079 = vld [vmem:[#allocation3 + $0x50] sm:$0xff]
    %v5080 = vld [vmem:[#allocation3 + $0x58] sm:$0xff]
    %v5081 = vld [vmem:[#allocation3 + $0x60] sm:$0xff]
    %v5082 = vld [vmem:[#allocation3 + $0x68] sm:$0xff]
    %v5083 = vld [vmem:[#allocation3 + $0x70] sm:$0xff]
    %v5084 = vld [vmem:[#allocation3 + $0x78] sm:$0xff]
    %v5085 = vld [vmem:[#allocation3 + $0x80] sm:$0xff]
    %v5086 = vld [vmem:[#allocation3 + $0x88] sm:$0xff]
    %v5087 = vld [vmem:[#allocation3 + $0x90] sm:$0xff]
    %v5088 = vld [vmem:[#allocation3 + $0x98] sm:$0xff]
    %v5089 = vld [vmem:[#allocation3 + $0xa0] sm:$0xff]
    %v5090 = vld [vmem:[#allocation3 + $0xa8] sm:$0xff]
    %v5091 = vld [vmem:[#allocation3 + $0xb0] sm:$0xff]
    %v5092 = vld [vmem:[#allocation3 + $0xb8] sm:$0xff]
    %v5093 = vld [vmem:[#allocation3 + $0xc0] sm:$0xff]
    %v5094 = vld [vmem:[#allocation3 + $0xc8] sm:$0xff]
    %v5095 = vld [vmem:[#allocation3 + $0xd0] sm:$0xff]
    %v5096 = vld [vmem:[#allocation3 + $0xd8] sm:$0xff]
    %v5097 = vld [vmem:[#allocation3 + $0xe0] sm:$0xff]
    %v5098 = vld [vmem:[#allocation3 + $0xe8] sm:$0xff]
    %v5099 = vld [vmem:[#allocation3 + $0xf0] sm:$0xff]
    %v5100 = vld [vmem:[#allocation3 + $0xf8] sm:$0xff]
    %v5133 = vunpack.c.l.b16 %v5069
    %v5134 = vunpack.c.h.b16 %v5069
    %v5135 = vunpack.c.l.b16 %v5070
    %v5136 = vunpack.c.h.b16 %v5070
    %v5137 = vunpack.c.l.b16 %v5071
    %v5138 = vunpack.c.h.b16 %v5071
    %v5139 = vunpack.c.l.b16 %v5072
    %v5140 = vunpack.c.h.b16 %v5072
    %v5141 = vunpack.c.l.b16 %v5073
    %v5142 = vunpack.c.h.b16 %v5073
    %v5143 = vunpack.c.l.b16 %v5074
    %v5144 = vunpack.c.h.b16 %v5074
    %v5145 = vunpack.c.l.b16 %v5075
    %v5146 = vunpack.c.h.b16 %v5075
    %v5147 = vunpack.c.l.b16 %v5076
    %v5148 = vunpack.c.h.b16 %v5076
    %v5149 = vunpack.c.l.b16 %v5077
    %v5150 = vunpack.c.h.b16 %v5077
    %v5151 = vunpack.c.l.b16 %v5078
    %v5152 = vunpack.c.h.b16 %v5078
    %v5153 = vunpack.c.l.b16 %v5079
    %v5154 = vunpack.c.h.b16 %v5079
    %v5155 = vunpack.c.l.b16 %v5080
    %v5156 = vunpack.c.h.b16 %v5080
    %v5157 = vunpack.c.l.b16 %v5081
    %v5158 = vunpack.c.h.b16 %v5081
    %v5159 = vunpack.c.l.b16 %v5082
    %v5160 = vunpack.c.h.b16 %v5082
    %v5161 = vunpack.c.l.b16 %v5083
    %v5162 = vunpack.c.h.b16 %v5083
    %v5163 = vunpack.c.l.b16 %v5084
    %v5164 = vunpack.c.h.b16 %v5084
    %v5165 = vunpack.c.l.b16 %v5085
    %v5166 = vunpack.c.h.b16 %v5085
    %v5167 = vunpack.c.l.b16 %v5086
    %v5168 = vunpack.c.h.b16 %v5086
    %v5169 = vunpack.c.l.b16 %v5087
    %v5170 = vunpack.c.h.b16 %v5087
    %v5171 = vunpack.c.l.b16 %v5088
    %v5172 = vunpack.c.h.b16 %v5088
    %v5173 = vunpack.c.l.b16 %v5089
    %v5174 = vunpack.c.h.b16 %v5089
    %v5175 = vunpack.c.l.b16 %v5090
    %v5176 = vunpack.c.h.b16 %v5090
    %v5177 = vunpack.c.l.b16 %v5091
    %v5178 = vunpack.c.h.b16 %v5091
    %v5179 = vunpack.c.l.b16 %v5092
    %v5180 = vunpack.c.h.b16 %v5092
    %v5181 = vunpack.c.l.b16 %v5093
    %v5182 = vunpack.c.h.b16 %v5093
    %v5183 = vunpack.c.l.b16 %v5094
    %v5184 = vunpack.c.h.b16 %v5094
    %v5185 = vunpack.c.l.b16 %v5095
    %v5186 = vunpack.c.h.b16 %v5095
    %v5187 = vunpack.c.l.b16 %v5096
    %v5188 = vunpack.c.h.b16 %v5096
    %v5189 = vunpack.c.l.b16 %v5097
    %v5190 = vunpack.c.h.b16 %v5097
    %v5191 = vunpack.c.l.b16 %v5098
    %v5192 = vunpack.c.h.b16 %v5098
    %v5193 = vunpack.c.l.b16 %v5099
    %v5194 = vunpack.c.h.b16 %v5099
    %v5195 = vunpack.c.l.b16 %v5100
    %v5196 = vunpack.c.h.b16 %v5100
    %v5197 = vpack.c.b16 %v5137, %v5133
    %v5198 = vpack.c.b16 %v5138, %v5134
    %v5199 = vpack.c.b16 %v5139, %v5135
    %v5200 = vpack.c.b16 %v5140, %v5136
    %v5201 = vpack.c.b16 %v5145, %v5141
    %v5202 = vpack.c.b16 %v5146, %v5142
    %v5203 = vpack.c.b16 %v5147, %v5143
    %v5204 = vpack.c.b16 %v5148, %v5144
    %v5205 = vpack.c.b16 %v5153, %v5149
    %v5206 = vpack.c.b16 %v5154, %v5150
    %v5207 = vpack.c.b16 %v5155, %v5151
    %v5208 = vpack.c.b16 %v5156, %v5152
    %v5209 = vpack.c.b16 %v5161, %v5157
    %v5210 = vpack.c.b16 %v5162, %v5158
    %v5211 = vpack.c.b16 %v5163, %v5159
    %v5212 = vpack.c.b16 %v5164, %v5160
    %v5213 = vpack.c.b16 %v5169, %v5165
    %v5214 = vpack.c.b16 %v5170, %v5166
    %v5215 = vpack.c.b16 %v5171, %v5167
    %v5216 = vpack.c.b16 %v5172, %v5168
    %v5217 = vpack.c.b16 %v5177, %v5173
    %v5218 = vpack.c.b16 %v5178, %v5174
    %v5219 = vpack.c.b16 %v5179, %v5175
    %v5220 = vpack.c.b16 %v5180, %v5176
    %v5221 = vpack.c.b16 %v5185, %v5181
    %v5222 = vpack.c.b16 %v5186, %v5182
    %v5223 = vpack.c.b16 %v5187, %v5183
    %v5224 = vpack.c.b16 %v5188, %v5184
    %v5225 = vpack.c.b16 %v5193, %v5189
    %v5226 = vpack.c.b16 %v5194, %v5190
    %v5227 = vpack.c.b16 %v5195, %v5191
    %v5228 = vpack.c.b16 %v5196, %v5192
    %5261 = vmatpush.bf16.msra.mxu0 %v5225
    %5262 = vmatpush.bf16.msra.mxu0 %v5221
    %5263 = vmatpush.bf16.msra.mxu0 %v5217
    %5264 = vmatpush.bf16.msra.mxu0 %v5213
    %5265 = vmatpush.bf16.msra.mxu0 %v5209
    %5266 = vmatpush.bf16.msra.mxu0 %v5205
    %5267 = vmatpush.bf16.msra.mxu0 %v5201
    %5268 = vmatpush.bf16.msra.mxu0 %v5197
    %5269 = vmatmul.bf16.gmra.mxu0 %v5063
    %v5270 = vpop.f32.mrf.mxu0
    %v5271 = vadd.f32 0.0, %v5270
    %v5272 = vpop.f32.mrf.mxu0
    %5273 = vdwg.mxu0
    %5274 = vmatpush.bf16.msra.mxu0 %v5226
    %5275 = vmatpush.bf16.msra.mxu0 %v5222
    %5276 = vmatpush.bf16.msra.mxu0 %v5218
    %5277 = vmatpush.bf16.msra.mxu0 %v5214
    %5278 = vmatpush.bf16.msra.mxu0 %v5210
    %5279 = vmatpush.bf16.msra.mxu0 %v5206
    %5280 = vmatpush.bf16.msra.mxu0 %v5202
    %5281 = vmatpush.bf16.msra.mxu0 %v5198
    %5282 = vmatmul.bf16.gmra.mxu0 %v5063
    %v5283 = vpop.f32.mrf.mxu0
    %v5284 = vadd.f32 0.0, %v5283
    %v5285 = vpop.f32.mrf.mxu0
    %5286 = vdwg.mxu0
    %5287 = vmatpush.bf16.msra.mxu0 %v5227
    %5288 = vmatpush.bf16.msra.mxu0 %v5223
    %5289 = vmatpush.bf16.msra.mxu0 %v5219
    %5290 = vmatpush.bf16.msra.mxu0 %v5215
    %5291 = vmatpush.bf16.msra.mxu0 %v5211
    %5292 = vmatpush.bf16.msra.mxu0 %v5207
    %5293 = vmatpush.bf16.msra.mxu0 %v5203
    %5294 = vmatpush.bf16.msra.mxu0 %v5199
    %5295 = vmatmul.bf16.gmra.mxu0 %v5063
    %v5296 = vpop.f32.mrf.mxu0
    %v5297 = vadd.f32 0.0, %v5296
    %v5298 = vpop.f32.mrf.mxu0
    %5299 = vdwg.mxu0
    %5300 = vmatpush.bf16.msra.mxu0 %v5228
    %5301 = vmatpush.bf16.msra.mxu0 %v5224
    %5302 = vmatpush.bf16.msra.mxu0 %v5220
    %5303 = vmatpush.bf16.msra.mxu0 %v5216
    %5304 = vmatpush.bf16.msra.mxu0 %v5212
    %5305 = vmatpush.bf16.msra.mxu0 %v5208
    %5306 = vmatpush.bf16.msra.mxu0 %v5204
    %5307 = vmatpush.bf16.msra.mxu0 %v5200
    %5308 = vmatmul.bf16.gmra.mxu0 %v5063
    %v5309 = vpop.f32.mrf.mxu0
    %v5310 = vadd.f32 0.0, %v5309
    %v5311 = vpop.f32.mrf.mxu0
    %5312 = vdwg.mxu0
    %v5313 = vadd.f32 %v5065, %v5271
    %v5314 = vadd.f32 %v5066, %v5284
    %v5315 = vadd.f32 %v5067, %v5297
    %v5316 = vadd.f32 %v5068, %v5310
    %v5317 = vld [vmem:[#allocation5] sm:$0xff]
    %v5318 = vld [vmem:[#allocation5 + $0x8] sm:$0xff]
    %v5319 = vld [vmem:[#allocation5 + $0x10] sm:$0xff]
    %v5320 = vld [vmem:[#allocation5 + $0x18] sm:$0xff]
    %v5321 = vld [vmem:[#allocation5 + $0x20] sm:$0xff]
    %v5322 = vld [vmem:[#allocation5 + $0x28] sm:$0xff]
    %v5323 = vld [vmem:[#allocation5 + $0x30] sm:$0xff]
    %v5324 = vld [vmem:[#allocation5 + $0x38] sm:$0xff]
    %v5325 = vld [vmem:[#allocation5 + $0x40] sm:$0xff]
    %v5326 = vld [vmem:[#allocation5 + $0x48] sm:$0xff]
    %v5327 = vld [vmem:[#allocation5 + $0x50] sm:$0xff]
    %v5328 = vld [vmem:[#allocation5 + $0x58] sm:$0xff]
    %v5329 = vld [vmem:[#allocation5 + $0x60] sm:$0xff]
    %v5330 = vld [vmem:[#allocation5 + $0x68] sm:$0xff]
    %v5331 = vld [vmem:[#allocation5 + $0x70] sm:$0xff]
    %v5332 = vld [vmem:[#allocation5 + $0x78] sm:$0xff]
    %v5333 = vld [vmem:[#allocation5 + $0x80] sm:$0xff]
    %v5334 = vld [vmem:[#allocation5 + $0x88] sm:$0xff]
    %v5335 = vld [vmem:[#allocation5 + $0x90] sm:$0xff]
    %v5336 = vld [vmem:[#allocation5 + $0x98] sm:$0xff]
    %v5337 = vld [vmem:[#allocation5 + $0xa0] sm:$0xff]
    %v5338 = vld [vmem:[#allocation5 + $0xa8] sm:$0xff]
    %v5339 = vld [vmem:[#allocation5 + $0xb0] sm:$0xff]
    %v5340 = vld [vmem:[#allocation5 + $0xb8] sm:$0xff]
    %v5341 = vld [vmem:[#allocation5 + $0xc0] sm:$0xff]
    %v5342 = vld [vmem:[#allocation5 + $0xc8] sm:$0xff]
    %v5343 = vld [vmem:[#allocation5 + $0xd0] sm:$0xff]
    %v5344 = vld [vmem:[#allocation5 + $0xd8] sm:$0xff]
    %v5345 = vld [vmem:[#allocation5 + $0xe0] sm:$0xff]
    %v5346 = vld [vmem:[#allocation5 + $0xe8] sm:$0xff]
    %v5347 = vld [vmem:[#allocation5 + $0xf0] sm:$0xff]
    %v5348 = vld [vmem:[#allocation5 + $0xf8] sm:$0xff]
    %v5349 = vld [vmem:[#allocation5 + $0x100] sm:$0xff]
    %v5350 = vld [vmem:[#allocation5 + $0x108] sm:$0xff]
    %v5351 = vld [vmem:[#allocation5 + $0x110] sm:$0xff]
    %v5352 = vld [vmem:[#allocation5 + $0x118] sm:$0xff]
    %v5353 = vld [vmem:[#allocation5 + $0x120] sm:$0xff]
    %v5354 = vld [vmem:[#allocation5 + $0x128] sm:$0xff]
    %v5355 = vld [vmem:[#allocation5 + $0x130] sm:$0xff]
    %v5356 = vld [vmem:[#allocation5 + $0x138] sm:$0xff]
    %v5357 = vld [vmem:[#allocation5 + $0x140] sm:$0xff]
    %v5358 = vld [vmem:[#allocation5 + $0x148] sm:$0xff]
    %v5359 = vld [vmem:[#allocation5 + $0x150] sm:$0xff]
    %v5360 = vld [vmem:[#allocation5 + $0x158] sm:$0xff]
    %v5361 = vld [vmem:[#allocation5 + $0x160] sm:$0xff]
    %v5362 = vld [vmem:[#allocation5 + $0x168] sm:$0xff]
    %v5363 = vld [vmem:[#allocation5 + $0x170] sm:$0xff]
    %v5364 = vld [vmem:[#allocation5 + $0x178] sm:$0xff]
    %v5365 = vld [vmem:[#allocation5 + $0x180] sm:$0xff]
    %v5366 = vld [vmem:[#allocation5 + $0x188] sm:$0xff]
    %v5367 = vld [vmem:[#allocation5 + $0x190] sm:$0xff]
    %v5368 = vld [vmem:[#allocation5 + $0x198] sm:$0xff]
    %v5369 = vld [vmem:[#allocation5 + $0x1a0] sm:$0xff]
    %v5370 = vld [vmem:[#allocation5 + $0x1a8] sm:$0xff]
    %v5371 = vld [vmem:[#allocation5 + $0x1b0] sm:$0xff]
    %v5372 = vld [vmem:[#allocation5 + $0x1b8] sm:$0xff]
    %v5373 = vld [vmem:[#allocation5 + $0x1c0] sm:$0xff]
    %v5374 = vld [vmem:[#allocation5 + $0x1c8] sm:$0xff]
    %v5375 = vld [vmem:[#allocation5 + $0x1d0] sm:$0xff]
    %v5376 = vld [vmem:[#allocation5 + $0x1d8] sm:$0xff]
    %v5377 = vld [vmem:[#allocation5 + $0x1e0] sm:$0xff]
    %v5378 = vld [vmem:[#allocation5 + $0x1e8] sm:$0xff]
    %v5379 = vld [vmem:[#allocation5 + $0x1f0] sm:$0xff]
    %v5380 = vld [vmem:[#allocation5 + $0x1f8] sm:$0xff]
    %v5381 = vld [vmem:[%s5] sm:$0xf]
    %v5383 = vperm.slane %v5381, 0
    %v5384 = vperm.slane %v5381, 1
    %v5385 = vperm.slane %v5381, 2
    %v5386 = vperm.slane %v5381, 3
    %v5455 = vunpack.c.l.b16 %v5317
    %v5456 = vunpack.c.h.b16 %v5317
    %v5457 = vunpack.c.l.b16 %v5318
    %v5458 = vunpack.c.h.b16 %v5318
    %v5459 = vunpack.c.l.b16 %v5319
    %v5460 = vunpack.c.h.b16 %v5319
    %v5461 = vunpack.c.l.b16 %v5320
    %v5462 = vunpack.c.h.b16 %v5320
    %v5463 = vunpack.c.l.b16 %v5321
    %v5464 = vunpack.c.h.b16 %v5321
    %v5465 = vunpack.c.l.b16 %v5322
    %v5466 = vunpack.c.h.b16 %v5322
    %v5467 = vunpack.c.l.b16 %v5323
    %v5468 = vunpack.c.h.b16 %v5323
    %v5469 = vunpack.c.l.b16 %v5324
    %v5470 = vunpack.c.h.b16 %v5324
    %v5471 = vunpack.c.l.b16 %v5325
    %v5472 = vunpack.c.h.b16 %v5325
    %v5473 = vunpack.c.l.b16 %v5326
    %v5474 = vunpack.c.h.b16 %v5326
    %v5475 = vunpack.c.l.b16 %v5327
    %v5476 = vunpack.c.h.b16 %v5327
    %v5477 = vunpack.c.l.b16 %v5328
    %v5478 = vunpack.c.h.b16 %v5328
    %v5479 = vunpack.c.l.b16 %v5329
    %v5480 = vunpack.c.h.b16 %v5329
    %v5481 = vunpack.c.l.b16 %v5330
    %v5482 = vunpack.c.h.b16 %v5330
    %v5483 = vunpack.c.l.b16 %v5331
    %v5484 = vunpack.c.h.b16 %v5331
    %v5485 = vunpack.c.l.b16 %v5332
    %v5486 = vunpack.c.h.b16 %v5332
    %v5487 = vunpack.c.l.b16 %v5333
    %v5488 = vunpack.c.h.b16 %v5333
    %v5489 = vunpack.c.l.b16 %v5334
    %v5490 = vunpack.c.h.b16 %v5334
    %v5491 = vunpack.c.l.b16 %v5335
    %v5492 = vunpack.c.h.b16 %v5335
    %v5493 = vunpack.c.l.b16 %v5336
    %v5494 = vunpack.c.h.b16 %v5336
    %v5495 = vunpack.c.l.b16 %v5337
    %v5496 = vunpack.c.h.b16 %v5337
    %v5497 = vunpack.c.l.b16 %v5338
    %v5498 = vunpack.c.h.b16 %v5338
    %v5499 = vunpack.c.l.b16 %v5339
    %v5500 = vunpack.c.h.b16 %v5339
    %v5501 = vunpack.c.l.b16 %v5340
    %v5502 = vunpack.c.h.b16 %v5340
    %v5503 = vunpack.c.l.b16 %v5341
    %v5504 = vunpack.c.h.b16 %v5341
    %v5505 = vunpack.c.l.b16 %v5342
    %v5506 = vunpack.c.h.b16 %v5342
    %v5507 = vunpack.c.l.b16 %v5343
    %v5508 = vunpack.c.h.b16 %v5343
    %v5509 = vunpack.c.l.b16 %v5344
    %v5510 = vunpack.c.h.b16 %v5344
    %v5511 = vunpack.c.l.b16 %v5345
    %v5512 = vunpack.c.h.b16 %v5345
    %v5513 = vunpack.c.l.b16 %v5346
    %v5514 = vunpack.c.h.b16 %v5346
    %v5515 = vunpack.c.l.b16 %v5347
    %v5516 = vunpack.c.h.b16 %v5347
    %v5517 = vunpack.c.l.b16 %v5348
    %v5518 = vunpack.c.h.b16 %v5348
    %v5519 = vunpack.c.l.b16 %v5349
    %v5520 = vunpack.c.h.b16 %v5349
    %v5521 = vunpack.c.l.b16 %v5350
    %v5522 = vunpack.c.h.b16 %v5350
    %v5523 = vunpack.c.l.b16 %v5351
    %v5524 = vunpack.c.h.b16 %v5351
    %v5525 = vunpack.c.l.b16 %v5352
    %v5526 = vunpack.c.h.b16 %v5352
    %v5527 = vunpack.c.l.b16 %v5353
    %v5528 = vunpack.c.h.b16 %v5353
    %v5529 = vunpack.c.l.b16 %v5354
    %v5530 = vunpack.c.h.b16 %v5354
    %v5531 = vunpack.c.l.b16 %v5355
    %v5532 = vunpack.c.h.b16 %v5355
    %v5533 = vunpack.c.l.b16 %v5356
    %v5534 = vunpack.c.h.b16 %v5356
    %v5535 = vunpack.c.l.b16 %v5357
    %v5536 = vunpack.c.h.b16 %v5357
    %v5537 = vunpack.c.l.b16 %v5358
    %v5538 = vunpack.c.h.b16 %v5358
    %v5539 = vunpack.c.l.b16 %v5359
    %v5540 = vunpack.c.h.b16 %v5359
    %v5541 = vunpack.c.l.b16 %v5360
    %v5542 = vunpack.c.h.b16 %v5360
    %v5543 = vunpack.c.l.b16 %v5361
    %v5544 = vunpack.c.h.b16 %v5361
    %v5545 = vunpack.c.l.b16 %v5362
    %v5546 = vunpack.c.h.b16 %v5362
    %v5547 = vunpack.c.l.b16 %v5363
    %v5548 = vunpack.c.h.b16 %v5363
    %v5549 = vunpack.c.l.b16 %v5364
    %v5550 = vunpack.c.h.b16 %v5364
    %v5551 = vunpack.c.l.b16 %v5365
    %v5552 = vunpack.c.h.b16 %v5365
    %v5553 = vunpack.c.l.b16 %v5366
    %v5554 = vunpack.c.h.b16 %v5366
    %v5555 = vunpack.c.l.b16 %v5367
    %v5556 = vunpack.c.h.b16 %v5367
    %v5557 = vunpack.c.l.b16 %v5368
    %v5558 = vunpack.c.h.b16 %v5368
    %v5559 = vunpack.c.l.b16 %v5369
    %v5560 = vunpack.c.h.b16 %v5369
    %v5561 = vunpack.c.l.b16 %v5370
    %v5562 = vunpack.c.h.b16 %v5370
    %v5563 = vunpack.c.l.b16 %v5371
    %v5564 = vunpack.c.h.b16 %v5371
    %v5565 = vunpack.c.l.b16 %v5372
    %v5566 = vunpack.c.h.b16 %v5372
    %v5567 = vunpack.c.l.b16 %v5373
    %v5568 = vunpack.c.h.b16 %v5373
    %v5569 = vunpack.c.l.b16 %v5374
    %v5570 = vunpack.c.h.b16 %v5374
    %v5571 = vunpack.c.l.b16 %v5375
    %v5572 = vunpack.c.h.b16 %v5375
    %v5573 = vunpack.c.l.b16 %v5376
    %v5574 = vunpack.c.h.b16 %v5376
    %v5575 = vunpack.c.l.b16 %v5377
    %v5576 = vunpack.c.h.b16 %v5377
    %v5577 = vunpack.c.l.b16 %v5378
    %v5578 = vunpack.c.h.b16 %v5378
    %v5579 = vunpack.c.l.b16 %v5379
    %v5580 = vunpack.c.h.b16 %v5379
    %v5581 = vunpack.c.l.b16 %v5380
    %v5582 = vunpack.c.h.b16 %v5380
    %v5583 = vpack.c.b16 %v5459, %v5455
    %v5584 = vpack.c.b16 %v5460, %v5456
    %v5585 = vpack.c.b16 %v5461, %v5457
    %v5586 = vpack.c.b16 %v5462, %v5458
    %v5587 = vpack.c.b16 %v5467, %v5463
    %v5588 = vpack.c.b16 %v5468, %v5464
    %v5589 = vpack.c.b16 %v5469, %v5465
    %v5590 = vpack.c.b16 %v5470, %v5466
    %v5591 = vpack.c.b16 %v5475, %v5471
    %v5592 = vpack.c.b16 %v5476, %v5472
    %v5593 = vpack.c.b16 %v5477, %v5473
    %v5594 = vpack.c.b16 %v5478, %v5474
    %v5595 = vpack.c.b16 %v5483, %v5479
    %v5596 = vpack.c.b16 %v5484, %v5480
    %v5597 = vpack.c.b16 %v5485, %v5481
    %v5598 = vpack.c.b16 %v5486, %v5482
    %v5599 = vpack.c.b16 %v5491, %v5487
    %v5600 = vpack.c.b16 %v5492, %v5488
    %v5601 = vpack.c.b16 %v5493, %v5489
    %v5602 = vpack.c.b16 %v5494, %v5490
    %v5603 = vpack.c.b16 %v5499, %v5495
    %v5604 = vpack.c.b16 %v5500, %v5496
    %v5605 = vpack.c.b16 %v5501, %v5497
    %v5606 = vpack.c.b16 %v5502, %v5498
    %v5607 = vpack.c.b16 %v5507, %v5503
    %v5608 = vpack.c.b16 %v5508, %v5504
    %v5609 = vpack.c.b16 %v5509, %v5505
    %v5610 = vpack.c.b16 %v5510, %v5506
    %v5611 = vpack.c.b16 %v5515, %v5511
    %v5612 = vpack.c.b16 %v5516, %v5512
    %v5613 = vpack.c.b16 %v5517, %v5513
    %v5614 = vpack.c.b16 %v5518, %v5514
    %v5615 = vpack.c.b16 %v5523, %v5519
    %v5616 = vpack.c.b16 %v5524, %v5520
    %v5617 = vpack.c.b16 %v5525, %v5521
    %v5618 = vpack.c.b16 %v5526, %v5522
    %v5619 = vpack.c.b16 %v5531, %v5527
    %v5620 = vpack.c.b16 %v5532, %v5528
    %v5621 = vpack.c.b16 %v5533, %v5529
    %v5622 = vpack.c.b16 %v5534, %v5530
    %v5623 = vpack.c.b16 %v5539, %v5535
    %v5624 = vpack.c.b16 %v5540, %v5536
    %v5625 = vpack.c.b16 %v5541, %v5537
    %v5626 = vpack.c.b16 %v5542, %v5538
    %v5627 = vpack.c.b16 %v5547, %v5543
    %v5628 = vpack.c.b16 %v5548, %v5544
    %v5629 = vpack.c.b16 %v5549, %v5545
    %v5630 = vpack.c.b16 %v5550, %v5546
    %v5631 = vpack.c.b16 %v5555, %v5551
    %v5632 = vpack.c.b16 %v5556, %v5552
    %v5633 = vpack.c.b16 %v5557, %v5553
    %v5634 = vpack.c.b16 %v5558, %v5554
    %v5635 = vpack.c.b16 %v5563, %v5559
    %v5636 = vpack.c.b16 %v5564, %v5560
    %v5637 = vpack.c.b16 %v5565, %v5561
    %v5638 = vpack.c.b16 %v5566, %v5562
    %v5639 = vpack.c.b16 %v5571, %v5567
    %v5640 = vpack.c.b16 %v5572, %v5568
    %v5641 = vpack.c.b16 %v5573, %v5569
    %v5642 = vpack.c.b16 %v5574, %v5570
    %v5643 = vpack.c.b16 %v5579, %v5575
    %v5644 = vpack.c.b16 %v5580, %v5576
    %v5645 = vpack.c.b16 %v5581, %v5577
    %v5646 = vpack.c.b16 %v5582, %v5578
    %5711 = vmatpush.bf16.msra.mxu0 %v5611
    %5712 = vmatpush.bf16.msra.mxu0 %v5607
    %5713 = vmatpush.bf16.msra.mxu0 %v5603
    %5714 = vmatpush.bf16.msra.mxu0 %v5599
    %5715 = vmatpush.bf16.msra.mxu0 %v5595
    %5716 = vmatpush.bf16.msra.mxu0 %v5591
    %5717 = vmatpush.bf16.msra.mxu0 %v5587
    %5718 = vmatpush.bf16.msra.mxu0 %v5583
    %5719 = vmatmul.bf16.gmra.mxu0 %v5063
    %v5720 = vpop.f32.mrf.mxu0
    %v5721 = vadd.f32 %v5383, %v5720
    %v5722 = vpop.f32.mrf.mxu0
    %5723 = vdwg.mxu0
    %5724 = vmatpush.bf16.msra.mxu0 %v5643
    %5725 = vmatpush.bf16.msra.mxu0 %v5639
    %5726 = vmatpush.bf16.msra.mxu0 %v5635
    %5727 = vmatpush.bf16.msra.mxu0 %v5631
    %5728 = vmatpush.bf16.msra.mxu0 %v5627
    %5729 = vmatpush.bf16.msra.mxu0 %v5623
    %5730 = vmatpush.bf16.msra.mxu0 %v5619
    %5731 = vmatpush.bf16.msra.mxu0 %v5615
    %5732 = vmatmul.bf16.gmra.mxu0 %v5064
    %v5733 = vpop.f32.mrf.mxu0
    %v5734 = vadd.f32 %v5721, %v5733
    %v5735 = vpop.f32.mrf.mxu0
    %5736 = vdwg.mxu0
    %5737 = vmatpush.bf16.msra.mxu0 %v5612
    %5738 = vmatpush.bf16.msra.mxu0 %v5608
    %5739 = vmatpush.bf16.msra.mxu0 %v5604
    %5740 = vmatpush.bf16.msra.mxu0 %v5600
    %5741 = vmatpush.bf16.msra.mxu0 %v5596
    %5742 = vmatpush.bf16.msra.mxu0 %v5592
    %5743 = vmatpush.bf16.msra.mxu0 %v5588
    %5744 = vmatpush.bf16.msra.mxu0 %v5584
    %5745 = vmatmul.bf16.gmra.mxu0 %v5063
    %v5746 = vpop.f32.mrf.mxu0
    %v5747 = vadd.f32 %v5384, %v5746
    %v5748 = vpop.f32.mrf.mxu0
    %5749 = vdwg.mxu0
    %5750 = vmatpush.bf16.msra.mxu0 %v5644
    %5751 = vmatpush.bf16.msra.mxu0 %v5640
    %5752 = vmatpush.bf16.msra.mxu0 %v5636
    %5753 = vmatpush.bf16.msra.mxu0 %v5632
    %5754 = vmatpush.bf16.msra.mxu0 %v5628
    %5755 = vmatpush.bf16.msra.mxu0 %v5624
    %5756 = vmatpush.bf16.msra.mxu0 %v5620
    %5757 = vmatpush.bf16.msra.mxu0 %v5616
    %5758 = vmatmul.bf16.gmra.mxu0 %v5064
    %v5759 = vpop.f32.mrf.mxu0
    %v5760 = vadd.f32 %v5747, %v5759
    %v5761 = vpop.f32.mrf.mxu0
    %5762 = vdwg.mxu0
    %5763 = vmatpush.bf16.msra.mxu0 %v5613
    %5764 = vmatpush.bf16.msra.mxu0 %v5609
    %5765 = vmatpush.bf16.msra.mxu0 %v5605
    %5766 = vmatpush.bf16.msra.mxu0 %v5601
    %5767 = vmatpush.bf16.msra.mxu0 %v5597
    %5768 = vmatpush.bf16.msra.mxu0 %v5593
    %5769 = vmatpush.bf16.msra.mxu0 %v5589
    %5770 = vmatpush.bf16.msra.mxu0 %v5585
    %5771 = vmatmul.bf16.gmra.mxu0 %v5063
    %v5772 = vpop.f32.mrf.mxu0
    %v5773 = vadd.f32 %v5385, %v5772
    %v5774 = vpop.f32.mrf.mxu0
    %5775 = vdwg.mxu0
    %5776 = vmatpush.bf16.msra.mxu0 %v5645
    %5777 = vmatpush.bf16.msra.mxu0 %v5641
    %5778 = vmatpush.bf16.msra.mxu0 %v5637
    %5779 = vmatpush.bf16.msra.mxu0 %v5633
    %5780 = vmatpush.bf16.msra.mxu0 %v5629
    %5781 = vmatpush.bf16.msra.mxu0 %v5625
    %5782 = vmatpush.bf16.msra.mxu0 %v5621
    %5783 = vmatpush.bf16.msra.mxu0 %v5617
    %5784 = vmatmul.bf16.gmra.mxu0 %v5064
    %v5785 = vpop.f32.mrf.mxu0
    %v5786 = vadd.f32 %v5773, %v5785
    %v5787 = vpop.f32.mrf.mxu0
    %5788 = vdwg.mxu0
    %5789 = vmatpush.bf16.msra.mxu0 %v5614
    %5790 = vmatpush.bf16.msra.mxu0 %v5610
    %5791 = vmatpush.bf16.msra.mxu0 %v5606
    %5792 = vmatpush.bf16.msra.mxu0 %v5602
    %5793 = vmatpush.bf16.msra.mxu0 %v5598
    %5794 = vmatpush.bf16.msra.mxu0 %v5594
    %5795 = vmatpush.bf16.msra.mxu0 %v5590
    %5796 = vmatpush.bf16.msra.mxu0 %v5586
    %5797 = vmatmul.bf16.gmra.mxu0 %v5063
    %v5798 = vpop.f32.mrf.mxu0
    %v5799 = vadd.f32 %v5386, %v5798
    %v5800 = vpop.f32.mrf.mxu0
    %5801 = vdwg.mxu0
    %5802 = vmatpush.bf16.msra.mxu0 %v5646
    %5803 = vmatpush.bf16.msra.mxu0 %v5642
    %5804 = vmatpush.bf16.msra.mxu0 %v5638
    %5805 = vmatpush.bf16.msra.mxu0 %v5634
    %5806 = vmatpush.bf16.msra.mxu0 %v5630
    %5807 = vmatpush.bf16.msra.mxu0 %v5626
    %5808 = vmatpush.bf16.msra.mxu0 %v5622
    %5809 = vmatpush.bf16.msra.mxu0 %v5618
    %5810 = vmatmul.bf16.gmra.mxu0 %v5064
    %v5811 = vpop.f32.mrf.mxu0
    %v5812 = vadd.f32 %v5799, %v5811
    %v5813 = vpop.f32.mrf.mxu0
    %5814 = vdwg.mxu0
    %v5815 = vmul.f32 %v5313, 0.5
    %v5816 = vmul.f32 %v5314, 0.5
    %v5817 = vmul.f32 %v5315, 0.5
    %v5818 = vtanh.pop %v5815
    %v5819 = vtanh.pop %v5816
    %v5820 = vtanh.pop %v5817
    %v5821 = vmul.f32 %v5818, 0.5
    %v5822 = vmul.f32 %v5819, 0.5
    %v5823 = vmul.f32 %v5820, 0.5
    %v5824 = vadd.f32 %v5821, 0.5
    %v5825 = vadd.f32 %v5822, 0.5
    %v5826 = vadd.f32 %v5823, 0.5
    %v5827 = vtanh.pop %v5316
    %v5828 = vmul.f32 %v5825, %v5040
    %v5829 = vmul.f32 %v5824, %v5827
    %v5830 = vadd.f32 %v5828, %v5829
    %v5831 = vtanh.pop %v5830
    %v5832 = vmul.f32 %v5826, %v5831
    %v5833 = vmul.f32 %v5734, 0.5
    %v5834 = vmul.f32 %v5760, 0.5
    %v5835 = vmul.f32 %v5786, 0.5
    %v5836 = vtanh.pop %v5833
    %v5837 = vtanh.pop %v5834
    %v5838 = vtanh.pop %v5835
    %v5839 = vmul.f32 %v5836, 0.5
    %v5840 = vmul.f32 %v5837, 0.5
    %v5841 = vmul.f32 %v5838, 0.5
    %v5842 = vadd.f32 %v5839, 0.5
    %v5843 = vadd.f32 %v5840, 0.5
    %v5844 = vadd.f32 %v5841, 0.5
    %v5845 = vtanh.pop %v5812
    %v5846 = vmul.f32 %v5843, %v5058
    %v5847 = vmul.f32 %v5842, %v5845
    %v5848 = vadd.f32 %v5846, %v5847
    %v5849 = vtanh.pop %v5848
    %v5850 = vmul.f32 %v5844, %v5849
    %s5851 = scalar_lea.vmem %s6, 48
    %5852 = vst [vmem:[%s5851] sm:$0xff] %v5850
    %v5853 = vpack.c.bf16 %v5832, %v5832
    %v5854 = vpack.c.bf16 %v5850, %v5850
    %v5855 = vld [vmem:[#allocation5] sm:$0xff]
    %v5856 = vld [vmem:[#allocation5 + $0x8] sm:$0xff]
    %v5857 = vld [vmem:[#allocation5 + $0x10] sm:$0xff]
    %v5858 = vld [vmem:[#allocation5 + $0x18] sm:$0xff]
    %v5859 = vld [vmem:[#allocation5 + $0x20] sm:$0xff]
    %v5860 = vld [vmem:[#allocation5 + $0x28] sm:$0xff]
    %v5861 = vld [vmem:[#allocation5 + $0x30] sm:$0xff]
    %v5862 = vld [vmem:[#allocation5 + $0x38] sm:$0xff]
    %v5863 = vld [vmem:[#allocation5 + $0x40] sm:$0xff]
    %v5864 = vld [vmem:[#allocation5 + $0x48] sm:$0xff]
    %v5865 = vld [vmem:[#allocation5 + $0x50] sm:$0xff]
    %v5866 = vld [vmem:[#allocation5 + $0x58] sm:$0xff]
    %v5867 = vld [vmem:[#allocation5 + $0x60] sm:$0xff]
    %v5868 = vld [vmem:[#allocation5 + $0x68] sm:$0xff]
    %v5869 = vld [vmem:[#allocation5 + $0x70] sm:$0xff]
    %v5870 = vld [vmem:[#allocation5 + $0x78] sm:$0xff]
    %v5871 = vld [vmem:[#allocation5 + $0x80] sm:$0xff]
    %v5872 = vld [vmem:[#allocation5 + $0x88] sm:$0xff]
    %v5873 = vld [vmem:[#allocation5 + $0x90] sm:$0xff]
    %v5874 = vld [vmem:[#allocation5 + $0x98] sm:$0xff]
    %v5875 = vld [vmem:[#allocation5 + $0xa0] sm:$0xff]
    %v5876 = vld [vmem:[#allocation5 + $0xa8] sm:$0xff]
    %v5877 = vld [vmem:[#allocation5 + $0xb0] sm:$0xff]
    %v5878 = vld [vmem:[#allocation5 + $0xb8] sm:$0xff]
    %v5879 = vld [vmem:[#allocation5 + $0xc0] sm:$0xff]
    %v5880 = vld [vmem:[#allocation5 + $0xc8] sm:$0xff]
    %v5881 = vld [vmem:[#allocation5 + $0xd0] sm:$0xff]
    %v5882 = vld [vmem:[#allocation5 + $0xd8] sm:$0xff]
    %v5883 = vld [vmem:[#allocation5 + $0xe0] sm:$0xff]
    %v5884 = vld [vmem:[#allocation5 + $0xe8] sm:$0xff]
    %v5885 = vld [vmem:[#allocation5 + $0xf0] sm:$0xff]
    %v5886 = vld [vmem:[#allocation5 + $0xf8] sm:$0xff]
    %v5887 = vld [vmem:[#allocation5 + $0x100] sm:$0xff]
    %v5888 = vld [vmem:[#allocation5 + $0x108] sm:$0xff]
    %v5889 = vld [vmem:[#allocation5 + $0x110] sm:$0xff]
    %v5890 = vld [vmem:[#allocation5 + $0x118] sm:$0xff]
    %v5891 = vld [vmem:[#allocation5 + $0x120] sm:$0xff]
    %v5892 = vld [vmem:[#allocation5 + $0x128] sm:$0xff]
    %v5893 = vld [vmem:[#allocation5 + $0x130] sm:$0xff]
    %v5894 = vld [vmem:[#allocation5 + $0x138] sm:$0xff]
    %v5895 = vld [vmem:[#allocation5 + $0x140] sm:$0xff]
    %v5896 = vld [vmem:[#allocation5 + $0x148] sm:$0xff]
    %v5897 = vld [vmem:[#allocation5 + $0x150] sm:$0xff]
    %v5898 = vld [vmem:[#allocation5 + $0x158] sm:$0xff]
    %v5899 = vld [vmem:[#allocation5 + $0x160] sm:$0xff]
    %v5900 = vld [vmem:[#allocation5 + $0x168] sm:$0xff]
    %v5901 = vld [vmem:[#allocation5 + $0x170] sm:$0xff]
    %v5902 = vld [vmem:[#allocation5 + $0x178] sm:$0xff]
    %v5903 = vld [vmem:[#allocation5 + $0x180] sm:$0xff]
    %v5904 = vld [vmem:[#allocation5 + $0x188] sm:$0xff]
    %v5905 = vld [vmem:[#allocation5 + $0x190] sm:$0xff]
    %v5906 = vld [vmem:[#allocation5 + $0x198] sm:$0xff]
    %v5907 = vld [vmem:[#allocation5 + $0x1a0] sm:$0xff]
    %v5908 = vld [vmem:[#allocation5 + $0x1a8] sm:$0xff]
    %v5909 = vld [vmem:[#allocation5 + $0x1b0] sm:$0xff]
    %v5910 = vld [vmem:[#allocation5 + $0x1b8] sm:$0xff]
    %v5911 = vld [vmem:[#allocation5 + $0x1c0] sm:$0xff]
    %v5912 = vld [vmem:[#allocation5 + $0x1c8] sm:$0xff]
    %v5913 = vld [vmem:[#allocation5 + $0x1d0] sm:$0xff]
    %v5914 = vld [vmem:[#allocation5 + $0x1d8] sm:$0xff]
    %v5915 = vld [vmem:[#allocation5 + $0x1e0] sm:$0xff]
    %v5916 = vld [vmem:[#allocation5 + $0x1e8] sm:$0xff]
    %v5917 = vld [vmem:[#allocation5 + $0x1f0] sm:$0xff]
    %v5918 = vld [vmem:[#allocation5 + $0x1f8] sm:$0xff]
    %v5919 = vld [vmem:[%s5] sm:$0xf]
    %v5921 = vperm.slane %v5919, 0
    %v5922 = vperm.slane %v5919, 1
    %v5923 = vperm.slane %v5919, 2
    %v5924 = vperm.slane %v5919, 3
    %v5993 = vunpack.c.l.b16 %v5855
    %v5994 = vunpack.c.h.b16 %v5855
    %v5995 = vunpack.c.l.b16 %v5856
    %v5996 = vunpack.c.h.b16 %v5856
    %v5997 = vunpack.c.l.b16 %v5857
    %v5998 = vunpack.c.h.b16 %v5857
    %v5999 = vunpack.c.l.b16 %v5858
    %v6000 = vunpack.c.h.b16 %v5858
    %v6001 = vunpack.c.l.b16 %v5859
    %v6002 = vunpack.c.h.b16 %v5859
    %v6003 = vunpack.c.l.b16 %v5860
    %v6004 = vunpack.c.h.b16 %v5860
    %v6005 = vunpack.c.l.b16 %v5861
    %v6006 = vunpack.c.h.b16 %v5861
    %v6007 = vunpack.c.l.b16 %v5862
    %v6008 = vunpack.c.h.b16 %v5862
    %v6009 = vunpack.c.l.b16 %v5863
    %v6010 = vunpack.c.h.b16 %v5863
    %v6011 = vunpack.c.l.b16 %v5864
    %v6012 = vunpack.c.h.b16 %v5864
    %v6013 = vunpack.c.l.b16 %v5865
    %v6014 = vunpack.c.h.b16 %v5865
    %v6015 = vunpack.c.l.b16 %v5866
    %v6016 = vunpack.c.h.b16 %v5866
    %v6017 = vunpack.c.l.b16 %v5867
    %v6018 = vunpack.c.h.b16 %v5867
    %v6019 = vunpack.c.l.b16 %v5868
    %v6020 = vunpack.c.h.b16 %v5868
    %v6021 = vunpack.c.l.b16 %v5869
    %v6022 = vunpack.c.h.b16 %v5869
    %v6023 = vunpack.c.l.b16 %v5870
    %v6024 = vunpack.c.h.b16 %v5870
    %v6025 = vunpack.c.l.b16 %v5871
    %v6026 = vunpack.c.h.b16 %v5871
    %v6027 = vunpack.c.l.b16 %v5872
    %v6028 = vunpack.c.h.b16 %v5872
    %v6029 = vunpack.c.l.b16 %v5873
    %v6030 = vunpack.c.h.b16 %v5873
    %v6031 = vunpack.c.l.b16 %v5874
    %v6032 = vunpack.c.h.b16 %v5874
    %v6033 = vunpack.c.l.b16 %v5875
    %v6034 = vunpack.c.h.b16 %v5875
    %v6035 = vunpack.c.l.b16 %v5876
    %v6036 = vunpack.c.h.b16 %v5876
    %v6037 = vunpack.c.l.b16 %v5877
    %v6038 = vunpack.c.h.b16 %v5877
    %v6039 = vunpack.c.l.b16 %v5878
    %v6040 = vunpack.c.h.b16 %v5878
    %v6041 = vunpack.c.l.b16 %v5879
    %v6042 = vunpack.c.h.b16 %v5879
    %v6043 = vunpack.c.l.b16 %v5880
    %v6044 = vunpack.c.h.b16 %v5880
    %v6045 = vunpack.c.l.b16 %v5881
    %v6046 = vunpack.c.h.b16 %v5881
    %v6047 = vunpack.c.l.b16 %v5882
    %v6048 = vunpack.c.h.b16 %v5882
    %v6049 = vunpack.c.l.b16 %v5883
    %v6050 = vunpack.c.h.b16 %v5883
    %v6051 = vunpack.c.l.b16 %v5884
    %v6052 = vunpack.c.h.b16 %v5884
    %v6053 = vunpack.c.l.b16 %v5885
    %v6054 = vunpack.c.h.b16 %v5885
    %v6055 = vunpack.c.l.b16 %v5886
    %v6056 = vunpack.c.h.b16 %v5886
    %v6057 = vunpack.c.l.b16 %v5887
    %v6058 = vunpack.c.h.b16 %v5887
    %v6059 = vunpack.c.l.b16 %v5888
    %v6060 = vunpack.c.h.b16 %v5888
    %v6061 = vunpack.c.l.b16 %v5889
    %v6062 = vunpack.c.h.b16 %v5889
    %v6063 = vunpack.c.l.b16 %v5890
    %v6064 = vunpack.c.h.b16 %v5890
    %v6065 = vunpack.c.l.b16 %v5891
    %v6066 = vunpack.c.h.b16 %v5891
    %v6067 = vunpack.c.l.b16 %v5892
    %v6068 = vunpack.c.h.b16 %v5892
    %v6069 = vunpack.c.l.b16 %v5893
    %v6070 = vunpack.c.h.b16 %v5893
    %v6071 = vunpack.c.l.b16 %v5894
    %v6072 = vunpack.c.h.b16 %v5894
    %v6073 = vunpack.c.l.b16 %v5895
    %v6074 = vunpack.c.h.b16 %v5895
    %v6075 = vunpack.c.l.b16 %v5896
    %v6076 = vunpack.c.h.b16 %v5896
    %v6077 = vunpack.c.l.b16 %v5897
    %v6078 = vunpack.c.h.b16 %v5897
    %v6079 = vunpack.c.l.b16 %v5898
    %v6080 = vunpack.c.h.b16 %v5898
    %v6081 = vunpack.c.l.b16 %v5899
    %v6082 = vunpack.c.h.b16 %v5899
    %v6083 = vunpack.c.l.b16 %v5900
    %v6084 = vunpack.c.h.b16 %v5900
    %v6085 = vunpack.c.l.b16 %v5901
    %v6086 = vunpack.c.h.b16 %v5901
    %v6087 = vunpack.c.l.b16 %v5902
    %v6088 = vunpack.c.h.b16 %v5902
    %v6089 = vunpack.c.l.b16 %v5903
    %v6090 = vunpack.c.h.b16 %v5903
    %v6091 = vunpack.c.l.b16 %v5904
    %v6092 = vunpack.c.h.b16 %v5904
    %v6093 = vunpack.c.l.b16 %v5905
    %v6094 = vunpack.c.h.b16 %v5905
    %v6095 = vunpack.c.l.b16 %v5906
    %v6096 = vunpack.c.h.b16 %v5906
    %v6097 = vunpack.c.l.b16 %v5907
    %v6098 = vunpack.c.h.b16 %v5907
    %v6099 = vunpack.c.l.b16 %v5908
    %v6100 = vunpack.c.h.b16 %v5908
    %v6101 = vunpack.c.l.b16 %v5909
    %v6102 = vunpack.c.h.b16 %v5909
    %v6103 = vunpack.c.l.b16 %v5910
    %v6104 = vunpack.c.h.b16 %v5910
    %v6105 = vunpack.c.l.b16 %v5911
    %v6106 = vunpack.c.h.b16 %v5911
    %v6107 = vunpack.c.l.b16 %v5912
    %v6108 = vunpack.c.h.b16 %v5912
    %v6109 = vunpack.c.l.b16 %v5913
    %v6110 = vunpack.c.h.b16 %v5913
    %v6111 = vunpack.c.l.b16 %v5914
    %v6112 = vunpack.c.h.b16 %v5914
    %v6113 = vunpack.c.l.b16 %v5915
    %v6114 = vunpack.c.h.b16 %v5915
    %v6115 = vunpack.c.l.b16 %v5916
    %v6116 = vunpack.c.h.b16 %v5916
    %v6117 = vunpack.c.l.b16 %v5917
    %v6118 = vunpack.c.h.b16 %v5917
    %v6119 = vunpack.c.l.b16 %v5918
    %v6120 = vunpack.c.h.b16 %v5918
    %v6121 = vpack.c.b16 %v5997, %v5993
    %v6122 = vpack.c.b16 %v5998, %v5994
    %v6123 = vpack.c.b16 %v5999, %v5995
    %v6124 = vpack.c.b16 %v6000, %v5996
    %v6125 = vpack.c.b16 %v6005, %v6001
    %v6126 = vpack.c.b16 %v6006, %v6002
    %v6127 = vpack.c.b16 %v6007, %v6003
    %v6128 = vpack.c.b16 %v6008, %v6004
    %v6129 = vpack.c.b16 %v6013, %v6009
    %v6130 = vpack.c.b16 %v6014, %v6010
    %v6131 = vpack.c.b16 %v6015, %v6011
    %v6132 = vpack.c.b16 %v6016, %v6012
    %v6133 = vpack.c.b16 %v6021, %v6017
    %v6134 = vpack.c.b16 %v6022, %v6018
    %v6135 = vpack.c.b16 %v6023, %v6019
    %v6136 = vpack.c.b16 %v6024, %v6020
    %v6137 = vpack.c.b16 %v6029, %v6025
    %v6138 = vpack.c.b16 %v6030, %v6026
    %v6139 = vpack.c.b16 %v6031, %v6027
    %v6140 = vpack.c.b16 %v6032, %v6028
    %v6141 = vpack.c.b16 %v6037, %v6033
    %v6142 = vpack.c.b16 %v6038, %v6034
    %v6143 = vpack.c.b16 %v6039, %v6035
    %v6144 = vpack.c.b16 %v6040, %v6036
    %v6145 = vpack.c.b16 %v6045, %v6041
    %v6146 = vpack.c.b16 %v6046, %v6042
    %v6147 = vpack.c.b16 %v6047, %v6043
    %v6148 = vpack.c.b16 %v6048, %v6044
    %v6149 = vpack.c.b16 %v6053, %v6049
    %v6150 = vpack.c.b16 %v6054, %v6050
    %v6151 = vpack.c.b16 %v6055, %v6051
    %v6152 = vpack.c.b16 %v6056, %v6052
    %v6153 = vpack.c.b16 %v6061, %v6057
    %v6154 = vpack.c.b16 %v6062, %v6058
    %v6155 = vpack.c.b16 %v6063, %v6059
    %v6156 = vpack.c.b16 %v6064, %v6060
    %v6157 = vpack.c.b16 %v6069, %v6065
    %v6158 = vpack.c.b16 %v6070, %v6066
    %v6159 = vpack.c.b16 %v6071, %v6067
    %v6160 = vpack.c.b16 %v6072, %v6068
    %v6161 = vpack.c.b16 %v6077, %v6073
    %v6162 = vpack.c.b16 %v6078, %v6074
    %v6163 = vpack.c.b16 %v6079, %v6075
    %v6164 = vpack.c.b16 %v6080, %v6076
    %v6165 = vpack.c.b16 %v6085, %v6081
    %v6166 = vpack.c.b16 %v6086, %v6082
    %v6167 = vpack.c.b16 %v6087, %v6083
    %v6168 = vpack.c.b16 %v6088, %v6084
    %v6169 = vpack.c.b16 %v6093, %v6089
    %v6170 = vpack.c.b16 %v6094, %v6090
    %v6171 = vpack.c.b16 %v6095, %v6091
    %v6172 = vpack.c.b16 %v6096, %v6092
    %v6173 = vpack.c.b16 %v6101, %v6097
    %v6174 = vpack.c.b16 %v6102, %v6098
    %v6175 = vpack.c.b16 %v6103, %v6099
    %v6176 = vpack.c.b16 %v6104, %v6100
    %v6177 = vpack.c.b16 %v6109, %v6105
    %v6178 = vpack.c.b16 %v6110, %v6106
    %v6179 = vpack.c.b16 %v6111, %v6107
    %v6180 = vpack.c.b16 %v6112, %v6108
    %v6181 = vpack.c.b16 %v6117, %v6113
    %v6182 = vpack.c.b16 %v6118, %v6114
    %v6183 = vpack.c.b16 %v6119, %v6115
    %v6184 = vpack.c.b16 %v6120, %v6116
    %6249 = vmatpush.bf16.msra.mxu0 %v6149
    %6250 = vmatpush.bf16.msra.mxu0 %v6145
    %6251 = vmatpush.bf16.msra.mxu0 %v6141
    %6252 = vmatpush.bf16.msra.mxu0 %v6137
    %6253 = vmatpush.bf16.msra.mxu0 %v6133
    %6254 = vmatpush.bf16.msra.mxu0 %v6129
    %6255 = vmatpush.bf16.msra.mxu0 %v6125
    %6256 = vmatpush.bf16.msra.mxu0 %v6121
    %6257 = vmatmul.bf16.gmra.mxu0 %v5853
    %v6258 = vpop.f32.mrf.mxu0
    %v6259 = vadd.f32 %v5921, %v6258
    %v6260 = vpop.f32.mrf.mxu0
    %6261 = vdwg.mxu0
    %6262 = vmatpush.bf16.msra.mxu0 %v6181
    %6263 = vmatpush.bf16.msra.mxu0 %v6177
    %6264 = vmatpush.bf16.msra.mxu0 %v6173
    %6265 = vmatpush.bf16.msra.mxu0 %v6169
    %6266 = vmatpush.bf16.msra.mxu0 %v6165
    %6267 = vmatpush.bf16.msra.mxu0 %v6161
    %6268 = vmatpush.bf16.msra.mxu0 %v6157
    %6269 = vmatpush.bf16.msra.mxu0 %v6153
    %6270 = vmatmul.bf16.gmra.mxu0 %v5854
    %v6271 = vpop.f32.mrf.mxu0
    %v6272 = vadd.f32 %v6259, %v6271
    %v6273 = vpop.f32.mrf.mxu0
    %6274 = vdwg.mxu0
    %6275 = vmatpush.bf16.msra.mxu0 %v6150
    %6276 = vmatpush.bf16.msra.mxu0 %v6146
    %6277 = vmatpush.bf16.msra.mxu0 %v6142
    %6278 = vmatpush.bf16.msra.mxu0 %v6138
    %6279 = vmatpush.bf16.msra.mxu0 %v6134
    %6280 = vmatpush.bf16.msra.mxu0 %v6130
    %6281 = vmatpush.bf16.msra.mxu0 %v6126
    %6282 = vmatpush.bf16.msra.mxu0 %v6122
    %6283 = vmatmul.bf16.gmra.mxu0 %v5853
    %v6284 = vpop.f32.mrf.mxu0
    %v6285 = vadd.f32 %v5922, %v6284
    %v6286 = vpop.f32.mrf.mxu0
    %6287 = vdwg.mxu0
    %6288 = vmatpush.bf16.msra.mxu0 %v6182
    %6289 = vmatpush.bf16.msra.mxu0 %v6178
    %6290 = vmatpush.bf16.msra.mxu0 %v6174
    %6291 = vmatpush.bf16.msra.mxu0 %v6170
    %6292 = vmatpush.bf16.msra.mxu0 %v6166
    %6293 = vmatpush.bf16.msra.mxu0 %v6162
    %6294 = vmatpush.bf16.msra.mxu0 %v6158
    %6295 = vmatpush.bf16.msra.mxu0 %v6154
    %6296 = vmatmul.bf16.gmra.mxu0 %v5854
    %v6297 = vpop.f32.mrf.mxu0
    %v6298 = vadd.f32 %v6285, %v6297
    %v6299 = vpop.f32.mrf.mxu0
    %6300 = vdwg.mxu0
    %6301 = vmatpush.bf16.msra.mxu0 %v6151
    %6302 = vmatpush.bf16.msra.mxu0 %v6147
    %6303 = vmatpush.bf16.msra.mxu0 %v6143
    %6304 = vmatpush.bf16.msra.mxu0 %v6139
    %6305 = vmatpush.bf16.msra.mxu0 %v6135
    %6306 = vmatpush.bf16.msra.mxu0 %v6131
    %6307 = vmatpush.bf16.msra.mxu0 %v6127
    %6308 = vmatpush.bf16.msra.mxu0 %v6123
    %6309 = vmatmul.bf16.gmra.mxu0 %v5853
    %v6310 = vpop.f32.mrf.mxu0
    %v6311 = vadd.f32 %v5923, %v6310
    %v6312 = vpop.f32.mrf.mxu0
    %6313 = vdwg.mxu0
    %6314 = vmatpush.bf16.msra.mxu0 %v6183
    %6315 = vmatpush.bf16.msra.mxu0 %v6179
    %6316 = vmatpush.bf16.msra.mxu0 %v6175
    %6317 = vmatpush.bf16.msra.mxu0 %v6171
    %6318 = vmatpush.bf16.msra.mxu0 %v6167
    %6319 = vmatpush.bf16.msra.mxu0 %v6163
    %6320 = vmatpush.bf16.msra.mxu0 %v6159
    %6321 = vmatpush.bf16.msra.mxu0 %v6155
    %6322 = vmatmul.bf16.gmra.mxu0 %v5854
    %v6323 = vpop.f32.mrf.mxu0
    %v6324 = vadd.f32 %v6311, %v6323
    %v6325 = vpop.f32.mrf.mxu0
    %6326 = vdwg.mxu0
    %6327 = vmatpush.bf16.msra.mxu0 %v6152
    %6328 = vmatpush.bf16.msra.mxu0 %v6148
    %6329 = vmatpush.bf16.msra.mxu0 %v6144
    %6330 = vmatpush.bf16.msra.mxu0 %v6140
    %6331 = vmatpush.bf16.msra.mxu0 %v6136
    %6332 = vmatpush.bf16.msra.mxu0 %v6132
    %6333 = vmatpush.bf16.msra.mxu0 %v6128
    %6334 = vmatpush.bf16.msra.mxu0 %v6124
    %6335 = vmatmul.bf16.gmra.mxu0 %v5853
    %v6336 = vpop.f32.mrf.mxu0
    %v6337 = vadd.f32 %v5924, %v6336
    %v6338 = vpop.f32.mrf.mxu0
    %6339 = vdwg.mxu0
    %6340 = vmatpush.bf16.msra.mxu0 %v6184
    %6341 = vmatpush.bf16.msra.mxu0 %v6180
    %6342 = vmatpush.bf16.msra.mxu0 %v6176
    %6343 = vmatpush.bf16.msra.mxu0 %v6172
    %6344 = vmatpush.bf16.msra.mxu0 %v6168
    %6345 = vmatpush.bf16.msra.mxu0 %v6164
    %6346 = vmatpush.bf16.msra.mxu0 %v6160
    %6347 = vmatpush.bf16.msra.mxu0 %v6156
    %6348 = vmatmul.bf16.gmra.mxu0 %v5854
    %v6349 = vpop.f32.mrf.mxu0
    %v6350 = vadd.f32 %v6337, %v6349
    %v6351 = vpop.f32.mrf.mxu0
    %6352 = vdwg.mxu0
    %v6353 = vmul.f32 %v6272, 0.5
    %v6354 = vmul.f32 %v6298, 0.5
    %v6355 = vmul.f32 %v6324, 0.5
    %v6356 = vtanh.pop %v6353
    %v6357 = vtanh.pop %v6354
    %v6358 = vtanh.pop %v6355
    %v6359 = vmul.f32 %v6356, 0.5
    %v6360 = vmul.f32 %v6357, 0.5
    %v6361 = vmul.f32 %v6358, 0.5
    %v6362 = vadd.f32 %v6359, 0.5
    %v6363 = vadd.f32 %v6360, 0.5
    %v6364 = vadd.f32 %v6361, 0.5
    %v6365 = vtanh.pop %v6350
    %v6366 = vmul.f32 %v6363, %v5848
    %v6367 = vmul.f32 %v6362, %v6365
    %v6368 = vadd.f32 %v6366, %v6367
    %v6369 = vtanh.pop %v6368
    %v6370 = vmul.f32 %v6364, %v6369
    %s6371 = scalar_lea.vmem %s6, 56
    %6372 = vst [vmem:[%s6371] sm:$0xff] %v6370
    // Predicated region
    $region34: #{rnn_basic_block_forward.1} parent=1 // pred_check
      _
    $region35: #{rnn_basic_block_forward.1} parent=1 // pred_check_branch
      %6374 = sbr.rel (0) target = $region37
    $region36: #{rnn_basic_block_forward.1} parent=1 // pred_region
      _
    $region37: #{rnn_basic_block_forward.1} parent=1 // pred_fallthru
      _
    // Predicated region
    $region38: #{rnn_basic_block_forward.1} parent=1 // pred_check
      _
    $region39: #{rnn_basic_block_forward.1} parent=1 // pred_check_branch
      %6376 = sbr.rel (0) target = $region41
    $region40: #{rnn_basic_block_forward.1} parent=1 // pred_region
      _
    $region41: #{rnn_basic_block_forward.1} parent=1 // pred_fallthru
      _
    %6377 = vsyncpa [#allocation4], 1
    %6378 = vsyncpa [#allocation6], 1

</llo_original>
